<compile_context>
chip_gen: v7x
topology: tpu7x:2x2x1
jax: 0.10.0
libtpu: 0.0.40
codegen_flags: <defaults>
</compile_context>

<pallas_src>
import math

import jax
import jax.numpy as jnp
from jax.experimental import pallas as pl
from jax.experimental.pallas import tpu as pltpu

# ---- tiny synthetic BERT-for-sequence-classification hyperparameters ----
VOCAB = 128
B = 2            # batch
S = 8            # sequence length
H = 32           # hidden size
NH = 4           # attention heads
HD = H // NH     # head dim
FF = 64          # intermediate size
L = 2            # transformer layers
NUM_LABELS = 2   # single_label_classification, num_labels > 1
LN_EPS = 1e-12
PAD = 128        # lane-dense padding for classifier / loss outputs


# ---------- shared math helpers (used by both the kernel and the reference) ----------
def _layer_norm(x, g, b):
    mu = jnp.mean(x, axis=-1, keepdims=True)
    var = jnp.mean((x - mu) ** 2, axis=-1, keepdims=True)
    return (x - mu) * jax.lax.rsqrt(var + LN_EPS) * g + b


def _gelu(x):
    # TODO(synk): HF BERT uses the exact erf-based GELU; tanh approximation used for
    # Mosaic-safe lowering (and matched in the reference).
    c = math.sqrt(2.0 / math.pi)
    return 0.5 * x * (1.0 + jnp.tanh(c * (x + 0.044715 * x * x * x)))


def _mm(x, w):
    # bf16 MXU path, f32 accumulation; elementwise math everywhere else stays f32.
    return jnp.dot(x.astype(jnp.bfloat16), w.astype(jnp.bfloat16),
                   preferred_element_type=jnp.float32)


def _bmm(eq, a, b):
    return jnp.einsum(eq, a.astype(jnp.bfloat16), b.astype(jnp.bfloat16),
                      preferred_element_type=jnp.float32)


# -------------------------------- Pallas kernel --------------------------------
def learner_kernel(
    x_ref, bias_ref, lne_g_ref, lne_b_ref,
    wqkv_ref, bqkv_ref, woh_ref, bo_ref, ln1g_ref, ln1b_ref,
    wi_ref, bi_ref, wo2_ref, bo2_ref, ln2g_ref, ln2b_ref,
    wp_ref, bp_ref, wc_ref, bc_ref, onehot_ref,
    logits_ref, loss_ref,
):
    n = B * S
    scale = 1.0 / math.sqrt(HD)

    # embedding LayerNorm; canonical 2-D [B*S, H] activation slab from here on
    h2 = _layer_norm(x_ref[...], lne_g_ref[...], lne_b_ref[...])
    bias_g = bias_ref[...]                                   # [NH*B, 1, S], f32

    for l in range(L):                                       # statically unrolled layers
        # ----- multi-head self attention (fused QKV projection, head-batched) -----
        qkv = _mm(h2, wqkv_ref[l]) + bqkv_ref[l]             # [B*S, 3H], one MXU push
        q2 = qkv[:, 0 * H:1 * H] * scale                     # 1/sqrt(HD) folded into Q once
        k2 = qkv[:, 1 * H:2 * H]
        v2 = qkv[:, 2 * H:3 * H]

        def to_heads(t2):                                    # [B*S, H] -> [NH*B, S, HD]
            hs = jnp.stack(
                [t2[:, hh * HD:(hh + 1) * HD] for hh in range(NH)], axis=0)
            return hs.reshape(NH * B, S, HD)

        qs, ks, vs = to_heads(q2), to_heads(k2), to_heads(v2)
        s = _bmm("gqd,gkd->gqk", qs, ks) + bias_g            # [NH*B, S, S], f32 mask add
        m = jnp.max(s, axis=-1, keepdims=True)
        e = jnp.exp(s - m)
        # NOTE: approx=True would push the divide onto the EUP slot; exact reciprocal
        # is kept so the tight numeric check against the f32 reference holds.
        p = e * pl.reciprocal(jnp.sum(e, axis=-1, keepdims=True), approx=False)
        ctx = _bmm("gqk,gkd->gqd", p, vs).reshape(NH, n, HD)

        attn = bo_ref[l]                                     # [1, H], broadcasts over rows
        for hh in range(NH):                                 # head-sliced W_O: no lane concat
            attn = attn + _mm(ctx[hh], woh_ref[l * NH + hh])
        h2 = _layer_norm(h2 + attn, ln1g_ref[l], ln1b_ref[l])

        # ----- feed-forward -----
        inter = _gelu(_mm(h2, wi_ref[l]) + bi_ref[l])
        h2 = _layer_norm(h2 + _mm(inter, wo2_ref[l]) + bo2_ref[l],
                         ln2g_ref[l], ln2b_ref[l])

    # ----- pooler + classifier + per-example cross entropy (128-lane-padded outputs) -----
    cls = h2.reshape(B, S, H)[:, 0, :]                       # [B, H]  (CLS token)
    pooled = jnp.tanh(_mm(cls, wp_ref[...]) + bp_ref[...])
    logits = _mm(pooled, wc_ref[...]) + bc_ref[...]          # [B, PAD]; padded cols = -1e30
    logits_ref[...] = logits
    # F.cross_entropy(logits, labels, reduction='none') over the real classes
    mx = jnp.max(logits, axis=-1, keepdims=True)
    lse = mx + jnp.log(jnp.sum(jnp.exp(logits - mx), axis=-1, keepdims=True))
    tgt = jnp.sum(logits * onehot_ref[...], axis=-1, keepdims=True)
    loss_ref[...] = jnp.broadcast_to(lse - tgt, (B, PAD))


def learner_forward(params, input_ids, attention_mask, labels):
    bf16 = jnp.bfloat16
    # ---- glue (embedding gather, mask bias, padded classifier / one-hot) in plain JAX ----
    x2 = (params["word_emb"][input_ids]
          + params["pos_emb"][None, :, :]
          + params["type_emb"][0][None, None, :]).reshape(B * S, H).astype(jnp.float32)
    bias = ((1.0 - attention_mask)[:, None, :] * -1e9).astype(jnp.float32)       # [B,1,S]
    bias_g = jnp.broadcast_to(bias[None], (NH, B, 1, S)).reshape(NH * B, 1, S)   # head-major
    onehot_pad = jax.nn.one_hot(labels, PAD, dtype=jnp.float32)                  # [B,PAD]
    wc_pad = (jnp.zeros((H, PAD), jnp.float32)
              .at[:, :NUM_LABELS].set(params["wc"]).astype(bf16))
    bc_pad = (jnp.full((1, PAD), -1e30, dtype=jnp.float32)
              .at[:, :NUM_LABELS].set(params["bc"]))
    # fused QKV projection (numerically identical to separate Q/K/V matmuls)
    wqkv = jnp.concatenate(
        [params["wq"], params["wk"], params["wv"]], axis=-1).astype(bf16)        # [L,H,3H]
    bqkv = jnp.concatenate([params["bq"], params["bk"], params["bv"]], axis=-1)  # [L,1,3H]
    woh = params["wo"].reshape(L * NH, HD, H).astype(bf16)                       # head-sliced W_O

    in_arrays = [
        x2, bias_g, params["lne_g"], params["lne_b"],
        wqkv, bqkv,
        woh, params["bo"], params["ln1g"], params["ln1b"],
        params["wi"].astype(bf16), params["bi"],
        params["wo2"].astype(bf16), params["bo2"],
        params["ln2g"], params["ln2b"],
        params["wp"].astype(bf16), params["bp"],
        wc_pad, bc_pad, onehot_pad,
    ]

    # Gridless call: everything (weights + activations, well under 1 MiB) is resident
    # in VMEM for the whole forward pass; no per-layer grid steps or weight DMAs.
    # TODO(synk): at production shapes add a "parallel" row-tile grid axis so v7x's
    # second TensorCore is used; at B*S=16 the kernel is overhead-bound as-is.
    vmem = pl.BlockSpec(memory_space=pltpu.MemorySpace.VMEM)
    logits_pad, loss_pad = pl.pallas_call(
        learner_kernel,
        out_shape=(
            jax.ShapeDtypeStruct((B, PAD), jnp.float32),
            jax.ShapeDtypeStruct((B, PAD), jnp.float32),
        ),
        in_specs=[vmem] * len(in_arrays),
        out_specs=(vmem, vmem),
    )(*in_arrays)
    return logits_pad[:, :NUM_LABELS], loss_pad[:, 0]


# ------------------------- pure-JAX reference (for checking) -------------------------
def reference_forward(params, input_ids, attention_mask, labels):
    x2 = (params["word_emb"][input_ids]
          + params["pos_emb"][None, :, :]
          + params["type_emb"][0][None, None, :]).reshape(B * S, H).astype(jnp.float32)
    bias = ((1.0 - attention_mask)[:, None, None, :] * -1e9).astype(jnp.float32)  # [B,1,1,S]
    h2 = _layer_norm(x2, params["lne_g"], params["lne_b"])
    scale = 1.0 / math.sqrt(HD)
    for l in range(L):
        q = ((_mm(h2, params["wq"][l]) + params["bq"][l]) * scale).reshape(B, S, NH, HD)
        k = (_mm(h2, params["wk"][l]) + params["bk"][l]).reshape(B, S, NH, HD)
        v = (_mm(h2, params["wv"][l]) + params["bv"][l]).reshape(B, S, NH, HD)
        s = _bmm("bqhd,bkhd->bhqk", q, k) + bias
        m = jnp.max(s, -1, keepdims=True)
        e = jnp.exp(s - m)
        p = e / jnp.sum(e, -1, keepdims=True)
        ctx = _bmm("bhqk,bkhd->bqhd", p, v).reshape(B * S, H)
        attn = _mm(ctx, params["wo"][l]) + params["bo"][l]
        h2 = _layer_norm(h2 + attn, params["ln1g"][l], params["ln1b"][l])
        inter = _gelu(_mm(h2, params["wi"][l]) + params["bi"][l])
        h2 = _layer_norm(h2 + _mm(inter, params["wo2"][l]) + params["bo2"][l],
                         params["ln2g"][l], params["ln2b"][l])
    cls = h2.reshape(B, S, H)[:, 0, :]
    pooled = jnp.tanh(_mm(cls, params["wp"]) + params["bp"])
    logits = _mm(pooled, params["wc"]) + params["bc"]
    onehot = jax.nn.one_hot(labels, NUM_LABELS, dtype=jnp.float32)
    mx = jnp.max(logits, -1, keepdims=True)
    lse = mx + jnp.log(jnp.sum(jnp.exp(logits - mx), -1, keepdims=True))
    loss = (lse - jnp.sum(logits * onehot, -1, keepdims=True))[:, 0]
    return logits, loss


# ------------------------------- deterministic init -------------------------------
def init_params(key):
    keys = iter(jax.random.split(key, 64))

    def normal(shape, std=0.02):
        return (std * jax.random.normal(next(keys), shape)).astype(jnp.float32)

    p = {}
    p["word_emb"] = normal((VOCAB, H))
    p["pos_emb"] = normal((S, H))
    p["type_emb"] = normal((2, H))
    p["lne_g"] = jnp.ones((1, H), jnp.float32) + normal((1, H), 0.01)
    p["lne_b"] = normal((1, H), 0.01)
    for name in ("wq", "wk", "wv", "wo"):
        p[name] = normal((L, H, H))
    for name in ("bq", "bk", "bv", "bo"):
        p[name] = normal((L, 1, H), 0.01)
    p["ln1g"] = jnp.ones((L, 1, H), jnp.float32) + normal((L, 1, H), 0.01)
    p["ln1b"] = normal((L, 1, H), 0.01)
    p["wi"] = normal((L, H, FF))
    p["bi"] = normal((L, 1, FF), 0.01)
    p["wo2"] = normal((L, FF, H))
    p["bo2"] = normal((L, 1, H), 0.01)
    p["ln2g"] = jnp.ones((L, 1, H), jnp.float32) + normal((L, 1, H), 0.01)
    p["ln2b"] = normal((L, 1, H), 0.01)
    p["wp"] = normal((H, H))
    p["bp"] = jnp.zeros((1, H), jnp.float32)
    p["wc"] = normal((H, NUM_LABELS))   # classifier re-initialized N(0, 0.02) like init_weights()
    p["bc"] = jnp.zeros((1, NUM_LABELS), jnp.float32)
    return p


if __name__ == "__main__":
    root = jax.random.PRNGKey(0)
    k_params, k_ids, k_labels = jax.random.split(root, 3)

    params = init_params(k_params)
    input_ids = jax.random.randint(k_ids, (B, S), 0, VOCAB, dtype=jnp.int32)
    attention_mask = jnp.ones((B, S), jnp.float32)
    labels = jax.random.randint(k_labels, (B,), 0, NUM_LABELS, dtype=jnp.int32)

    logits, loss = learner_forward(params, input_ids, attention_mask, labels)
    jax.block_until_ready((logits, loss))

    ref_logits, ref_loss = reference_forward(params, input_ids, attention_mask, labels)
    assert logits.shape == (B, NUM_LABELS) and loss.shape == (B,)
    assert jnp.allclose(logits, ref_logits, atol=2e-3, rtol=2e-3), (logits, ref_logits)
    assert jnp.allclose(loss, ref_loss, atol=2e-3, rtol=2e-3), (loss, ref_loss)
    print("KERNEL_OK")
</pallas_src>

<mosaic_0001>
module attributes {stable_mosaic.version = 11 : i64} {
  func.func @learner_kernel(%arg0: memref<16x32xf32, #tpu.memory_space<vmem>>, %arg1: memref<8x1x8xf32, #tpu.memory_space<vmem>>, %arg2: memref<1x32xf32, #tpu.memory_space<vmem>>, %arg3: memref<1x32xf32, #tpu.memory_space<vmem>>, %arg4: memref<2x32x96xbf16, #tpu.memory_space<vmem>>, %arg5: memref<2x1x96xf32, #tpu.memory_space<vmem>>, %arg6: memref<8x8x32xbf16, #tpu.memory_space<vmem>>, %arg7: memref<2x1x32xf32, #tpu.memory_space<vmem>>, %arg8: memref<2x1x32xf32, #tpu.memory_space<vmem>>, %arg9: memref<2x1x32xf32, #tpu.memory_space<vmem>>, %arg10: memref<2x32x64xbf16, #tpu.memory_space<vmem>>, %arg11: memref<2x1x64xf32, #tpu.memory_space<vmem>>, %arg12: memref<2x64x32xbf16, #tpu.memory_space<vmem>>, %arg13: memref<2x1x32xf32, #tpu.memory_space<vmem>>, %arg14: memref<2x1x32xf32, #tpu.memory_space<vmem>>, %arg15: memref<2x1x32xf32, #tpu.memory_space<vmem>>, %arg16: memref<32x32xbf16, #tpu.memory_space<vmem>>, %arg17: memref<1x32xf32, #tpu.memory_space<vmem>>, %arg18: memref<32x128xbf16, #tpu.memory_space<vmem>>, %arg19: memref<1x128xf32, #tpu.memory_space<vmem>>, %arg20: memref<2x128xf32, #tpu.memory_space<vmem>>, %arg21: memref<2x128xf32, #tpu.memory_space<vmem>>, %arg22: memref<2x128xf32, #tpu.memory_space<vmem>>) attributes {dimension_semantics = [], scalar_prefetch = 0 : i64, scratch_operands = 0 : i64, tpu.core_type = #tpu.core_type<tc>} {
    %c0 = arith.constant 0 : index
    %c0_0 = arith.constant 0 : index
    %0 = vector.load %arg0[%c0, %c0_0] : memref<16x32xf32, #tpu.memory_space<vmem>>, vector<16x32xf32>
    %c0_1 = arith.constant 0 : index
    %c0_2 = arith.constant 0 : index
    %1 = vector.load %arg2[%c0_1, %c0_2] : memref<1x32xf32, #tpu.memory_space<vmem>>, vector<1x32xf32>
    %c0_3 = arith.constant 0 : index
    %c0_4 = arith.constant 0 : index
    %2 = vector.load %arg3[%c0_3, %c0_4] : memref<1x32xf32, #tpu.memory_space<vmem>>, vector<1x32xf32>
    %cst = arith.constant dense<0.000000e+00> : vector<16xf32>
    %3 = vector.multi_reduction <add>, %0, %cst [1] : vector<16x32xf32> to vector<16xf32>
    %4 = vector.shape_cast %3 : vector<16xf32> to vector<16x1xf32>
    %cst_5 = arith.constant 3.200000e+01 : f32
    %5 = vector.broadcast %cst_5 : f32 to vector<16x1xf32>
    %6 = arith.divf %4, %5 : vector<16x1xf32>
    %7 = vector.broadcast %6 : vector<16x1xf32> to vector<16x32xf32>
    %8 = arith.subf %0, %7 : vector<16x32xf32>
    %9 = arith.mulf %8, %8 : vector<16x32xf32>
    %cst_6 = arith.constant dense<0.000000e+00> : vector<16xf32>
    %10 = vector.multi_reduction <add>, %9, %cst_6 [1] : vector<16x32xf32> to vector<16xf32>
    %11 = vector.shape_cast %10 : vector<16xf32> to vector<16x1xf32>
    %cst_7 = arith.constant 3.200000e+01 : f32
    %12 = vector.broadcast %cst_7 : f32 to vector<16x1xf32>
    %13 = arith.divf %11, %12 : vector<16x1xf32>
    %14 = vector.broadcast %6 : vector<16x1xf32> to vector<16x32xf32>
    %15 = arith.subf %0, %14 : vector<16x32xf32>
    %cst_8 = arith.constant 9.99999996E-13 : f32
    %16 = vector.broadcast %cst_8 : f32 to vector<16x1xf32>
    %17 = arith.addf %13, %16 : vector<16x1xf32>
    %18 = math.rsqrt %17 : vector<16x1xf32>
    %19 = vector.broadcast %18 : vector<16x1xf32> to vector<16x32xf32>
    %20 = arith.mulf %15, %19 : vector<16x32xf32>
    %21 = vector.broadcast %1 : vector<1x32xf32> to vector<16x32xf32>
    %22 = arith.mulf %20, %21 : vector<16x32xf32>
    %23 = vector.broadcast %2 : vector<1x32xf32> to vector<16x32xf32>
    %24 = arith.addf %22, %23 : vector<16x32xf32>
    %c0_9 = arith.constant 0 : index
    %c0_10 = arith.constant 0 : index
    %c0_11 = arith.constant 0 : index
    %25 = vector.load %arg1[%c0_9, %c0_10, %c0_11] : memref<8x1x8xf32, #tpu.memory_space<vmem>>, vector<8x1x8xf32>
    %c0_12 = arith.constant 0 : index
    %c0_13 = arith.constant 0 : index
    %c0_14 = arith.constant 0 : index
    %26 = vector.load %arg4[%c0_12, %c0_13, %c0_14] : memref<2x32x96xbf16, #tpu.memory_space<vmem>>, vector<1x32x96xbf16>
    %27 = vector.shape_cast %26 : vector<1x32x96xbf16> to vector<32x96xbf16>
    %28 = arith.truncf %24 : vector<16x32xf32> to vector<16x32xbf16>
    %cst_15 = arith.constant dense<0.000000e+00> : vector<16x96xf32>
    %29 = tpu.matmul %28, %27, %cst_15 {dimension_numbers = #tpu.dot_dimension_numbers<[1], [0], [0], [1], [0, 0, 1, 1], [], []>} : vector<16x32xbf16>, vector<32x96xbf16>, vector<16x96xf32> -> vector<16x96xf32>
    %c0_16 = arith.constant 0 : index
    %c0_17 = arith.constant 0 : index
    %c0_18 = arith.constant 0 : index
    %30 = vector.load %arg5[%c0_16, %c0_17, %c0_18] : memref<2x1x96xf32, #tpu.memory_space<vmem>>, vector<1x1x96xf32>
    %31 = vector.shape_cast %30 : vector<1x1x96xf32> to vector<1x96xf32>
    %32 = vector.broadcast %31 : vector<1x96xf32> to vector<16x96xf32>
    %33 = arith.addf %29, %32 : vector<16x96xf32>
    %34 = vector.extract_strided_slice %33 {offsets = [0, 0], sizes = [16, 32], strides = [1, 1]} : vector<16x96xf32> to vector<16x32xf32>
    %cst_19 = arith.constant 0.353553385 : f32
    %35 = vector.broadcast %cst_19 : f32 to vector<16x32xf32>
    %36 = arith.mulf %34, %35 : vector<16x32xf32>
    %37 = vector.extract_strided_slice %33 {offsets = [0, 32], sizes = [16, 32], strides = [1, 1]} : vector<16x96xf32> to vector<16x32xf32>
    %38 = vector.extract_strided_slice %33 {offsets = [0, 64], sizes = [16, 32], strides = [1, 1]} : vector<16x96xf32> to vector<16x32xf32>
    %39 = vector.extract_strided_slice %36 {offsets = [0, 0], sizes = [16, 8], strides = [1, 1]} : vector<16x32xf32> to vector<16x8xf32>
    %40 = vector.extract_strided_slice %36 {offsets = [0, 8], sizes = [16, 8], strides = [1, 1]} : vector<16x32xf32> to vector<16x8xf32>
    %41 = vector.extract_strided_slice %36 {offsets = [0, 16], sizes = [16, 8], strides = [1, 1]} : vector<16x32xf32> to vector<16x8xf32>
    %42 = vector.extract_strided_slice %36 {offsets = [0, 24], sizes = [16, 8], strides = [1, 1]} : vector<16x32xf32> to vector<16x8xf32>
    %43 = vector.shape_cast %39 : vector<16x8xf32> to vector<1x16x8xf32>
    %44 = vector.shape_cast %40 : vector<16x8xf32> to vector<1x16x8xf32>
    %45 = vector.shape_cast %41 : vector<16x8xf32> to vector<1x16x8xf32>
    %46 = vector.shape_cast %42 : vector<16x8xf32> to vector<1x16x8xf32>
    %47 = tpu.concatenate %43, %44, %45, %46 in 0 : vector<1x16x8xf32>, vector<1x16x8xf32>, vector<1x16x8xf32>, vector<1x16x8xf32> -> vector<4x16x8xf32>
    %48 = vector.shape_cast %47 : vector<4x16x8xf32> to vector<8x8x8xf32>
    %49 = vector.extract_strided_slice %37 {offsets = [0, 0], sizes = [16, 8], strides = [1, 1]} : vector<16x32xf32> to vector<16x8xf32>
    %50 = vector.extract_strided_slice %37 {offsets = [0, 8], sizes = [16, 8], strides = [1, 1]} : vector<16x32xf32> to vector<16x8xf32>
    %51 = vector.extract_strided_slice %37 {offsets = [0, 16], sizes = [16, 8], strides = [1, 1]} : vector<16x32xf32> to vector<16x8xf32>
    %52 = vector.extract_strided_slice %37 {offsets = [0, 24], sizes = [16, 8], strides = [1, 1]} : vector<16x32xf32> to vector<16x8xf32>
    %53 = vector.shape_cast %49 : vector<16x8xf32> to vector<1x16x8xf32>
    %54 = vector.shape_cast %50 : vector<16x8xf32> to vector<1x16x8xf32>
    %55 = vector.shape_cast %51 : vector<16x8xf32> to vector<1x16x8xf32>
    %56 = vector.shape_cast %52 : vector<16x8xf32> to vector<1x16x8xf32>
    %57 = tpu.concatenate %53, %54, %55, %56 in 0 : vector<1x16x8xf32>, vector<1x16x8xf32>, vector<1x16x8xf32>, vector<1x16x8xf32> -> vector<4x16x8xf32>
    %58 = vector.shape_cast %57 : vector<4x16x8xf32> to vector<8x8x8xf32>
    %59 = vector.extract_strided_slice %38 {offsets = [0, 0], sizes = [16, 8], strides = [1, 1]} : vector<16x32xf32> to vector<16x8xf32>
    %60 = vector.extract_strided_slice %38 {offsets = [0, 8], sizes = [16, 8], strides = [1, 1]} : vector<16x32xf32> to vector<16x8xf32>
    %61 = vector.extract_strided_slice %38 {offsets = [0, 16], sizes = [16, 8], strides = [1, 1]} : vector<16x32xf32> to vector<16x8xf32>
    %62 = vector.extract_strided_slice %38 {offsets = [0, 24], sizes = [16, 8], strides = [1, 1]} : vector<16x32xf32> to vector<16x8xf32>
    %63 = vector.shape_cast %59 : vector<16x8xf32> to vector<1x16x8xf32>
    %64 = vector.shape_cast %60 : vector<16x8xf32> to vector<1x16x8xf32>
    %65 = vector.shape_cast %61 : vector<16x8xf32> to vector<1x16x8xf32>
    %66 = vector.shape_cast %62 : vector<16x8xf32> to vector<1x16x8xf32>
    %67 = tpu.concatenate %63, %64, %65, %66 in 0 : vector<1x16x8xf32>, vector<1x16x8xf32>, vector<1x16x8xf32>, vector<1x16x8xf32> -> vector<4x16x8xf32>
    %68 = vector.shape_cast %67 : vector<4x16x8xf32> to vector<8x8x8xf32>
    %69 = arith.truncf %48 : vector<8x8x8xf32> to vector<8x8x8xbf16>
    %70 = arith.truncf %58 : vector<8x8x8xf32> to vector<8x8x8xbf16>
    "tpu.trace_start"() <{level = 10 : i32, message = "gqd,gkd->gqk"}> : () -> ()
    %cst_20 = arith.constant dense<0.000000e+00> : vector<8x8x8xf32>
    %71 = tpu.matmul %69, %70, %cst_20 {dimension_numbers = #tpu.dot_dimension_numbers<[2], [2], [1], [1], [0, 0, 0, 1, 1, 1], [0], [0]>} : vector<8x8x8xbf16>, vector<8x8x8xbf16>, vector<8x8x8xf32> -> vector<8x8x8xf32>
    "tpu.trace_stop"() : () -> ()
    %72 = vector.broadcast %25 : vector<8x1x8xf32> to vector<8x8x8xf32>
    %73 = arith.addf %71, %72 : vector<8x8x8xf32>
    %cst_21 = arith.constant dense<0xFF800000> : vector<8x8xf32>
    %74 = vector.multi_reduction <maximumf>, %73, %cst_21 [2] : vector<8x8x8xf32> to vector<8x8xf32>
    %75 = vector.shape_cast %74 : vector<8x8xf32> to vector<8x8x1xf32>
    %76 = vector.broadcast %75 : vector<8x8x1xf32> to vector<8x8x8xf32>
    %77 = arith.subf %73, %76 : vector<8x8x8xf32>
    %78 = math.exp %77 : vector<8x8x8xf32>
    %cst_22 = arith.constant dense<0.000000e+00> : vector<8x8xf32>
    %79 = vector.multi_reduction <add>, %78, %cst_22 [2] : vector<8x8x8xf32> to vector<8x8xf32>
    %80 = vector.shape_cast %79 : vector<8x8xf32> to vector<8x8x1xf32>
    %81 = tpu.reciprocal %80 : vector<8x8x1xf32> -> vector<8x8x1xf32>
    %82 = vector.broadcast %81 : vector<8x8x1xf32> to vector<8x8x8xf32>
    %83 = arith.mulf %78, %82 : vector<8x8x8xf32>
    %84 = arith.truncf %83 : vector<8x8x8xf32> to vector<8x8x8xbf16>
    %85 = arith.truncf %68 : vector<8x8x8xf32> to vector<8x8x8xbf16>
    "tpu.trace_start"() <{level = 10 : i32, message = "gqk,gkd->gqd"}> : () -> ()
    %cst_23 = arith.constant dense<0.000000e+00> : vector<8x8x8xf32>
    %86 = tpu.matmul %84, %85, %cst_23 {dimension_numbers = #tpu.dot_dimension_numbers<[2], [1], [1], [2], [0, 0, 0, 1, 1, 2], [0], [0]>} : vector<8x8x8xbf16>, vector<8x8x8xbf16>, vector<8x8x8xf32> -> vector<8x8x8xf32>
    "tpu.trace_stop"() : () -> ()
    %87 = vector.shape_cast %86 : vector<8x8x8xf32> to vector<4x16x8xf32>
    %c0_24 = arith.constant 0 : index
    %c0_25 = arith.constant 0 : index
    %c0_26 = arith.constant 0 : index
    %88 = vector.load %arg7[%c0_24, %c0_25, %c0_26] : memref<2x1x32xf32, #tpu.memory_space<vmem>>, vector<1x1x32xf32>
    %89 = vector.shape_cast %88 : vector<1x1x32xf32> to vector<1x32xf32>
    %90 = vector.extract_strided_slice %87 {offsets = [0, 0, 0], sizes = [1, 16, 8], strides = [1, 1, 1]} : vector<4x16x8xf32> to vector<1x16x8xf32>
    %91 = vector.shape_cast %90 : vector<1x16x8xf32> to vector<16x8xf32>
    %c0_27 = arith.constant 0 : index
    %c0_28 = arith.constant 0 : index
    %c0_29 = arith.constant 0 : index
    %92 = vector.load %arg6[%c0_27, %c0_28, %c0_29] : memref<8x8x32xbf16, #tpu.memory_space<vmem>>, vector<1x8x32xbf16>
    %93 = vector.shape_cast %92 : vector<1x8x32xbf16> to vector<8x32xbf16>
    %94 = arith.truncf %91 : vector<16x8xf32> to vector<16x8xbf16>
    %cst_30 = arith.constant dense<0.000000e+00> : vector<16x32xf32>
    %95 = tpu.matmul %94, %93, %cst_30 {dimension_numbers = #tpu.dot_dimension_numbers<[1], [0], [0], [1], [0, 0, 1, 1], [], []>} : vector<16x8xbf16>, vector<8x32xbf16>, vector<16x32xf32> -> vector<16x32xf32>
    %96 = vector.broadcast %89 : vector<1x32xf32> to vector<16x32xf32>
    %97 = arith.addf %96, %95 : vector<16x32xf32>
    %98 = vector.extract_strided_slice %87 {offsets = [1, 0, 0], sizes = [1, 16, 8], strides = [1, 1, 1]} : vector<4x16x8xf32> to vector<1x16x8xf32>
    %99 = vector.shape_cast %98 : vector<1x16x8xf32> to vector<16x8xf32>
    %c1 = arith.constant 1 : index
    %c0_31 = arith.constant 0 : index
    %c0_32 = arith.constant 0 : index
    %100 = vector.load %arg6[%c1, %c0_31, %c0_32] : memref<8x8x32xbf16, #tpu.memory_space<vmem>>, vector<1x8x32xbf16>
    %101 = vector.shape_cast %100 : vector<1x8x32xbf16> to vector<8x32xbf16>
    %102 = arith.truncf %99 : vector<16x8xf32> to vector<16x8xbf16>
    %cst_33 = arith.constant dense<0.000000e+00> : vector<16x32xf32>
    %103 = tpu.matmul %102, %101, %cst_33 {dimension_numbers = #tpu.dot_dimension_numbers<[1], [0], [0], [1], [0, 0, 1, 1], [], []>} : vector<16x8xbf16>, vector<8x32xbf16>, vector<16x32xf32> -> vector<16x32xf32>
    %104 = arith.addf %97, %103 : vector<16x32xf32>
    %105 = vector.extract_strided_slice %87 {offsets = [2, 0, 0], sizes = [1, 16, 8], strides = [1, 1, 1]} : vector<4x16x8xf32> to vector<1x16x8xf32>
    %106 = vector.shape_cast %105 : vector<1x16x8xf32> to vector<16x8xf32>
    %c2 = arith.constant 2 : index
    %c0_34 = arith.constant 0 : index
    %c0_35 = arith.constant 0 : index
    %107 = vector.load %arg6[%c2, %c0_34, %c0_35] : memref<8x8x32xbf16, #tpu.memory_space<vmem>>, vector<1x8x32xbf16>
    %108 = vector.shape_cast %107 : vector<1x8x32xbf16> to vector<8x32xbf16>
    %109 = arith.truncf %106 : vector<16x8xf32> to vector<16x8xbf16>
    %cst_36 = arith.constant dense<0.000000e+00> : vector<16x32xf32>
    %110 = tpu.matmul %109, %108, %cst_36 {dimension_numbers = #tpu.dot_dimension_numbers<[1], [0], [0], [1], [0, 0, 1, 1], [], []>} : vector<16x8xbf16>, vector<8x32xbf16>, vector<16x32xf32> -> vector<16x32xf32>
    %111 = arith.addf %104, %110 : vector<16x32xf32>
    %112 = vector.extract_strided_slice %87 {offsets = [3, 0, 0], sizes = [1, 16, 8], strides = [1, 1, 1]} : vector<4x16x8xf32> to vector<1x16x8xf32>
    %113 = vector.shape_cast %112 : vector<1x16x8xf32> to vector<16x8xf32>
    %c3 = arith.constant 3 : index
    %c0_37 = arith.constant 0 : index
    %c0_38 = arith.constant 0 : index
    %114 = vector.load %arg6[%c3, %c0_37, %c0_38] : memref<8x8x32xbf16, #tpu.memory_space<vmem>>, vector<1x8x32xbf16>
    %115 = vector.shape_cast %114 : vector<1x8x32xbf16> to vector<8x32xbf16>
    %116 = arith.truncf %113 : vector<16x8xf32> to vector<16x8xbf16>
    %cst_39 = arith.constant dense<0.000000e+00> : vector<16x32xf32>
    %117 = tpu.matmul %116, %115, %cst_39 {dimension_numbers = #tpu.dot_dimension_numbers<[1], [0], [0], [1], [0, 0, 1, 1], [], []>} : vector<16x8xbf16>, vector<8x32xbf16>, vector<16x32xf32> -> vector<16x32xf32>
    %118 = arith.addf %111, %117 : vector<16x32xf32>
    %119 = arith.addf %24, %118 : vector<16x32xf32>
    %c0_40 = arith.constant 0 : index
    %c0_41 = arith.constant 0 : index
    %c0_42 = arith.constant 0 : index
    %120 = vector.load %arg8[%c0_40, %c0_41, %c0_42] : memref<2x1x32xf32, #tpu.memory_space<vmem>>, vector<1x1x32xf32>
    %121 = vector.shape_cast %120 : vector<1x1x32xf32> to vector<1x32xf32>
    %c0_43 = arith.constant 0 : index
    %c0_44 = arith.constant 0 : index
    %c0_45 = arith.constant 0 : index
    %122 = vector.load %arg9[%c0_43, %c0_44, %c0_45] : memref<2x1x32xf32, #tpu.memory_space<vmem>>, vector<1x1x32xf32>
    %123 = vector.shape_cast %122 : vector<1x1x32xf32> to vector<1x32xf32>
    %cst_46 = arith.constant dense<0.000000e+00> : vector<16xf32>
    %124 = vector.multi_reduction <add>, %119, %cst_46 [1] : vector<16x32xf32> to vector<16xf32>
    %125 = vector.shape_cast %124 : vector<16xf32> to vector<16x1xf32>
    %cst_47 = arith.constant 3.200000e+01 : f32
    %126 = vector.broadcast %cst_47 : f32 to vector<16x1xf32>
    %127 = arith.divf %125, %126 : vector<16x1xf32>
    %128 = vector.broadcast %127 : vector<16x1xf32> to vector<16x32xf32>
    %129 = arith.subf %119, %128 : vector<16x32xf32>
    %130 = arith.mulf %129, %129 : vector<16x32xf32>
    %cst_48 = arith.constant dense<0.000000e+00> : vector<16xf32>
    %131 = vector.multi_reduction <add>, %130, %cst_48 [1] : vector<16x32xf32> to vector<16xf32>
    %132 = vector.shape_cast %131 : vector<16xf32> to vector<16x1xf32>
    %cst_49 = arith.constant 3.200000e+01 : f32
    %133 = vector.broadcast %cst_49 : f32 to vector<16x1xf32>
    %134 = arith.divf %132, %133 : vector<16x1xf32>
    %135 = vector.broadcast %127 : vector<16x1xf32> to vector<16x32xf32>
    %136 = arith.subf %119, %135 : vector<16x32xf32>
    %cst_50 = arith.constant 9.99999996E-13 : f32
    %137 = vector.broadcast %cst_50 : f32 to vector<16x1xf32>
    %138 = arith.addf %134, %137 : vector<16x1xf32>
    %139 = math.rsqrt %138 : vector<16x1xf32>
    %140 = vector.broadcast %139 : vector<16x1xf32> to vector<16x32xf32>
    %141 = arith.mulf %136, %140 : vector<16x32xf32>
    %142 = vector.broadcast %121 : vector<1x32xf32> to vector<16x32xf32>
    %143 = arith.mulf %141, %142 : vector<16x32xf32>
    %144 = vector.broadcast %123 : vector<1x32xf32> to vector<16x32xf32>
    %145 = arith.addf %143, %144 : vector<16x32xf32>
    %c0_51 = arith.constant 0 : index
    %c0_52 = arith.constant 0 : index
    %c0_53 = arith.constant 0 : index
    %146 = vector.load %arg10[%c0_51, %c0_52, %c0_53] : memref<2x32x64xbf16, #tpu.memory_space<vmem>>, vector<1x32x64xbf16>
    %147 = vector.shape_cast %146 : vector<1x32x64xbf16> to vector<32x64xbf16>
    %148 = arith.truncf %145 : vector<16x32xf32> to vector<16x32xbf16>
    %cst_54 = arith.constant dense<0.000000e+00> : vector<16x64xf32>
    %149 = tpu.matmul %148, %147, %cst_54 {dimension_numbers = #tpu.dot_dimension_numbers<[1], [0], [0], [1], [0, 0, 1, 1], [], []>} : vector<16x32xbf16>, vector<32x64xbf16>, vector<16x64xf32> -> vector<16x64xf32>
    %c0_55 = arith.constant 0 : index
    %c0_56 = arith.constant 0 : index
    %c0_57 = arith.constant 0 : index
    %150 = vector.load %arg11[%c0_55, %c0_56, %c0_57] : memref<2x1x64xf32, #tpu.memory_space<vmem>>, vector<1x1x64xf32>
    %151 = vector.shape_cast %150 : vector<1x1x64xf32> to vector<1x64xf32>
    %152 = vector.broadcast %151 : vector<1x64xf32> to vector<16x64xf32>
    %153 = arith.addf %149, %152 : vector<16x64xf32>
    %cst_58 = arith.constant 5.000000e-01 : f32
    %154 = vector.broadcast %cst_58 : f32 to vector<16x64xf32>
    %155 = arith.mulf %154, %153 : vector<16x64xf32>
    %cst_59 = arith.constant 4.471500e-02 : f32
    %156 = vector.broadcast %cst_59 : f32 to vector<16x64xf32>
    %157 = arith.mulf %156, %153 : vector<16x64xf32>
    %158 = arith.mulf %157, %153 : vector<16x64xf32>
    %159 = arith.mulf %158, %153 : vector<16x64xf32>
    %160 = arith.addf %153, %159 : vector<16x64xf32>
    %cst_60 = arith.constant 0.797884583 : f32
    %161 = vector.broadcast %cst_60 : f32 to vector<16x64xf32>
    %162 = arith.mulf %161, %160 : vector<16x64xf32>
    %163 = math.tanh %162 : vector<16x64xf32>
    %cst_61 = arith.constant 1.000000e+00 : f32
    %164 = vector.broadcast %cst_61 : f32 to vector<16x64xf32>
    %165 = arith.addf %164, %163 : vector<16x64xf32>
    %166 = arith.mulf %155, %165 : vector<16x64xf32>
    %c0_62 = arith.constant 0 : index
    %c0_63 = arith.constant 0 : index
    %c0_64 = arith.constant 0 : index
    %167 = vector.load %arg12[%c0_62, %c0_63, %c0_64] : memref<2x64x32xbf16, #tpu.memory_space<vmem>>, vector<1x64x32xbf16>
    %168 = vector.shape_cast %167 : vector<1x64x32xbf16> to vector<64x32xbf16>
    %169 = arith.truncf %166 : vector<16x64xf32> to vector<16x64xbf16>
    %cst_65 = arith.constant dense<0.000000e+00> : vector<16x32xf32>
    %170 = tpu.matmul %169, %168, %cst_65 {dimension_numbers = #tpu.dot_dimension_numbers<[1], [0], [0], [1], [0, 0, 1, 1], [], []>} : vector<16x64xbf16>, vector<64x32xbf16>, vector<16x32xf32> -> vector<16x32xf32>
    %171 = arith.addf %145, %170 : vector<16x32xf32>
    %c0_66 = arith.constant 0 : index
    %c0_67 = arith.constant 0 : index
    %c0_68 = arith.constant 0 : index
    %172 = vector.load %arg13[%c0_66, %c0_67, %c0_68] : memref<2x1x32xf32, #tpu.memory_space<vmem>>, vector<1x1x32xf32>
    %173 = vector.shape_cast %172 : vector<1x1x32xf32> to vector<1x32xf32>
    %174 = vector.broadcast %173 : vector<1x32xf32> to vector<16x32xf32>
    %175 = arith.addf %171, %174 : vector<16x32xf32>
    %c0_69 = arith.constant 0 : index
    %c0_70 = arith.constant 0 : index
    %c0_71 = arith.constant 0 : index
    %176 = vector.load %arg14[%c0_69, %c0_70, %c0_71] : memref<2x1x32xf32, #tpu.memory_space<vmem>>, vector<1x1x32xf32>
    %177 = vector.shape_cast %176 : vector<1x1x32xf32> to vector<1x32xf32>
    %c0_72 = arith.constant 0 : index
    %c0_73 = arith.constant 0 : index
    %c0_74 = arith.constant 0 : index
    %178 = vector.load %arg15[%c0_72, %c0_73, %c0_74] : memref<2x1x32xf32, #tpu.memory_space<vmem>>, vector<1x1x32xf32>
    %179 = vector.shape_cast %178 : vector<1x1x32xf32> to vector<1x32xf32>
    %cst_75 = arith.constant dense<0.000000e+00> : vector<16xf32>
    %180 = vector.multi_reduction <add>, %175, %cst_75 [1] : vector<16x32xf32> to vector<16xf32>
    %181 = vector.shape_cast %180 : vector<16xf32> to vector<16x1xf32>
    %cst_76 = arith.constant 3.200000e+01 : f32
    %182 = vector.broadcast %cst_76 : f32 to vector<16x1xf32>
    %183 = arith.divf %181, %182 : vector<16x1xf32>
    %184 = vector.broadcast %183 : vector<16x1xf32> to vector<16x32xf32>
    %185 = arith.subf %175, %184 : vector<16x32xf32>
    %186 = arith.mulf %185, %185 : vector<16x32xf32>
    %cst_77 = arith.constant dense<0.000000e+00> : vector<16xf32>
    %187 = vector.multi_reduction <add>, %186, %cst_77 [1] : vector<16x32xf32> to vector<16xf32>
    %188 = vector.shape_cast %187 : vector<16xf32> to vector<16x1xf32>
    %cst_78 = arith.constant 3.200000e+01 : f32
    %189 = vector.broadcast %cst_78 : f32 to vector<16x1xf32>
    %190 = arith.divf %188, %189 : vector<16x1xf32>
    %191 = vector.broadcast %183 : vector<16x1xf32> to vector<16x32xf32>
    %192 = arith.subf %175, %191 : vector<16x32xf32>
    %cst_79 = arith.constant 9.99999996E-13 : f32
    %193 = vector.broadcast %cst_79 : f32 to vector<16x1xf32>
    %194 = arith.addf %190, %193 : vector<16x1xf32>
    %195 = math.rsqrt %194 : vector<16x1xf32>
    %196 = vector.broadcast %195 : vector<16x1xf32> to vector<16x32xf32>
    %197 = arith.mulf %192, %196 : vector<16x32xf32>
    %198 = vector.broadcast %177 : vector<1x32xf32> to vector<16x32xf32>
    %199 = arith.mulf %197, %198 : vector<16x32xf32>
    %200 = vector.broadcast %179 : vector<1x32xf32> to vector<16x32xf32>
    %201 = arith.addf %199, %200 : vector<16x32xf32>
    %c1_80 = arith.constant 1 : index
    %c0_81 = arith.constant 0 : index
    %c0_82 = arith.constant 0 : index
    %202 = vector.load %arg4[%c1_80, %c0_81, %c0_82] : memref<2x32x96xbf16, #tpu.memory_space<vmem>>, vector<1x32x96xbf16>
    %203 = vector.shape_cast %202 : vector<1x32x96xbf16> to vector<32x96xbf16>
    %204 = arith.truncf %201 : vector<16x32xf32> to vector<16x32xbf16>
    %cst_83 = arith.constant dense<0.000000e+00> : vector<16x96xf32>
    %205 = tpu.matmul %204, %203, %cst_83 {dimension_numbers = #tpu.dot_dimension_numbers<[1], [0], [0], [1], [0, 0, 1, 1], [], []>} : vector<16x32xbf16>, vector<32x96xbf16>, vector<16x96xf32> -> vector<16x96xf32>
    %c1_84 = arith.constant 1 : index
    %c0_85 = arith.constant 0 : index
    %c0_86 = arith.constant 0 : index
    %206 = vector.load %arg5[%c1_84, %c0_85, %c0_86] : memref<2x1x96xf32, #tpu.memory_space<vmem>>, vector<1x1x96xf32>
    %207 = vector.shape_cast %206 : vector<1x1x96xf32> to vector<1x96xf32>
    %208 = vector.broadcast %207 : vector<1x96xf32> to vector<16x96xf32>
    %209 = arith.addf %205, %208 : vector<16x96xf32>
    %210 = vector.extract_strided_slice %209 {offsets = [0, 0], sizes = [16, 32], strides = [1, 1]} : vector<16x96xf32> to vector<16x32xf32>
    %cst_87 = arith.constant 0.353553385 : f32
    %211 = vector.broadcast %cst_87 : f32 to vector<16x32xf32>
    %212 = arith.mulf %210, %211 : vector<16x32xf32>
    %213 = vector.extract_strided_slice %209 {offsets = [0, 32], sizes = [16, 32], strides = [1, 1]} : vector<16x96xf32> to vector<16x32xf32>
    %214 = vector.extract_strided_slice %209 {offsets = [0, 64], sizes = [16, 32], strides = [1, 1]} : vector<16x96xf32> to vector<16x32xf32>
    %215 = vector.extract_strided_slice %212 {offsets = [0, 0], sizes = [16, 8], strides = [1, 1]} : vector<16x32xf32> to vector<16x8xf32>
    %216 = vector.extract_strided_slice %212 {offsets = [0, 8], sizes = [16, 8], strides = [1, 1]} : vector<16x32xf32> to vector<16x8xf32>
    %217 = vector.extract_strided_slice %212 {offsets = [0, 16], sizes = [16, 8], strides = [1, 1]} : vector<16x32xf32> to vector<16x8xf32>
    %218 = vector.extract_strided_slice %212 {offsets = [0, 24], sizes = [16, 8], strides = [1, 1]} : vector<16x32xf32> to vector<16x8xf32>
    %219 = vector.shape_cast %215 : vector<16x8xf32> to vector<1x16x8xf32>
    %220 = vector.shape_cast %216 : vector<16x8xf32> to vector<1x16x8xf32>
    %221 = vector.shape_cast %217 : vector<16x8xf32> to vector<1x16x8xf32>
    %222 = vector.shape_cast %218 : vector<16x8xf32> to vector<1x16x8xf32>
    %223 = tpu.concatenate %219, %220, %221, %222 in 0 : vector<1x16x8xf32>, vector<1x16x8xf32>, vector<1x16x8xf32>, vector<1x16x8xf32> -> vector<4x16x8xf32>
    %224 = vector.shape_cast %223 : vector<4x16x8xf32> to vector<8x8x8xf32>
    %225 = vector.extract_strided_slice %213 {offsets = [0, 0], sizes = [16, 8], strides = [1, 1]} : vector<16x32xf32> to vector<16x8xf32>
    %226 = vector.extract_strided_slice %213 {offsets = [0, 8], sizes = [16, 8], strides = [1, 1]} : vector<16x32xf32> to vector<16x8xf32>
    %227 = vector.extract_strided_slice %213 {offsets = [0, 16], sizes = [16, 8], strides = [1, 1]} : vector<16x32xf32> to vector<16x8xf32>
    %228 = vector.extract_strided_slice %213 {offsets = [0, 24], sizes = [16, 8], strides = [1, 1]} : vector<16x32xf32> to vector<16x8xf32>
    %229 = vector.shape_cast %225 : vector<16x8xf32> to vector<1x16x8xf32>
    %230 = vector.shape_cast %226 : vector<16x8xf32> to vector<1x16x8xf32>
    %231 = vector.shape_cast %227 : vector<16x8xf32> to vector<1x16x8xf32>
    %232 = vector.shape_cast %228 : vector<16x8xf32> to vector<1x16x8xf32>
    %233 = tpu.concatenate %229, %230, %231, %232 in 0 : vector<1x16x8xf32>, vector<1x16x8xf32>, vector<1x16x8xf32>, vector<1x16x8xf32> -> vector<4x16x8xf32>
    %234 = vector.shape_cast %233 : vector<4x16x8xf32> to vector<8x8x8xf32>
    %235 = vector.extract_strided_slice %214 {offsets = [0, 0], sizes = [16, 8], strides = [1, 1]} : vector<16x32xf32> to vector<16x8xf32>
    %236 = vector.extract_strided_slice %214 {offsets = [0, 8], sizes = [16, 8], strides = [1, 1]} : vector<16x32xf32> to vector<16x8xf32>
    %237 = vector.extract_strided_slice %214 {offsets = [0, 16], sizes = [16, 8], strides = [1, 1]} : vector<16x32xf32> to vector<16x8xf32>
    %238 = vector.extract_strided_slice %214 {offsets = [0, 24], sizes = [16, 8], strides = [1, 1]} : vector<16x32xf32> to vector<16x8xf32>
    %239 = vector.shape_cast %235 : vector<16x8xf32> to vector<1x16x8xf32>
    %240 = vector.shape_cast %236 : vector<16x8xf32> to vector<1x16x8xf32>
    %241 = vector.shape_cast %237 : vector<16x8xf32> to vector<1x16x8xf32>
    %242 = vector.shape_cast %238 : vector<16x8xf32> to vector<1x16x8xf32>
    %243 = tpu.concatenate %239, %240, %241, %242 in 0 : vector<1x16x8xf32>, vector<1x16x8xf32>, vector<1x16x8xf32>, vector<1x16x8xf32> -> vector<4x16x8xf32>
    %244 = vector.shape_cast %243 : vector<4x16x8xf32> to vector<8x8x8xf32>
    %245 = arith.truncf %224 : vector<8x8x8xf32> to vector<8x8x8xbf16>
    %246 = arith.truncf %234 : vector<8x8x8xf32> to vector<8x8x8xbf16>
    "tpu.trace_start"() <{level = 10 : i32, message = "gqd,gkd->gqk"}> : () -> ()
    %cst_88 = arith.constant dense<0.000000e+00> : vector<8x8x8xf32>
    %247 = tpu.matmul %245, %246, %cst_88 {dimension_numbers = #tpu.dot_dimension_numbers<[2], [2], [1], [1], [0, 0, 0, 1, 1, 1], [0], [0]>} : vector<8x8x8xbf16>, vector<8x8x8xbf16>, vector<8x8x8xf32> -> vector<8x8x8xf32>
    "tpu.trace_stop"() : () -> ()
    %248 = vector.broadcast %25 : vector<8x1x8xf32> to vector<8x8x8xf32>
    %249 = arith.addf %247, %248 : vector<8x8x8xf32>
    %cst_89 = arith.constant dense<0xFF800000> : vector<8x8xf32>
    %250 = vector.multi_reduction <maximumf>, %249, %cst_89 [2] : vector<8x8x8xf32> to vector<8x8xf32>
    %251 = vector.shape_cast %250 : vector<8x8xf32> to vector<8x8x1xf32>
    %252 = vector.broadcast %251 : vector<8x8x1xf32> to vector<8x8x8xf32>
    %253 = arith.subf %249, %252 : vector<8x8x8xf32>
    %254 = math.exp %253 : vector<8x8x8xf32>
    %cst_90 = arith.constant dense<0.000000e+00> : vector<8x8xf32>
    %255 = vector.multi_reduction <add>, %254, %cst_90 [2] : vector<8x8x8xf32> to vector<8x8xf32>
    %256 = vector.shape_cast %255 : vector<8x8xf32> to vector<8x8x1xf32>
    %257 = tpu.reciprocal %256 : vector<8x8x1xf32> -> vector<8x8x1xf32>
    %258 = vector.broadcast %257 : vector<8x8x1xf32> to vector<8x8x8xf32>
    %259 = arith.mulf %254, %258 : vector<8x8x8xf32>
    %260 = arith.truncf %259 : vector<8x8x8xf32> to vector<8x8x8xbf16>
    %261 = arith.truncf %244 : vector<8x8x8xf32> to vector<8x8x8xbf16>
    "tpu.trace_start"() <{level = 10 : i32, message = "gqk,gkd->gqd"}> : () -> ()
    %cst_91 = arith.constant dense<0.000000e+00> : vector<8x8x8xf32>
    %262 = tpu.matmul %260, %261, %cst_91 {dimension_numbers = #tpu.dot_dimension_numbers<[2], [1], [1], [2], [0, 0, 0, 1, 1, 2], [0], [0]>} : vector<8x8x8xbf16>, vector<8x8x8xbf16>, vector<8x8x8xf32> -> vector<8x8x8xf32>
    "tpu.trace_stop"() : () -> ()
    %263 = vector.shape_cast %262 : vector<8x8x8xf32> to vector<4x16x8xf32>
    %c1_92 = arith.constant 1 : index
    %c0_93 = arith.constant 0 : index
    %c0_94 = arith.constant 0 : index
    %264 = vector.load %arg7[%c1_92, %c0_93, %c0_94] : memref<2x1x32xf32, #tpu.memory_space<vmem>>, vector<1x1x32xf32>
    %265 = vector.shape_cast %264 : vector<1x1x32xf32> to vector<1x32xf32>
    %266 = vector.extract_strided_slice %263 {offsets = [0, 0, 0], sizes = [1, 16, 8], strides = [1, 1, 1]} : vector<4x16x8xf32> to vector<1x16x8xf32>
    %267 = vector.shape_cast %266 : vector<1x16x8xf32> to vector<16x8xf32>
    %c4 = arith.constant 4 : index
    %c0_95 = arith.constant 0 : index
    %c0_96 = arith.constant 0 : index
    %268 = vector.load %arg6[%c4, %c0_95, %c0_96] : memref<8x8x32xbf16, #tpu.memory_space<vmem>>, vector<1x8x32xbf16>
    %269 = vector.shape_cast %268 : vector<1x8x32xbf16> to vector<8x32xbf16>
    %270 = arith.truncf %267 : vector<16x8xf32> to vector<16x8xbf16>
    %cst_97 = arith.constant dense<0.000000e+00> : vector<16x32xf32>
    %271 = tpu.matmul %270, %269, %cst_97 {dimension_numbers = #tpu.dot_dimension_numbers<[1], [0], [0], [1], [0, 0, 1, 1], [], []>} : vector<16x8xbf16>, vector<8x32xbf16>, vector<16x32xf32> -> vector<16x32xf32>
    %272 = vector.broadcast %265 : vector<1x32xf32> to vector<16x32xf32>
    %273 = arith.addf %272, %271 : vector<16x32xf32>
    %274 = vector.extract_strided_slice %263 {offsets = [1, 0, 0], sizes = [1, 16, 8], strides = [1, 1, 1]} : vector<4x16x8xf32> to vector<1x16x8xf32>
    %275 = vector.shape_cast %274 : vector<1x16x8xf32> to vector<16x8xf32>
    %c5 = arith.constant 5 : index
    %c0_98 = arith.constant 0 : index
    %c0_99 = arith.constant 0 : index
    %276 = vector.load %arg6[%c5, %c0_98, %c0_99] : memref<8x8x32xbf16, #tpu.memory_space<vmem>>, vector<1x8x32xbf16>
    %277 = vector.shape_cast %276 : vector<1x8x32xbf16> to vector<8x32xbf16>
    %278 = arith.truncf %275 : vector<16x8xf32> to vector<16x8xbf16>
    %cst_100 = arith.constant dense<0.000000e+00> : vector<16x32xf32>
    %279 = tpu.matmul %278, %277, %cst_100 {dimension_numbers = #tpu.dot_dimension_numbers<[1], [0], [0], [1], [0, 0, 1, 1], [], []>} : vector<16x8xbf16>, vector<8x32xbf16>, vector<16x32xf32> -> vector<16x32xf32>
    %280 = arith.addf %273, %279 : vector<16x32xf32>
    %281 = vector.extract_strided_slice %263 {offsets = [2, 0, 0], sizes = [1, 16, 8], strides = [1, 1, 1]} : vector<4x16x8xf32> to vector<1x16x8xf32>
    %282 = vector.shape_cast %281 : vector<1x16x8xf32> to vector<16x8xf32>
    %c6 = arith.constant 6 : index
    %c0_101 = arith.constant 0 : index
    %c0_102 = arith.constant 0 : index
    %283 = vector.load %arg6[%c6, %c0_101, %c0_102] : memref<8x8x32xbf16, #tpu.memory_space<vmem>>, vector<1x8x32xbf16>
    %284 = vector.shape_cast %283 : vector<1x8x32xbf16> to vector<8x32xbf16>
    %285 = arith.truncf %282 : vector<16x8xf32> to vector<16x8xbf16>
    %cst_103 = arith.constant dense<0.000000e+00> : vector<16x32xf32>
    %286 = tpu.matmul %285, %284, %cst_103 {dimension_numbers = #tpu.dot_dimension_numbers<[1], [0], [0], [1], [0, 0, 1, 1], [], []>} : vector<16x8xbf16>, vector<8x32xbf16>, vector<16x32xf32> -> vector<16x32xf32>
    %287 = arith.addf %280, %286 : vector<16x32xf32>
    %288 = vector.extract_strided_slice %263 {offsets = [3, 0, 0], sizes = [1, 16, 8], strides = [1, 1, 1]} : vector<4x16x8xf32> to vector<1x16x8xf32>
    %289 = vector.shape_cast %288 : vector<1x16x8xf32> to vector<16x8xf32>
    %c7 = arith.constant 7 : index
    %c0_104 = arith.constant 0 : index
    %c0_105 = arith.constant 0 : index
    %290 = vector.load %arg6[%c7, %c0_104, %c0_105] : memref<8x8x32xbf16, #tpu.memory_space<vmem>>, vector<1x8x32xbf16>
    %291 = vector.shape_cast %290 : vector<1x8x32xbf16> to vector<8x32xbf16>
    %292 = arith.truncf %289 : vector<16x8xf32> to vector<16x8xbf16>
    %cst_106 = arith.constant dense<0.000000e+00> : vector<16x32xf32>
    %293 = tpu.matmul %292, %291, %cst_106 {dimension_numbers = #tpu.dot_dimension_numbers<[1], [0], [0], [1], [0, 0, 1, 1], [], []>} : vector<16x8xbf16>, vector<8x32xbf16>, vector<16x32xf32> -> vector<16x32xf32>
    %294 = arith.addf %287, %293 : vector<16x32xf32>
    %295 = arith.addf %201, %294 : vector<16x32xf32>
    %c1_107 = arith.constant 1 : index
    %c0_108 = arith.constant 0 : index
    %c0_109 = arith.constant 0 : index
    %296 = vector.load %arg8[%c1_107, %c0_108, %c0_109] : memref<2x1x32xf32, #tpu.memory_space<vmem>>, vector<1x1x32xf32>
    %297 = vector.shape_cast %296 : vector<1x1x32xf32> to vector<1x32xf32>
    %c1_110 = arith.constant 1 : index
    %c0_111 = arith.constant 0 : index
    %c0_112 = arith.constant 0 : index
    %298 = vector.load %arg9[%c1_110, %c0_111, %c0_112] : memref<2x1x32xf32, #tpu.memory_space<vmem>>, vector<1x1x32xf32>
    %299 = vector.shape_cast %298 : vector<1x1x32xf32> to vector<1x32xf32>
    %cst_113 = arith.constant dense<0.000000e+00> : vector<16xf32>
    %300 = vector.multi_reduction <add>, %295, %cst_113 [1] : vector<16x32xf32> to vector<16xf32>
    %301 = vector.shape_cast %300 : vector<16xf32> to vector<16x1xf32>
    %cst_114 = arith.constant 3.200000e+01 : f32
    %302 = vector.broadcast %cst_114 : f32 to vector<16x1xf32>
    %303 = arith.divf %301, %302 : vector<16x1xf32>
    %304 = vector.broadcast %303 : vector<16x1xf32> to vector<16x32xf32>
    %305 = arith.subf %295, %304 : vector<16x32xf32>
    %306 = arith.mulf %305, %305 : vector<16x32xf32>
    %cst_115 = arith.constant dense<0.000000e+00> : vector<16xf32>
    %307 = vector.multi_reduction <add>, %306, %cst_115 [1] : vector<16x32xf32> to vector<16xf32>
    %308 = vector.shape_cast %307 : vector<16xf32> to vector<16x1xf32>
    %cst_116 = arith.constant 3.200000e+01 : f32
    %309 = vector.broadcast %cst_116 : f32 to vector<16x1xf32>
    %310 = arith.divf %308, %309 : vector<16x1xf32>
    %311 = vector.broadcast %303 : vector<16x1xf32> to vector<16x32xf32>
    %312 = arith.subf %295, %311 : vector<16x32xf32>
    %cst_117 = arith.constant 9.99999996E-13 : f32
    %313 = vector.broadcast %cst_117 : f32 to vector<16x1xf32>
    %314 = arith.addf %310, %313 : vector<16x1xf32>
    %315 = math.rsqrt %314 : vector<16x1xf32>
    %316 = vector.broadcast %315 : vector<16x1xf32> to vector<16x32xf32>
    %317 = arith.mulf %312, %316 : vector<16x32xf32>
    %318 = vector.broadcast %297 : vector<1x32xf32> to vector<16x32xf32>
    %319 = arith.mulf %317, %318 : vector<16x32xf32>
    %320 = vector.broadcast %299 : vector<1x32xf32> to vector<16x32xf32>
    %321 = arith.addf %319, %320 : vector<16x32xf32>
    %c1_118 = arith.constant 1 : index
    %c0_119 = arith.constant 0 : index
    %c0_120 = arith.constant 0 : index
    %322 = vector.load %arg10[%c1_118, %c0_119, %c0_120] : memref<2x32x64xbf16, #tpu.memory_space<vmem>>, vector<1x32x64xbf16>
    %323 = vector.shape_cast %322 : vector<1x32x64xbf16> to vector<32x64xbf16>
    %324 = arith.truncf %321 : vector<16x32xf32> to vector<16x32xbf16>
    %cst_121 = arith.constant dense<0.000000e+00> : vector<16x64xf32>
    %325 = tpu.matmul %324, %323, %cst_121 {dimension_numbers = #tpu.dot_dimension_numbers<[1], [0], [0], [1], [0, 0, 1, 1], [], []>} : vector<16x32xbf16>, vector<32x64xbf16>, vector<16x64xf32> -> vector<16x64xf32>
    %c1_122 = arith.constant 1 : index
    %c0_123 = arith.constant 0 : index
    %c0_124 = arith.constant 0 : index
    %326 = vector.load %arg11[%c1_122, %c0_123, %c0_124] : memref<2x1x64xf32, #tpu.memory_space<vmem>>, vector<1x1x64xf32>
    %327 = vector.shape_cast %326 : vector<1x1x64xf32> to vector<1x64xf32>
    %328 = vector.broadcast %327 : vector<1x64xf32> to vector<16x64xf32>
    %329 = arith.addf %325, %328 : vector<16x64xf32>
    %cst_125 = arith.constant 5.000000e-01 : f32
    %330 = vector.broadcast %cst_125 : f32 to vector<16x64xf32>
    %331 = arith.mulf %330, %329 : vector<16x64xf32>
    %cst_126 = arith.constant 4.471500e-02 : f32
    %332 = vector.broadcast %cst_126 : f32 to vector<16x64xf32>
    %333 = arith.mulf %332, %329 : vector<16x64xf32>
    %334 = arith.mulf %333, %329 : vector<16x64xf32>
    %335 = arith.mulf %334, %329 : vector<16x64xf32>
    %336 = arith.addf %329, %335 : vector<16x64xf32>
    %cst_127 = arith.constant 0.797884583 : f32
    %337 = vector.broadcast %cst_127 : f32 to vector<16x64xf32>
    %338 = arith.mulf %337, %336 : vector<16x64xf32>
    %339 = math.tanh %338 : vector<16x64xf32>
    %cst_128 = arith.constant 1.000000e+00 : f32
    %340 = vector.broadcast %cst_128 : f32 to vector<16x64xf32>
    %341 = arith.addf %340, %339 : vector<16x64xf32>
    %342 = arith.mulf %331, %341 : vector<16x64xf32>
    %c1_129 = arith.constant 1 : index
    %c0_130 = arith.constant 0 : index
    %c0_131 = arith.constant 0 : index
    %343 = vector.load %arg12[%c1_129, %c0_130, %c0_131] : memref<2x64x32xbf16, #tpu.memory_space<vmem>>, vector<1x64x32xbf16>
    %344 = vector.shape_cast %343 : vector<1x64x32xbf16> to vector<64x32xbf16>
    %345 = arith.truncf %342 : vector<16x64xf32> to vector<16x64xbf16>
    %cst_132 = arith.constant dense<0.000000e+00> : vector<16x32xf32>
    %346 = tpu.matmul %345, %344, %cst_132 {dimension_numbers = #tpu.dot_dimension_numbers<[1], [0], [0], [1], [0, 0, 1, 1], [], []>} : vector<16x64xbf16>, vector<64x32xbf16>, vector<16x32xf32> -> vector<16x32xf32>
    %347 = arith.addf %321, %346 : vector<16x32xf32>
    %c1_133 = arith.constant 1 : index
    %c0_134 = arith.constant 0 : index
    %c0_135 = arith.constant 0 : index
    %348 = vector.load %arg13[%c1_133, %c0_134, %c0_135] : memref<2x1x32xf32, #tpu.memory_space<vmem>>, vector<1x1x32xf32>
    %349 = vector.shape_cast %348 : vector<1x1x32xf32> to vector<1x32xf32>
    %350 = vector.broadcast %349 : vector<1x32xf32> to vector<16x32xf32>
    %351 = arith.addf %347, %350 : vector<16x32xf32>
    %c1_136 = arith.constant 1 : index
    %c0_137 = arith.constant 0 : index
    %c0_138 = arith.constant 0 : index
    %352 = vector.load %arg14[%c1_136, %c0_137, %c0_138] : memref<2x1x32xf32, #tpu.memory_space<vmem>>, vector<1x1x32xf32>
    %353 = vector.shape_cast %352 : vector<1x1x32xf32> to vector<1x32xf32>
    %c1_139 = arith.constant 1 : index
    %c0_140 = arith.constant 0 : index
    %c0_141 = arith.constant 0 : index
    %354 = vector.load %arg15[%c1_139, %c0_140, %c0_141] : memref<2x1x32xf32, #tpu.memory_space<vmem>>, vector<1x1x32xf32>
    %355 = vector.shape_cast %354 : vector<1x1x32xf32> to vector<1x32xf32>
    %cst_142 = arith.constant dense<0.000000e+00> : vector<16xf32>
    %356 = vector.multi_reduction <add>, %351, %cst_142 [1] : vector<16x32xf32> to vector<16xf32>
    %357 = vector.shape_cast %356 : vector<16xf32> to vector<16x1xf32>
    %cst_143 = arith.constant 3.200000e+01 : f32
    %358 = vector.broadcast %cst_143 : f32 to vector<16x1xf32>
    %359 = arith.divf %357, %358 : vector<16x1xf32>
    %360 = vector.broadcast %359 : vector<16x1xf32> to vector<16x32xf32>
    %361 = arith.subf %351, %360 : vector<16x32xf32>
    %362 = arith.mulf %361, %361 : vector<16x32xf32>
    %cst_144 = arith.constant dense<0.000000e+00> : vector<16xf32>
    %363 = vector.multi_reduction <add>, %362, %cst_144 [1] : vector<16x32xf32> to vector<16xf32>
    %364 = vector.shape_cast %363 : vector<16xf32> to vector<16x1xf32>
    %cst_145 = arith.constant 3.200000e+01 : f32
    %365 = vector.broadcast %cst_145 : f32 to vector<16x1xf32>
    %366 = arith.divf %364, %365 : vector<16x1xf32>
    %367 = vector.broadcast %359 : vector<16x1xf32> to vector<16x32xf32>
    %368 = arith.subf %351, %367 : vector<16x32xf32>
    %cst_146 = arith.constant 9.99999996E-13 : f32
    %369 = vector.broadcast %cst_146 : f32 to vector<16x1xf32>
    %370 = arith.addf %366, %369 : vector<16x1xf32>
    %371 = math.rsqrt %370 : vector<16x1xf32>
    %372 = vector.broadcast %371 : vector<16x1xf32> to vector<16x32xf32>
    %373 = arith.mulf %368, %372 : vector<16x32xf32>
    %374 = vector.broadcast %353 : vector<1x32xf32> to vector<16x32xf32>
    %375 = arith.mulf %373, %374 : vector<16x32xf32>
    %376 = vector.broadcast %355 : vector<1x32xf32> to vector<16x32xf32>
    %377 = arith.addf %375, %376 : vector<16x32xf32>
    %378 = vector.shape_cast %377 : vector<16x32xf32> to vector<2x8x32xf32>
    %379 = vector.extract_strided_slice %378 {offsets = [0, 0, 0], sizes = [2, 1, 32], strides = [1, 1, 1]} : vector<2x8x32xf32> to vector<2x1x32xf32>
    %380 = vector.shape_cast %379 : vector<2x1x32xf32> to vector<2x32xf32>
    %c0_147 = arith.constant 0 : index
    %c0_148 = arith.constant 0 : index
    %381 = vector.load %arg16[%c0_147, %c0_148] : memref<32x32xbf16, #tpu.memory_space<vmem>>, vector<32x32xbf16>
    %382 = arith.truncf %380 : vector<2x32xf32> to vector<2x32xbf16>
    %cst_149 = arith.constant dense<0.000000e+00> : vector<2x32xf32>
    %383 = tpu.matmul %382, %381, %cst_149 {dimension_numbers = #tpu.dot_dimension_numbers<[1], [0], [0], [1], [0, 0, 1, 1], [], []>} : vector<2x32xbf16>, vector<32x32xbf16>, vector<2x32xf32> -> vector<2x32xf32>
    %c0_150 = arith.constant 0 : index
    %c0_151 = arith.constant 0 : index
    %384 = vector.load %arg17[%c0_150, %c0_151] : memref<1x32xf32, #tpu.memory_space<vmem>>, vector<1x32xf32>
    %385 = vector.broadcast %384 : vector<1x32xf32> to vector<2x32xf32>
    %386 = arith.addf %383, %385 : vector<2x32xf32>
    %387 = math.tanh %386 : vector<2x32xf32>
    %c0_152 = arith.constant 0 : index
    %c0_153 = arith.constant 0 : index
    %388 = vector.load %arg18[%c0_152, %c0_153] : memref<32x128xbf16, #tpu.memory_space<vmem>>, vector<32x128xbf16>
    %389 = arith.truncf %387 : vector<2x32xf32> to vector<2x32xbf16>
    %cst_154 = arith.constant dense<0.000000e+00> : vector<2x128xf32>
    %390 = tpu.matmul %389, %388, %cst_154 {dimension_numbers = #tpu.dot_dimension_numbers<[1], [0], [0], [1], [0, 0, 1, 1], [], []>} : vector<2x32xbf16>, vector<32x128xbf16>, vector<2x128xf32> -> vector<2x128xf32>
    %c0_155 = arith.constant 0 : index
    %c0_156 = arith.constant 0 : index
    %391 = vector.load %arg19[%c0_155, %c0_156] : memref<1x128xf32, #tpu.memory_space<vmem>>, vector<1x128xf32>
    %392 = vector.broadcast %391 : vector<1x128xf32> to vector<2x128xf32>
    %393 = arith.addf %390, %392 : vector<2x128xf32>
    %c0_157 = arith.constant 0 : index
    %c0_158 = arith.constant 0 : index
    %394 = vector.load %arg21[%c0_157, %c0_158] : memref<2x128xf32, #tpu.memory_space<vmem>>, vector<2x128xf32>
    tpu.vector_store %arg21[%c0_157, %c0_158], %393 {strides = array<i32>} : memref<2x128xf32, #tpu.memory_space<vmem>>, vector<2x128xf32>,
    %cst_159 = arith.constant dense<0xFF800000> : vector<2xf32>
    %395 = vector.multi_reduction <maximumf>, %393, %cst_159 [1] : vector<2x128xf32> to vector<2xf32>
    %396 = vector.shape_cast %395 : vector<2xf32> to vector<2x1xf32>
    %397 = vector.broadcast %396 : vector<2x1xf32> to vector<2x128xf32>
    %398 = arith.subf %393, %397 : vector<2x128xf32>
    %399 = math.exp %398 : vector<2x128xf32>
    %cst_160 = arith.constant dense<0.000000e+00> : vector<2xf32>
    %400 = vector.multi_reduction <add>, %399, %cst_160 [1] : vector<2x128xf32> to vector<2xf32>
    %401 = vector.shape_cast %400 : vector<2xf32> to vector<2x1xf32>
    %402 = math.log %401 : vector<2x1xf32>
    %403 = arith.addf %396, %402 : vector<2x1xf32>
    %c0_161 = arith.constant 0 : index
    %c0_162 = arith.constant 0 : index
    %404 = vector.load %arg20[%c0_161, %c0_162] : memref<2x128xf32, #tpu.memory_space<vmem>>, vector<2x128xf32>
    %405 = arith.mulf %393, %404 : vector<2x128xf32>
    %cst_163 = arith.constant dense<0.000000e+00> : vector<2xf32>
    %406 = vector.multi_reduction <add>, %405, %cst_163 [1] : vector<2x128xf32> to vector<2xf32>
    %407 = vector.shape_cast %406 : vector<2xf32> to vector<2x1xf32>
    %408 = arith.subf %403, %407 : vector<2x1xf32>
    %409 = vector.shape_cast %408 : vector<2x1xf32> to vector<2x1xf32>
    %410 = vector.broadcast %409 : vector<2x1xf32> to vector<2x128xf32>
    %c0_164 = arith.constant 0 : index
    %c0_165 = arith.constant 0 : index
    %411 = vector.load %arg22[%c0_164, %c0_165] : memref<2x128xf32, #tpu.memory_space<vmem>>, vector<2x128xf32>
    tpu.vector_store %arg22[%c0_164, %c0_165], %410 {strides = array<i32>} : memref<2x128xf32, #tpu.memory_space<vmem>>, vector<2x128xf32>,
    return
  }
}

</mosaic_0001>

<llo_original>
// kernel: tpu_custom_call.1
$region0: #{tpu_custom_call.1}
  #allocation0 [shape = 'u32[]', space=smem, size = 0x4, offset = 0x4, fixed_abs, tag = 'smem constant byte address 0x4 - core index']
  #allocation1 [shape = 'u32[144,128]{1,0:T(1,128)}', space=vmem, size = 0x12000, scoped, tag = 'internal scratch']
  %s0 = inlined_call_operand.hbm [shape: f32[16,32], index: 0, kind: input, shape index: {}]
  %s1 = inlined_call_operand.hbm [shape: f32[8,1,8], index: 1, kind: input, shape index: {}]
  %s2 = inlined_call_operand.hbm [shape: f32[1,32], index: 2, kind: input, shape index: {}]
  %s3 = inlined_call_operand.hbm [shape: f32[1,32], index: 3, kind: input, shape index: {}]
  %s4 = inlined_call_operand.vmem [shape: bf16[2,32,96], index: 4, kind: input, shape index: {}]
  %s5 = inlined_call_operand.hbm [shape: f32[2,1,96], index: 5, kind: input, shape index: {}]
  %s6 = inlined_call_operand.vmem [shape: bf16[8,8,32], index: 6, kind: input, shape index: {}]
  %s7 = inlined_call_operand.hbm [shape: f32[2,1,32], index: 7, kind: input, shape index: {}]
  %s8 = inlined_call_operand.hbm [shape: f32[2,1,32], index: 8, kind: input, shape index: {}]
  %s9 = inlined_call_operand.hbm [shape: f32[2,1,32], index: 9, kind: input, shape index: {}]
  %s10 = inlined_call_operand.vmem [shape: bf16[2,32,64], index: 10, kind: input, shape index: {}]
  %s11 = inlined_call_operand.hbm [shape: f32[2,1,64], index: 11, kind: input, shape index: {}]
  %s12 = inlined_call_operand.vmem [shape: bf16[2,64,32], index: 12, kind: input, shape index: {}]
  %s13 = inlined_call_operand.hbm [shape: f32[2,1,32], index: 13, kind: input, shape index: {}]
  %s14 = inlined_call_operand.hbm [shape: f32[2,1,32], index: 14, kind: input, shape index: {}]
  %s15 = inlined_call_operand.hbm [shape: f32[2,1,32], index: 15, kind: input, shape index: {}]
  %s16 = inlined_call_operand.vmem [shape: bf16[32,32], index: 16, kind: input, shape index: {}]
  %s17 = inlined_call_operand.hbm [shape: f32[1,32], index: 17, kind: input, shape index: {}]
  %s18 = inlined_call_operand.vmem [shape: bf16[32,128], index: 18, kind: input, shape index: {}]
  %s19 = inlined_call_operand.vmem [shape: f32[1,128], index: 19, kind: input, shape index: {}]
  %s20 = inlined_call_operand.vmem [shape: f32[2,128], index: 20, kind: input, shape index: {}]
  %s21 = inlined_call_operand.hbm [shape: f32[2,128], index: 21, kind: output, shape index: {0}]
  %s22 = inlined_call_operand.hbm [shape: f32[2,128], index: 22, kind: output, shape index: {1}]
  %23 = xla_tuple %s21, %s22
  %s24 = sld [smem:[#allocation0]]
  $region154: #{tpu_custom_call.1} parent=0
    _
  %s26 = ssub.s32 1, %s24
  %s27 = scalar_select 0, %s26, %s24
  $region1: #{tpu_custom_call.1} parent=0
    #allocation2 [shape = 'u8[8192]{0}', space=vmem, size = 0x2000, scoped, tag = 'input window, operand 0, single buffered']
    #allocation3 [shape = 's32[1]{0}', space=sflag, size = 0x4, scoped, tag = 'scoped memory for tpu_custom_call.1']
    #allocation4 [shape = 's32[1]{0}', space=sflag, size = 0x4, scoped, tag = 'scoped memory for tpu_custom_call.1']
    #allocation5 [shape = 'u8[4096]{0}', space=vmem, size = 0x1000, scoped, tag = 'input window, operand 1, single buffered']
    #allocation6 [shape = 's32[1]{0}', space=sflag, size = 0x4, scoped, tag = 'scoped memory for tpu_custom_call.1']
    #allocation7 [shape = 'u8[512]{0}', space=vmem, size = 0x400, scoped, tag = 'input window, operand 2, single buffered']
    #allocation8 [shape = 'u8[512]{0}', space=vmem, size = 0x400, scoped, tag = 'input window, operand 3, single buffered']
    #allocation9 [shape = 's32[1]{0}', space=sflag, size = 0x4, scoped, tag = 'scoped memory for tpu_custom_call.1']
    #allocation10 [shape = 'u8[1024]{0}', space=vmem, size = 0x400, scoped, tag = 'input window, operand 5, single buffered']
    #allocation11 [shape = 'u8[1024]{0}', space=vmem, size = 0x400, scoped, tag = 'input window, operand 7, single buffered']
    #allocation12 [shape = 's32[1]{0}', space=sflag, size = 0x4, scoped, tag = 'scoped memory for tpu_custom_call.1']
    #allocation13 [shape = 'u8[1024]{0}', space=vmem, size = 0x400, scoped, tag = 'input window, operand 8, single buffered']
    #allocation14 [shape = 'u8[1024]{0}', space=vmem, size = 0x400, scoped, tag = 'input window, operand 9, single buffered']
    #allocation15 [shape = 's32[1]{0}', space=sflag, size = 0x4, scoped, tag = 'scoped memory for tpu_custom_call.1']
    #allocation16 [shape = 'u8[1024]{0}', space=vmem, size = 0x400, scoped, tag = 'input window, operand 11, single buffered']
    #allocation17 [shape = 'u8[1024]{0}', space=vmem, size = 0x400, scoped, tag = 'input window, operand 13, single buffered']
    #allocation18 [shape = 's32[1]{0}', space=sflag, size = 0x4, scoped, tag = 'scoped memory for tpu_custom_call.1']
    #allocation19 [shape = 'u8[1024]{0}', space=vmem, size = 0x400, scoped, tag = 'input window, operand 14, single buffered']
    #allocation20 [shape = 'u8[1024]{0}', space=vmem, size = 0x400, scoped, tag = 'input window, operand 15, single buffered']
    #allocation21 [shape = 's32[1]{0}', space=sflag, size = 0x4, scoped, tag = 'scoped memory for tpu_custom_call.1']
    #allocation22 [shape = 'u8[512]{0}', space=vmem, size = 0x400, scoped, tag = 'input window, operand 17, single buffered']
    #allocation23 [shape = 'u8[1024]{0}', space=vmem, size = 0x400, scoped, tag = 'output window, operand 0, single buffered']
    #allocation24 [shape = 'u8[1024]{0}', space=vmem, size = 0x400, scoped, tag = 'output window, operand 1, single buffered']
    #allocation25 [shape = 's32[1]{0}', space=sflag, size = 0x4, scoped, tag = 'scoped memory for tpu_custom_call.1']
    %28 = vsyncpa [#allocation3], 0
    %29 = vsyncpa [#allocation6], 0
    %30 = vsyncpa [#allocation9], 0
    %31 = vsyncpa [#allocation12], 0
    %32 = vsyncpa [#allocation15], 0
    %33 = vsyncpa [#allocation18], 0
    %34 = vsyncpa [#allocation21], 0
    %35 = vsyncpa [#allocation4], 0
    %36 = vsyncpa [#allocation25], 0
    // Predicated region
    $region2: #{tpu_custom_call.1} parent=1 // pred_check
      _
    $region3: #{tpu_custom_call.1} parent=1 // pred_check_branch
      %38 = sbr.rel (0) target = $region5
    $region4: #{tpu_custom_call.1} parent=1 // pred_region
      %s40 = ssub.s32 256, 256
      %41 = vsyncadd [#allocation3], %s40
      %s42 = sshll.u32 [#allocation2], 4
      %s43 = int_to_ptr.vmem [resolvable:$true] %s42
      %48 = dma.hbm_to_vmem [thread:$0]  %s0, 256, %s43, [#allocation3], 128, 128, 8
    $region5: #{tpu_custom_call.1} parent=1 // pred_fallthru
      _
    // Predicated region
    $region6: #{tpu_custom_call.1} parent=1 // pred_check
      _
    $region7: #{tpu_custom_call.1} parent=1 // pred_check_branch
      %50 = sbr.rel (0) target = $region9
    $region8: #{tpu_custom_call.1} parent=1 // pred_region
      %s52 = ssub.s32 128, 128
      %53 = vsyncadd [#allocation6], %s52
      %s54 = sshll.u32 [#allocation5], 4
      %s55 = int_to_ptr.vmem [resolvable:$true] %s54
      %60 = dma.hbm_to_vmem [thread:$0]  %s1, 128, %s55, [#allocation6], 16, 16, 1
    $region9: #{tpu_custom_call.1} parent=1 // pred_fallthru
      _
    // Predicated region
    $region10: #{tpu_custom_call.1} parent=1 // pred_check
      _
    $region11: #{tpu_custom_call.1} parent=1 // pred_check_branch
      %62 = sbr.rel (0) target = $region13
    $region12: #{tpu_custom_call.1} parent=1 // pred_region
      %s64 = ssub.s32 16, 16
      %65 = vsyncadd [#allocation6], %s64
      %s67 = sshll.u32 [#allocation7], 4
      %s68 = int_to_ptr.vmem [resolvable:$true] %s67
      %70 = dma.hbm_to_vmem [thread:$0]  %s2, 16, %s68, [#allocation6]
    $region13: #{tpu_custom_call.1} parent=1 // pred_fallthru
      _
    // Predicated region
    $region14: #{tpu_custom_call.1} parent=1 // pred_check
      _
    $region15: #{tpu_custom_call.1} parent=1 // pred_check_branch
      %72 = sbr.rel (0) target = $region17
    $region16: #{tpu_custom_call.1} parent=1 // pred_region
      %s74 = ssub.s32 16, 16
      %75 = vsyncadd [#allocation9], %s74
      %s77 = sshll.u32 [#allocation8], 4
      %s78 = int_to_ptr.vmem [resolvable:$true] %s77
      %80 = dma.hbm_to_vmem [thread:$0]  %s3, 16, %s78, [#allocation9]
    $region17: #{tpu_custom_call.1} parent=1 // pred_fallthru
      _
    // Predicated region
    $region18: #{tpu_custom_call.1} parent=1 // pred_check
      _
    $region19: #{tpu_custom_call.1} parent=1 // pred_check_branch
      %82 = sbr.rel (0) target = $region21
    $region20: #{tpu_custom_call.1} parent=1 // pred_region
      _
    $region21: #{tpu_custom_call.1} parent=1 // pred_fallthru
      _
    // Predicated region
    $region22: #{tpu_custom_call.1} parent=1 // pred_check
      _
    $region23: #{tpu_custom_call.1} parent=1 // pred_check_branch
      %84 = sbr.rel (0) target = $region25
    $region24: #{tpu_custom_call.1} parent=1 // pred_region
      %s86 = ssub.s32 32, 32
      %87 = vsyncadd [#allocation9], %s86
      %s88 = sshll.u32 [#allocation10], 4
      %s89 = int_to_ptr.vmem [resolvable:$true] %s88
      %94 = dma.hbm_to_vmem [thread:$0]  %s5, 32, %s89, [#allocation9], 16, 16, 1
    $region25: #{tpu_custom_call.1} parent=1 // pred_fallthru
      _
    // Predicated region
    $region26: #{tpu_custom_call.1} parent=1 // pred_check
      _
    $region27: #{tpu_custom_call.1} parent=1 // pred_check_branch
      %96 = sbr.rel (0) target = $region29
    $region28: #{tpu_custom_call.1} parent=1 // pred_region
      _
    $region29: #{tpu_custom_call.1} parent=1 // pred_fallthru
      _
    // Predicated region
    $region30: #{tpu_custom_call.1} parent=1 // pred_check
      _
    $region31: #{tpu_custom_call.1} parent=1 // pred_check_branch
      %98 = sbr.rel (0) target = $region33
    $region32: #{tpu_custom_call.1} parent=1 // pred_region
      %s100 = ssub.s32 32, 32
      %101 = vsyncadd [#allocation12], %s100
      %s102 = sshll.u32 [#allocation11], 4
      %s103 = int_to_ptr.vmem [resolvable:$true] %s102
      %108 = dma.hbm_to_vmem [thread:$0]  %s7, 32, %s103, [#allocation12], 16, 16, 1
    $region33: #{tpu_custom_call.1} parent=1 // pred_fallthru
      _
    // Predicated region
    $region34: #{tpu_custom_call.1} parent=1 // pred_check
      _
    $region35: #{tpu_custom_call.1} parent=1 // pred_check_branch
      %110 = sbr.rel (0) target = $region37
    $region36: #{tpu_custom_call.1} parent=1 // pred_region
      %s112 = ssub.s32 32, 32
      %113 = vsyncadd [#allocation12], %s112
      %s114 = sshll.u32 [#allocation13], 4
      %s115 = int_to_ptr.vmem [resolvable:$true] %s114
      %120 = dma.hbm_to_vmem [thread:$0]  %s8, 32, %s115, [#allocation12], 16, 16, 1
    $region37: #{tpu_custom_call.1} parent=1 // pred_fallthru
      _
    // Predicated region
    $region38: #{tpu_custom_call.1} parent=1 // pred_check
      _
    $region39: #{tpu_custom_call.1} parent=1 // pred_check_branch
      %122 = sbr.rel (0) target = $region41
    $region40: #{tpu_custom_call.1} parent=1 // pred_region
      %s124 = ssub.s32 32, 32
      %125 = vsyncadd [#allocation15], %s124
      %s126 = sshll.u32 [#allocation14], 4
      %s127 = int_to_ptr.vmem [resolvable:$true] %s126
      %132 = dma.hbm_to_vmem [thread:$0]  %s9, 32, %s127, [#allocation15], 16, 16, 1
    $region41: #{tpu_custom_call.1} parent=1 // pred_fallthru
      _
    // Predicated region
    $region42: #{tpu_custom_call.1} parent=1 // pred_check
      _
    $region43: #{tpu_custom_call.1} parent=1 // pred_check_branch
      %134 = sbr.rel (0) target = $region45
    $region44: #{tpu_custom_call.1} parent=1 // pred_region
      _
    $region45: #{tpu_custom_call.1} parent=1 // pred_fallthru
      _
    // Predicated region
    $region46: #{tpu_custom_call.1} parent=1 // pred_check
      _
    $region47: #{tpu_custom_call.1} parent=1 // pred_check_branch
      %136 = sbr.rel (0) target = $region49
    $region48: #{tpu_custom_call.1} parent=1 // pred_region
      %s138 = ssub.s32 32, 32
      %139 = vsyncadd [#allocation15], %s138
      %s140 = sshll.u32 [#allocation16], 4
      %s141 = int_to_ptr.vmem [resolvable:$true] %s140
      %146 = dma.hbm_to_vmem [thread:$0]  %s11, 32, %s141, [#allocation15], 16, 16, 1
    $region49: #{tpu_custom_call.1} parent=1 // pred_fallthru
      _
    // Predicated region
    $region50: #{tpu_custom_call.1} parent=1 // pred_check
      _
    $region51: #{tpu_custom_call.1} parent=1 // pred_check_branch
      %148 = sbr.rel (0) target = $region53
    $region52: #{tpu_custom_call.1} parent=1 // pred_region
      _
    $region53: #{tpu_custom_call.1} parent=1 // pred_fallthru
      _
    // Predicated region
    $region54: #{tpu_custom_call.1} parent=1 // pred_check
      _
    $region55: #{tpu_custom_call.1} parent=1 // pred_check_branch
      %150 = sbr.rel (0) target = $region57
    $region56: #{tpu_custom_call.1} parent=1 // pred_region
      %s152 = ssub.s32 32, 32
      %153 = vsyncadd [#allocation18], %s152
      %s154 = sshll.u32 [#allocation17], 4
      %s155 = int_to_ptr.vmem [resolvable:$true] %s154
      %160 = dma.hbm_to_vmem [thread:$0]  %s13, 32, %s155, [#allocation18], 16, 16, 1
    $region57: #{tpu_custom_call.1} parent=1 // pred_fallthru
      _
    // Predicated region
    $region58: #{tpu_custom_call.1} parent=1 // pred_check
      _
    $region59: #{tpu_custom_call.1} parent=1 // pred_check_branch
      %162 = sbr.rel (0) target = $region61
    $region60: #{tpu_custom_call.1} parent=1 // pred_region
      %s164 = ssub.s32 32, 32
      %165 = vsyncadd [#allocation18], %s164
      %s166 = sshll.u32 [#allocation19], 4
      %s167 = int_to_ptr.vmem [resolvable:$true] %s166
      %172 = dma.hbm_to_vmem [thread:$0]  %s14, 32, %s167, [#allocation18], 16, 16, 1
    $region61: #{tpu_custom_call.1} parent=1 // pred_fallthru
      _
    // Predicated region
    $region62: #{tpu_custom_call.1} parent=1 // pred_check
      _
    $region63: #{tpu_custom_call.1} parent=1 // pred_check_branch
      %174 = sbr.rel (0) target = $region65
    $region64: #{tpu_custom_call.1} parent=1 // pred_region
      %s176 = ssub.s32 32, 32
      %177 = vsyncadd [#allocation21], %s176
      %s178 = sshll.u32 [#allocation20], 4
      %s179 = int_to_ptr.vmem [resolvable:$true] %s178
      %184 = dma.hbm_to_vmem [thread:$0]  %s15, 32, %s179, [#allocation21], 16, 16, 1
    $region65: #{tpu_custom_call.1} parent=1 // pred_fallthru
      _
    // Predicated region
    $region66: #{tpu_custom_call.1} parent=1 // pred_check
      _
    $region67: #{tpu_custom_call.1} parent=1 // pred_check_branch
      %186 = sbr.rel (0) target = $region69
    $region68: #{tpu_custom_call.1} parent=1 // pred_region
      _
    $region69: #{tpu_custom_call.1} parent=1 // pred_fallthru
      _
    // Predicated region
    $region70: #{tpu_custom_call.1} parent=1 // pred_check
      _
    $region71: #{tpu_custom_call.1} parent=1 // pred_check_branch
      %188 = sbr.rel (0) target = $region73
    $region72: #{tpu_custom_call.1} parent=1 // pred_region
      %s190 = ssub.s32 16, 16
      %191 = vsyncadd [#allocation21], %s190
      %s193 = sshll.u32 [#allocation22], 4
      %s194 = int_to_ptr.vmem [resolvable:$true] %s193
      %196 = dma.hbm_to_vmem [thread:$0]  %s17, 16, %s194, [#allocation21]
    $region73: #{tpu_custom_call.1} parent=1 // pred_fallthru
      _
    // Predicated region
    $region74: #{tpu_custom_call.1} parent=1 // pred_check
      _
    $region75: #{tpu_custom_call.1} parent=1 // pred_check_branch
      %198 = sbr.rel (0) target = $region77
    $region76: #{tpu_custom_call.1} parent=1 // pred_region
      _
    $region77: #{tpu_custom_call.1} parent=1 // pred_fallthru
      _
    // Predicated region
    $region78: #{tpu_custom_call.1} parent=1 // pred_check
      _
    $region79: #{tpu_custom_call.1} parent=1 // pred_check_branch
      %200 = sbr.rel (0) target = $region81
    $region80: #{tpu_custom_call.1} parent=1 // pred_region
      _
    $region81: #{tpu_custom_call.1} parent=1 // pred_fallthru
      _
    // Predicated region
    $region82: #{tpu_custom_call.1} parent=1 // pred_check
      _
    $region83: #{tpu_custom_call.1} parent=1 // pred_check_branch
      %202 = sbr.rel (0) target = $region85
    $region84: #{tpu_custom_call.1} parent=1 // pred_region
      _
    $region85: #{tpu_custom_call.1} parent=1 // pred_fallthru
      _
    // Predicated region
    $region86: #{tpu_custom_call.1} parent=1 // pred_check
      _
    $region87: #{tpu_custom_call.1} parent=1 // pred_check_branch
      %204 = sbr.rel (0) target = $region89
    $region88: #{tpu_custom_call.1} parent=1 // pred_region
      %205 = dma.done [#allocation3], 256
    $region89: #{tpu_custom_call.1} parent=1 // pred_fallthru
      _
    // Predicated region
    $region90: #{tpu_custom_call.1} parent=1 // pred_check
      _
    $region91: #{tpu_custom_call.1} parent=1 // pred_check_branch
      %207 = sbr.rel (0) target = $region93
    $region92: #{tpu_custom_call.1} parent=1 // pred_region
      %208 = dma.done [#allocation6], 128
    $region93: #{tpu_custom_call.1} parent=1 // pred_fallthru
      _
    // Predicated region
    $region94: #{tpu_custom_call.1} parent=1 // pred_check
      _
    $region95: #{tpu_custom_call.1} parent=1 // pred_check_branch
      %210 = sbr.rel (0) target = $region97
    $region96: #{tpu_custom_call.1} parent=1 // pred_region
      %211 = dma.done [#allocation6], 16
    $region97: #{tpu_custom_call.1} parent=1 // pred_fallthru
      _
    // Predicated region
    $region98: #{tpu_custom_call.1} parent=1 // pred_check
      _
    $region99: #{tpu_custom_call.1} parent=1 // pred_check_branch
      %213 = sbr.rel (0) target = $region101
    $region100: #{tpu_custom_call.1} parent=1 // pred_region
      %214 = dma.done [#allocation9], 16
    $region101: #{tpu_custom_call.1} parent=1 // pred_fallthru
      _
    // Predicated region
    $region102: #{tpu_custom_call.1} parent=1 // pred_check
      _
    $region103: #{tpu_custom_call.1} parent=1 // pred_check_branch
      %216 = sbr.rel (0) target = $region105
    $region104: #{tpu_custom_call.1} parent=1 // pred_region
      %217 = dma.done [#allocation9], 32
    $region105: #{tpu_custom_call.1} parent=1 // pred_fallthru
      _
    // Predicated region
    $region106: #{tpu_custom_call.1} parent=1 // pred_check
      _
    $region107: #{tpu_custom_call.1} parent=1 // pred_check_branch
      %219 = sbr.rel (0) target = $region109
    $region108: #{tpu_custom_call.1} parent=1 // pred_region
      %220 = dma.done [#allocation12], 32
    $region109: #{tpu_custom_call.1} parent=1 // pred_fallthru
      _
    // Predicated region
    $region110: #{tpu_custom_call.1} parent=1 // pred_check
      _
    $region111: #{tpu_custom_call.1} parent=1 // pred_check_branch
      %222 = sbr.rel (0) target = $region113
    $region112: #{tpu_custom_call.1} parent=1 // pred_region
      %223 = dma.done [#allocation12], 32
    $region113: #{tpu_custom_call.1} parent=1 // pred_fallthru
      _
    // Predicated region
    $region114: #{tpu_custom_call.1} parent=1 // pred_check
      _
    $region115: #{tpu_custom_call.1} parent=1 // pred_check_branch
      %225 = sbr.rel (0) target = $region117
    $region116: #{tpu_custom_call.1} parent=1 // pred_region
      %226 = dma.done [#allocation15], 32
    $region117: #{tpu_custom_call.1} parent=1 // pred_fallthru
      _
    // Predicated region
    $region118: #{tpu_custom_call.1} parent=1 // pred_check
      _
    $region119: #{tpu_custom_call.1} parent=1 // pred_check_branch
      %228 = sbr.rel (0) target = $region121
    $region120: #{tpu_custom_call.1} parent=1 // pred_region
      %229 = dma.done [#allocation15], 32
    $region121: #{tpu_custom_call.1} parent=1 // pred_fallthru
      _
    // Predicated region
    $region122: #{tpu_custom_call.1} parent=1 // pred_check
      _
    $region123: #{tpu_custom_call.1} parent=1 // pred_check_branch
      %231 = sbr.rel (0) target = $region125
    $region124: #{tpu_custom_call.1} parent=1 // pred_region
      %232 = dma.done [#allocation18], 32
    $region125: #{tpu_custom_call.1} parent=1 // pred_fallthru
      _
    // Predicated region
    $region126: #{tpu_custom_call.1} parent=1 // pred_check
      _
    $region127: #{tpu_custom_call.1} parent=1 // pred_check_branch
      %234 = sbr.rel (0) target = $region129
    $region128: #{tpu_custom_call.1} parent=1 // pred_region
      %235 = dma.done [#allocation18], 32
    $region129: #{tpu_custom_call.1} parent=1 // pred_fallthru
      _
    // Predicated region
    $region130: #{tpu_custom_call.1} parent=1 // pred_check
      _
    $region131: #{tpu_custom_call.1} parent=1 // pred_check_branch
      %237 = sbr.rel (0) target = $region133
    $region132: #{tpu_custom_call.1} parent=1 // pred_region
      %238 = dma.done [#allocation21], 32
    $region133: #{tpu_custom_call.1} parent=1 // pred_fallthru
      _
    // Predicated region
    $region134: #{tpu_custom_call.1} parent=1 // pred_check
      _
    $region135: #{tpu_custom_call.1} parent=1 // pred_check_branch
      %240 = sbr.rel (0) target = $region137
    $region136: #{tpu_custom_call.1} parent=1 // pred_region
      %241 = dma.done [#allocation21], 16
    $region137: #{tpu_custom_call.1} parent=1 // pred_fallthru
      _
    %v243 = vld [vmem:[#allocation2] sm:$0xff]
    %v244 = vld [vmem:[#allocation2 + $0x8] sm:$0xff]
    %v245 = vld [vmem:[#allocation7] sm:$0x1]
    %v246 = vld [vmem:[#allocation8] sm:$0x1]
    %vm247 = vcmask 261120
    %v248 = vsel %vm247, %v243, 0.0
    %249 = vadd.xlane.f32.xlu0 %v248
    %v250 = vpop.xlane.xlu0 %249
    %v251 = vsel %vm247, %v244, 0.0
    %252 = vadd.xlane.f32.xlu0 %v251
    %v253 = vpop.xlane.xlu0 %252
    %v254 = vrcp.pop 32.0
    %v255 = vmul.f32 %v250, %v254
    %v256 = vmul.f32 %v253, %v254
    %v257 = vsub.f32 %v243, %v255
    %v258 = vsub.f32 %v244, %v256
    %v259 = vmul.f32 %v257, %v257
    %v260 = vmul.f32 %v258, %v258
    %v261 = vsel %vm247, %v259, 0.0
    %262 = vadd.xlane.f32.xlu0 %v261
    %v263 = vpop.xlane.xlu0 %262
    %v264 = vsel %vm247, %v260, 0.0
    %265 = vadd.xlane.f32.xlu0 %v264
    %v266 = vpop.xlane.xlu0 %265
    %v267 = vmul.f32 %v263, %v254
    %v268 = vmul.f32 %v266, %v254
    %v269 = vadd.f32 %v267, 1e-12
    %v270 = vadd.f32 %v268, 1e-12
    %v271 = vrsqrt.pop %v269
    %v272 = vrsqrt.pop %v270
    %v273 = vmul.f32 %v257, %v271
    %v274 = vmul.f32 %v258, %v272
    %v276 = vlaneseq
    %v277 = vshrl.u32 %v276, 7
    %v278 = vsub.s32 0, %v277
    %v279 = vrot.slane %v245, %v278
    %v281 = vmul.f32 %v273, %v279
    %v282 = vmul.f32 %v274, %v279
    %v284 = vlaneseq
    %v285 = vshrl.u32 %v284, 7
    %v286 = vsub.s32 0, %v285
    %v287 = vrot.slane %v246, %v286
    %v289 = vadd.f32 %v281, %v287
    %v290 = vadd.f32 %v282, %v287
    %v291 = vld [vmem:[#allocation5] sm:$0x1]
    %v292 = vld [vmem:[#allocation5 + $0x1] sm:$0x1]
    %v293 = vld [vmem:[#allocation5 + $0x2] sm:$0x1]
    %v294 = vld [vmem:[#allocation5 + $0x3] sm:$0x1]
    %v295 = vld [vmem:[#allocation5 + $0x4] sm:$0x1]
    %v296 = vld [vmem:[#allocation5 + $0x5] sm:$0x1]
    %v297 = vld [vmem:[#allocation5 + $0x6] sm:$0x1]
    %v298 = vld [vmem:[#allocation5 + $0x7] sm:$0x1]
    %v299 = vld [vmem:[%s4] sm:$0xf]
    %v300 = vld [vmem:[%s4 + $0x4] sm:$0xf]
    %v301 = vld [vmem:[%s4 + $0x8] sm:$0xf]
    %v302 = vld [vmem:[%s4 + $0xc] sm:$0xf]
    %v303 = vpack.c.bf16 %v290, %v289
    %v304 = vld [vmem:[#allocation10] sm:$0x1]
    %v306 = vlaneseq
    %v307 = vshrl.u32 %v306, 7
    %v308 = vsub.s32 0, %v307
    %v309 = vrot.slane %v304, %v308
    %v315 = vunpack.c.l.b16 %v299
    %v316 = vunpack.c.l.b16 %v300
    %v317 = vunpack.c.l.b16 %v301
    %v318 = vunpack.c.l.b16 %v302
    %v319 = vpack.c.b16 %v316, %v315
    %v320 = vpack.c.b16 %v318, %v317
    %v324 = vsel %vm247, %v303, 0
    %326 = vmatprep.subr.bf16.mxu0 0
    %327 = vmatpush1.bf16.msra.mxu0 %v319
    %328 = vmatprep.subr.bf16.mxu0 0
    %329 = vmatpush1.bf16.msra.mxu0 %v320
    %330 = vmatprep.subr.bf16.mxu0 0
    %331 = vmatpush1.bf16.msra.mxu0 0
    %332 = vmatprep.subr.bf16.mxu0 0
    %333 = vmatpush1.bf16.msra.mxu0 0
    %334 = vmatprep.subr.bf16.mxu0 0
    %335 = vmatpush1.bf16.msra.mxu0 0
    %336 = vmatprep.subr.bf16.mxu0 0
    %337 = vmatpush1.bf16.msra.mxu0 0
    %338 = vmatprep.subr.bf16.mxu0 0
    %339 = vmatpush1.bf16.msra.mxu0 0
    %340 = vmatprep.subr.bf16.mxu0 0
    %341 = vmatpush1.bf16.msra.mxu0 0
    %342 = vmatprep.subr.bf16.mxu0 0
    %343 = vmatpush1.bf16.msra.mxu0 0
    %344 = vmatprep.subr.bf16.mxu0 0
    %345 = vmatpush1.bf16.msra.mxu0 0
    %346 = vmatprep.subr.bf16.mxu0 0
    %347 = vmatpush1.bf16.msra.mxu0 0
    %348 = vmatprep.subr.bf16.mxu0 0
    %349 = vmatpush1.bf16.msra.mxu0 0
    %350 = vmatprep.subr.bf16.mxu0 0
    %351 = vmatpush1.bf16.msra.mxu0 0
    %352 = vmatprep.subr.bf16.mxu0 0
    %353 = vmatpush1.bf16.msra.mxu0 0
    %354 = vmatprep.subr.bf16.mxu0 0
    %355 = vmatpush1.bf16.msra.mxu0 0
    %356 = vmatprep.subr.bf16.mxu0 0
    %357 = vmatpush1.bf16.msra.mxu0 0
    %358 = vmatprep.mubr.bf16.mxu0 0
    %359 = vmatmul.mubr.bf16.gmra.mrb[0].mxu0 %v324
    %v360 = vpop.f32.mrb[0].mxu0
    %v361 = vadd.f32 %v309, %v360
    %v362 = vpop.f32.mrb[0].mxu0
    %v363 = vpop.f32.mrb[0].mxu0
    %v364 = vadd.f32 %v309, %v363
    %v365 = vpop.f32.mrb[0].mxu0
    %366 = vdwg.mxu0
    %v367 = vmul.f32 %v361, 0.35355338
    %v368 = vmul.f32 %v364, 0.35355338
    %371 = vrot.lane.b32.xlu0 %v367, 120
    %v372 = vpop.permute.xlu0 %371
    %373 = vrot.lane.b32.xlu0 %v368, 120
    %v374 = vpop.permute.xlu0 %373
    %377 = vrot.lane.b32.xlu0 %v367, 112
    %v378 = vpop.permute.xlu0 %377
    %379 = vrot.lane.b32.xlu0 %v368, 112
    %v380 = vpop.permute.xlu0 %379
    %383 = vrot.lane.b32.xlu0 %v367, 104
    %v384 = vpop.permute.xlu0 %383
    %385 = vrot.lane.b32.xlu0 %v368, 104
    %v386 = vpop.permute.xlu0 %385
    %391 = vrot.lane.b32.xlu0 %v361, 120
    %v392 = vpop.permute.xlu0 %391
    %393 = vrot.lane.b32.xlu0 %v364, 120
    %v394 = vpop.permute.xlu0 %393
    %397 = vrot.lane.b32.xlu0 %v361, 112
    %v398 = vpop.permute.xlu0 %397
    %399 = vrot.lane.b32.xlu0 %v364, 112
    %v400 = vpop.permute.xlu0 %399
    %403 = vrot.lane.b32.xlu0 %v361, 104
    %v404 = vpop.permute.xlu0 %403
    %405 = vrot.lane.b32.xlu0 %v364, 104
    %v406 = vpop.permute.xlu0 %405
    %v409 = vpack.c.bf16 %v367, %v367
    %v410 = vpack.c.bf16 %v368, %v368
    %v411 = vpack.c.bf16 %v372, %v372
    %v412 = vpack.c.bf16 %v374, %v374
    %v413 = vpack.c.bf16 %v378, %v378
    %v414 = vpack.c.bf16 %v380, %v380
    %v415 = vpack.c.bf16 %v384, %v384
    %v416 = vpack.c.bf16 %v386, %v386
    %v417 = vpack.c.bf16 %v361, %v361
    %v418 = vpack.c.bf16 %v364, %v364
    %v419 = vpack.c.bf16 %v392, %v392
    %v420 = vpack.c.bf16 %v394, %v394
    %v421 = vpack.c.bf16 %v398, %v398
    %v422 = vpack.c.bf16 %v400, %v400
    %v423 = vpack.c.bf16 %v404, %v404
    %v424 = vpack.c.bf16 %v406, %v406
    %v433 = vlaneseq
    %v434 = vshrl.u32 %v433, 7
    %v435 = vsub.s32 0, %v434
    %v436 = vrot.slane %v291, %v435
    %v437 = vlaneseq
    %v438 = vshrl.u32 %v437, 7
    %v439 = vsub.s32 0, %v438
    %v440 = vrot.slane %v292, %v439
    %v441 = vlaneseq
    %v442 = vshrl.u32 %v441, 7
    %v443 = vsub.s32 0, %v442
    %v444 = vrot.slane %v293, %v443
    %v445 = vlaneseq
    %v446 = vshrl.u32 %v445, 7
    %v447 = vsub.s32 0, %v446
    %v448 = vrot.slane %v294, %v447
    %v449 = vlaneseq
    %v450 = vshrl.u32 %v449, 7
    %v451 = vsub.s32 0, %v450
    %v452 = vrot.slane %v295, %v451
    %v453 = vlaneseq
    %v454 = vshrl.u32 %v453, 7
    %v455 = vsub.s32 0, %v454
    %v456 = vrot.slane %v296, %v455
    %v457 = vlaneseq
    %v458 = vshrl.u32 %v457, 7
    %v459 = vsub.s32 0, %v458
    %v460 = vrot.slane %v297, %v459
    %v461 = vlaneseq
    %v462 = vshrl.u32 %v461, 7
    %v463 = vsub.s32 0, %v462
    %v464 = vrot.slane %v298, %v463
    %474 = vrot.lane.b32.xlu0 %v417, 96
    %v475 = vpop.permute.xlu0 %474
    %vm476 = vcmask 64512
    %v478 = vsel %vm476, %v409, 0
    %v481 = vsel %vm476, %v475, 0
    %483 = vmatprep.subr.bf16.mxu0 0
    %484 = vmatpush1.bf16.xpose.msra.mxu0 %v481
    %485 = vmatprep.subr.bf16.mxu0 0
    %486 = vmatpush1.bf16.xpose.msra.mxu0 0
    %487 = vmatprep.subr.bf16.mxu0 0
    %488 = vmatpush1.bf16.xpose.msra.mxu0 0
    %489 = vmatprep.subr.bf16.mxu0 0
    %490 = vmatpush1.bf16.xpose.msra.mxu0 0
    %491 = vmatprep.subr.bf16.mxu0 0
    %492 = vmatpush1.bf16.xpose.msra.mxu0 0
    %493 = vmatprep.subr.bf16.mxu0 0
    %494 = vmatpush1.bf16.xpose.msra.mxu0 0
    %495 = vmatprep.subr.bf16.mxu0 0
    %496 = vmatpush1.bf16.xpose.msra.mxu0 0
    %497 = vmatprep.subr.bf16.mxu0 0
    %498 = vmatpush1.bf16.xpose.msra.mxu0 0
    %499 = vmatprep.subr.bf16.mxu0 0
    %500 = vmatpush1.bf16.xpose.msra.mxu0 0
    %501 = vmatprep.subr.bf16.mxu0 0
    %502 = vmatpush1.bf16.xpose.msra.mxu0 0
    %503 = vmatprep.subr.bf16.mxu0 0
    %504 = vmatpush1.bf16.xpose.msra.mxu0 0
    %505 = vmatprep.subr.bf16.mxu0 0
    %506 = vmatpush1.bf16.xpose.msra.mxu0 0
    %507 = vmatprep.subr.bf16.mxu0 0
    %508 = vmatpush1.bf16.xpose.msra.mxu0 0
    %509 = vmatprep.subr.bf16.mxu0 0
    %510 = vmatpush1.bf16.xpose.msra.mxu0 0
    %511 = vmatprep.subr.bf16.mxu0 0
    %512 = vmatpush1.bf16.xpose.msra.mxu0 0
    %513 = vmatprep.subr.bf16.mxu0 0
    %514 = vmatpush1.bf16.xpose.msra.mxu0 0
    %515 = vmatprep.mubr.bf16.mxu0 0
    %516 = vmatmul.mubr.bf16.gmra.mrb[0].mxu0 %v478
    %v517 = vpop.f32.mrb[0].mxu0
    %v518 = vadd.f32 %v436, %v517
    %v519 = vpop.f32.mrb[0].mxu0
    %v520 = vpop.f32.mrb[0].mxu0
    %v521 = vpop.f32.mrb[0].mxu0
    %522 = vdwg.mxu0
    %524 = vrot.lane.b32.xlu0 %v418, 96
    %v525 = vpop.permute.xlu0 %524
    %v527 = vsel %vm476, %v410, 0
    %v530 = vsel %vm476, %v525, 0
    %532 = vmatprep.subr.bf16.mxu0 0
    %533 = vmatpush1.bf16.xpose.msra.mxu0 %v530
    %534 = vmatprep.subr.bf16.mxu0 0
    %535 = vmatpush1.bf16.xpose.msra.mxu0 0
    %536 = vmatprep.subr.bf16.mxu0 0
    %537 = vmatpush1.bf16.xpose.msra.mxu0 0
    %538 = vmatprep.subr.bf16.mxu0 0
    %539 = vmatpush1.bf16.xpose.msra.mxu0 0
    %540 = vmatprep.subr.bf16.mxu0 0
    %541 = vmatpush1.bf16.xpose.msra.mxu0 0
    %542 = vmatprep.subr.bf16.mxu0 0
    %543 = vmatpush1.bf16.xpose.msra.mxu0 0
    %544 = vmatprep.subr.bf16.mxu0 0
    %545 = vmatpush1.bf16.xpose.msra.mxu0 0
    %546 = vmatprep.subr.bf16.mxu0 0
    %547 = vmatpush1.bf16.xpose.msra.mxu0 0
    %548 = vmatprep.subr.bf16.mxu0 0
    %549 = vmatpush1.bf16.xpose.msra.mxu0 0
    %550 = vmatprep.subr.bf16.mxu0 0
    %551 = vmatpush1.bf16.xpose.msra.mxu0 0
    %552 = vmatprep.subr.bf16.mxu0 0
    %553 = vmatpush1.bf16.xpose.msra.mxu0 0
    %554 = vmatprep.subr.bf16.mxu0 0
    %555 = vmatpush1.bf16.xpose.msra.mxu0 0
    %556 = vmatprep.subr.bf16.mxu0 0
    %557 = vmatpush1.bf16.xpose.msra.mxu0 0
    %558 = vmatprep.subr.bf16.mxu0 0
    %559 = vmatpush1.bf16.xpose.msra.mxu0 0
    %560 = vmatprep.subr.bf16.mxu0 0
    %561 = vmatpush1.bf16.xpose.msra.mxu0 0
    %562 = vmatprep.subr.bf16.mxu0 0
    %563 = vmatpush1.bf16.xpose.msra.mxu0 0
    %564 = vmatprep.mubr.bf16.mxu0 0
    %565 = vmatmul.mubr.bf16.gmra.mrb[0].mxu0 %v527
    %v566 = vpop.f32.mrb[0].mxu0
    %v567 = vadd.f32 %v440, %v566
    %v568 = vpop.f32.mrb[0].mxu0
    %v569 = vpop.f32.mrb[0].mxu0
    %v570 = vpop.f32.mrb[0].mxu0
    %571 = vdwg.mxu0
    %573 = vrot.lane.b32.xlu0 %v419, 96
    %v574 = vpop.permute.xlu0 %573
    %v576 = vsel %vm476, %v411, 0
    %v579 = vsel %vm476, %v574, 0
    %581 = vmatprep.subr.bf16.mxu0 0
    %582 = vmatpush1.bf16.xpose.msra.mxu0 %v579
    %583 = vmatprep.subr.bf16.mxu0 0
    %584 = vmatpush1.bf16.xpose.msra.mxu0 0
    %585 = vmatprep.subr.bf16.mxu0 0
    %586 = vmatpush1.bf16.xpose.msra.mxu0 0
    %587 = vmatprep.subr.bf16.mxu0 0
    %588 = vmatpush1.bf16.xpose.msra.mxu0 0
    %589 = vmatprep.subr.bf16.mxu0 0
    %590 = vmatpush1.bf16.xpose.msra.mxu0 0
    %591 = vmatprep.subr.bf16.mxu0 0
    %592 = vmatpush1.bf16.xpose.msra.mxu0 0
    %593 = vmatprep.subr.bf16.mxu0 0
    %594 = vmatpush1.bf16.xpose.msra.mxu0 0
    %595 = vmatprep.subr.bf16.mxu0 0
    %596 = vmatpush1.bf16.xpose.msra.mxu0 0
    %597 = vmatprep.subr.bf16.mxu0 0
    %598 = vmatpush1.bf16.xpose.msra.mxu0 0
    %599 = vmatprep.subr.bf16.mxu0 0
    %600 = vmatpush1.bf16.xpose.msra.mxu0 0
    %601 = vmatprep.subr.bf16.mxu0 0
    %602 = vmatpush1.bf16.xpose.msra.mxu0 0
    %603 = vmatprep.subr.bf16.mxu0 0
    %604 = vmatpush1.bf16.xpose.msra.mxu0 0
    %605 = vmatprep.subr.bf16.mxu0 0
    %606 = vmatpush1.bf16.xpose.msra.mxu0 0
    %607 = vmatprep.subr.bf16.mxu0 0
    %608 = vmatpush1.bf16.xpose.msra.mxu0 0
    %609 = vmatprep.subr.bf16.mxu0 0
    %610 = vmatpush1.bf16.xpose.msra.mxu0 0
    %611 = vmatprep.subr.bf16.mxu0 0
    %612 = vmatpush1.bf16.xpose.msra.mxu0 0
    %613 = vmatprep.mubr.bf16.mxu0 0
    %614 = vmatmul.mubr.bf16.gmra.mrb[0].mxu0 %v576
    %v615 = vpop.f32.mrb[0].mxu0
    %v616 = vadd.f32 %v444, %v615
    %v617 = vpop.f32.mrb[0].mxu0
    %v618 = vpop.f32.mrb[0].mxu0
    %v619 = vpop.f32.mrb[0].mxu0
    %620 = vdwg.mxu0
    %622 = vrot.lane.b32.xlu0 %v420, 96
    %v623 = vpop.permute.xlu0 %622
    %v625 = vsel %vm476, %v412, 0
    %v628 = vsel %vm476, %v623, 0
    %630 = vmatprep.subr.bf16.mxu0 0
    %631 = vmatpush1.bf16.xpose.msra.mxu0 %v628
    %632 = vmatprep.subr.bf16.mxu0 0
    %633 = vmatpush1.bf16.xpose.msra.mxu0 0
    %634 = vmatprep.subr.bf16.mxu0 0
    %635 = vmatpush1.bf16.xpose.msra.mxu0 0
    %636 = vmatprep.subr.bf16.mxu0 0
    %637 = vmatpush1.bf16.xpose.msra.mxu0 0
    %638 = vmatprep.subr.bf16.mxu0 0
    %639 = vmatpush1.bf16.xpose.msra.mxu0 0
    %640 = vmatprep.subr.bf16.mxu0 0
    %641 = vmatpush1.bf16.xpose.msra.mxu0 0
    %642 = vmatprep.subr.bf16.mxu0 0
    %643 = vmatpush1.bf16.xpose.msra.mxu0 0
    %644 = vmatprep.subr.bf16.mxu0 0
    %645 = vmatpush1.bf16.xpose.msra.mxu0 0
    %646 = vmatprep.subr.bf16.mxu0 0
    %647 = vmatpush1.bf16.xpose.msra.mxu0 0
    %648 = vmatprep.subr.bf16.mxu0 0
    %649 = vmatpush1.bf16.xpose.msra.mxu0 0
    %650 = vmatprep.subr.bf16.mxu0 0
    %651 = vmatpush1.bf16.xpose.msra.mxu0 0
    %652 = vmatprep.subr.bf16.mxu0 0
    %653 = vmatpush1.bf16.xpose.msra.mxu0 0
    %654 = vmatprep.subr.bf16.mxu0 0
    %655 = vmatpush1.bf16.xpose.msra.mxu0 0
    %656 = vmatprep.subr.bf16.mxu0 0
    %657 = vmatpush1.bf16.xpose.msra.mxu0 0
    %658 = vmatprep.subr.bf16.mxu0 0
    %659 = vmatpush1.bf16.xpose.msra.mxu0 0
    %660 = vmatprep.subr.bf16.mxu0 0
    %661 = vmatpush1.bf16.xpose.msra.mxu0 0
    %662 = vmatprep.mubr.bf16.mxu0 0
    %663 = vmatmul.mubr.bf16.gmra.mrb[0].mxu0 %v625
    %v664 = vpop.f32.mrb[0].mxu0
    %v665 = vadd.f32 %v448, %v664
    %v666 = vpop.f32.mrb[0].mxu0
    %v667 = vpop.f32.mrb[0].mxu0
    %v668 = vpop.f32.mrb[0].mxu0
    %669 = vdwg.mxu0
    %671 = vrot.lane.b32.xlu0 %v421, 96
    %v672 = vpop.permute.xlu0 %671
    %v674 = vsel %vm476, %v413, 0
    %v677 = vsel %vm476, %v672, 0
    %679 = vmatprep.subr.bf16.mxu0 0
    %680 = vmatpush1.bf16.xpose.msra.mxu0 %v677
    %681 = vmatprep.subr.bf16.mxu0 0
    %682 = vmatpush1.bf16.xpose.msra.mxu0 0
    %683 = vmatprep.subr.bf16.mxu0 0
    %684 = vmatpush1.bf16.xpose.msra.mxu0 0
    %685 = vmatprep.subr.bf16.mxu0 0
    %686 = vmatpush1.bf16.xpose.msra.mxu0 0
    %687 = vmatprep.subr.bf16.mxu0 0
    %688 = vmatpush1.bf16.xpose.msra.mxu0 0
    %689 = vmatprep.subr.bf16.mxu0 0
    %690 = vmatpush1.bf16.xpose.msra.mxu0 0
    %691 = vmatprep.subr.bf16.mxu0 0
    %692 = vmatpush1.bf16.xpose.msra.mxu0 0
    %693 = vmatprep.subr.bf16.mxu0 0
    %694 = vmatpush1.bf16.xpose.msra.mxu0 0
    %695 = vmatprep.subr.bf16.mxu0 0
    %696 = vmatpush1.bf16.xpose.msra.mxu0 0
    %697 = vmatprep.subr.bf16.mxu0 0
    %698 = vmatpush1.bf16.xpose.msra.mxu0 0
    %699 = vmatprep.subr.bf16.mxu0 0
    %700 = vmatpush1.bf16.xpose.msra.mxu0 0
    %701 = vmatprep.subr.bf16.mxu0 0
    %702 = vmatpush1.bf16.xpose.msra.mxu0 0
    %703 = vmatprep.subr.bf16.mxu0 0
    %704 = vmatpush1.bf16.xpose.msra.mxu0 0
    %705 = vmatprep.subr.bf16.mxu0 0
    %706 = vmatpush1.bf16.xpose.msra.mxu0 0
    %707 = vmatprep.subr.bf16.mxu0 0
    %708 = vmatpush1.bf16.xpose.msra.mxu0 0
    %709 = vmatprep.subr.bf16.mxu0 0
    %710 = vmatpush1.bf16.xpose.msra.mxu0 0
    %711 = vmatprep.mubr.bf16.mxu0 0
    %712 = vmatmul.mubr.bf16.gmra.mrb[0].mxu0 %v674
    %v713 = vpop.f32.mrb[0].mxu0
    %v714 = vadd.f32 %v452, %v713
    %v715 = vpop.f32.mrb[0].mxu0
    %v716 = vpop.f32.mrb[0].mxu0
    %v717 = vpop.f32.mrb[0].mxu0
    %718 = vdwg.mxu0
    %720 = vrot.lane.b32.xlu0 %v422, 96
    %v721 = vpop.permute.xlu0 %720
    %v723 = vsel %vm476, %v414, 0
    %v726 = vsel %vm476, %v721, 0
    %728 = vmatprep.subr.bf16.mxu0 0
    %729 = vmatpush1.bf16.xpose.msra.mxu0 %v726
    %730 = vmatprep.subr.bf16.mxu0 0
    %731 = vmatpush1.bf16.xpose.msra.mxu0 0
    %732 = vmatprep.subr.bf16.mxu0 0
    %733 = vmatpush1.bf16.xpose.msra.mxu0 0
    %734 = vmatprep.subr.bf16.mxu0 0
    %735 = vmatpush1.bf16.xpose.msra.mxu0 0
    %736 = vmatprep.subr.bf16.mxu0 0
    %737 = vmatpush1.bf16.xpose.msra.mxu0 0
    %738 = vmatprep.subr.bf16.mxu0 0
    %739 = vmatpush1.bf16.xpose.msra.mxu0 0
    %740 = vmatprep.subr.bf16.mxu0 0
    %741 = vmatpush1.bf16.xpose.msra.mxu0 0
    %742 = vmatprep.subr.bf16.mxu0 0
    %743 = vmatpush1.bf16.xpose.msra.mxu0 0
    %744 = vmatprep.subr.bf16.mxu0 0
    %745 = vmatpush1.bf16.xpose.msra.mxu0 0
    %746 = vmatprep.subr.bf16.mxu0 0
    %747 = vmatpush1.bf16.xpose.msra.mxu0 0
    %748 = vmatprep.subr.bf16.mxu0 0
    %749 = vmatpush1.bf16.xpose.msra.mxu0 0
    %750 = vmatprep.subr.bf16.mxu0 0
    %751 = vmatpush1.bf16.xpose.msra.mxu0 0
    %752 = vmatprep.subr.bf16.mxu0 0
    %753 = vmatpush1.bf16.xpose.msra.mxu0 0
    %754 = vmatprep.subr.bf16.mxu0 0
    %755 = vmatpush1.bf16.xpose.msra.mxu0 0
    %756 = vmatprep.subr.bf16.mxu0 0
    %757 = vmatpush1.bf16.xpose.msra.mxu0 0
    %758 = vmatprep.subr.bf16.mxu0 0
    %759 = vmatpush1.bf16.xpose.msra.mxu0 0
    %760 = vmatprep.mubr.bf16.mxu0 0
    %761 = vmatmul.mubr.bf16.gmra.mrb[0].mxu0 %v723
    %v762 = vpop.f32.mrb[0].mxu0
    %v763 = vadd.f32 %v456, %v762
    %v764 = vpop.f32.mrb[0].mxu0
    %v765 = vpop.f32.mrb[0].mxu0
    %v766 = vpop.f32.mrb[0].mxu0
    %767 = vdwg.mxu0
    %769 = vrot.lane.b32.xlu0 %v423, 96
    %v770 = vpop.permute.xlu0 %769
    %v772 = vsel %vm476, %v415, 0
    %v775 = vsel %vm476, %v770, 0
    %777 = vmatprep.subr.bf16.mxu0 0
    %778 = vmatpush1.bf16.xpose.msra.mxu0 %v775
    %779 = vmatprep.subr.bf16.mxu0 0
    %780 = vmatpush1.bf16.xpose.msra.mxu0 0
    %781 = vmatprep.subr.bf16.mxu0 0
    %782 = vmatpush1.bf16.xpose.msra.mxu0 0
    %783 = vmatprep.subr.bf16.mxu0 0
    %784 = vmatpush1.bf16.xpose.msra.mxu0 0
    %785 = vmatprep.subr.bf16.mxu0 0
    %786 = vmatpush1.bf16.xpose.msra.mxu0 0
    %787 = vmatprep.subr.bf16.mxu0 0
    %788 = vmatpush1.bf16.xpose.msra.mxu0 0
    %789 = vmatprep.subr.bf16.mxu0 0
    %790 = vmatpush1.bf16.xpose.msra.mxu0 0
    %791 = vmatprep.subr.bf16.mxu0 0
    %792 = vmatpush1.bf16.xpose.msra.mxu0 0
    %793 = vmatprep.subr.bf16.mxu0 0
    %794 = vmatpush1.bf16.xpose.msra.mxu0 0
    %795 = vmatprep.subr.bf16.mxu0 0
    %796 = vmatpush1.bf16.xpose.msra.mxu0 0
    %797 = vmatprep.subr.bf16.mxu0 0
    %798 = vmatpush1.bf16.xpose.msra.mxu0 0
    %799 = vmatprep.subr.bf16.mxu0 0
    %800 = vmatpush1.bf16.xpose.msra.mxu0 0
    %801 = vmatprep.subr.bf16.mxu0 0
    %802 = vmatpush1.bf16.xpose.msra.mxu0 0
    %803 = vmatprep.subr.bf16.mxu0 0
    %804 = vmatpush1.bf16.xpose.msra.mxu0 0
    %805 = vmatprep.subr.bf16.mxu0 0
    %806 = vmatpush1.bf16.xpose.msra.mxu0 0
    %807 = vmatprep.subr.bf16.mxu0 0
    %808 = vmatpush1.bf16.xpose.msra.mxu0 0
    %809 = vmatprep.mubr.bf16.mxu0 0
    %810 = vmatmul.mubr.bf16.gmra.mrb[0].mxu0 %v772
    %v811 = vpop.f32.mrb[0].mxu0
    %v812 = vadd.f32 %v460, %v811
    %v813 = vpop.f32.mrb[0].mxu0
    %v814 = vpop.f32.mrb[0].mxu0
    %v815 = vpop.f32.mrb[0].mxu0
    %816 = vdwg.mxu0
    %818 = vrot.lane.b32.xlu0 %v424, 96
    %v819 = vpop.permute.xlu0 %818
    %v821 = vsel %vm476, %v416, 0
    %v824 = vsel %vm476, %v819, 0
    %826 = vmatprep.subr.bf16.mxu0 0
    %827 = vmatpush1.bf16.xpose.msra.mxu0 %v824
    %828 = vmatprep.subr.bf16.mxu0 0
    %829 = vmatpush1.bf16.xpose.msra.mxu0 0
    %830 = vmatprep.subr.bf16.mxu0 0
    %831 = vmatpush1.bf16.xpose.msra.mxu0 0
    %832 = vmatprep.subr.bf16.mxu0 0
    %833 = vmatpush1.bf16.xpose.msra.mxu0 0
    %834 = vmatprep.subr.bf16.mxu0 0
    %835 = vmatpush1.bf16.xpose.msra.mxu0 0
    %836 = vmatprep.subr.bf16.mxu0 0
    %837 = vmatpush1.bf16.xpose.msra.mxu0 0
    %838 = vmatprep.subr.bf16.mxu0 0
    %839 = vmatpush1.bf16.xpose.msra.mxu0 0
    %840 = vmatprep.subr.bf16.mxu0 0
    %841 = vmatpush1.bf16.xpose.msra.mxu0 0
    %842 = vmatprep.subr.bf16.mxu0 0
    %843 = vmatpush1.bf16.xpose.msra.mxu0 0
    %844 = vmatprep.subr.bf16.mxu0 0
    %845 = vmatpush1.bf16.xpose.msra.mxu0 0
    %846 = vmatprep.subr.bf16.mxu0 0
    %847 = vmatpush1.bf16.xpose.msra.mxu0 0
    %848 = vmatprep.subr.bf16.mxu0 0
    %849 = vmatpush1.bf16.xpose.msra.mxu0 0
    %850 = vmatprep.subr.bf16.mxu0 0
    %851 = vmatpush1.bf16.xpose.msra.mxu0 0
    %852 = vmatprep.subr.bf16.mxu0 0
    %853 = vmatpush1.bf16.xpose.msra.mxu0 0
    %854 = vmatprep.subr.bf16.mxu0 0
    %855 = vmatpush1.bf16.xpose.msra.mxu0 0
    %856 = vmatprep.subr.bf16.mxu0 0
    %857 = vmatpush1.bf16.xpose.msra.mxu0 0
    %858 = vmatprep.mubr.bf16.mxu0 0
    %859 = vmatmul.mubr.bf16.gmra.mrb[0].mxu0 %v821
    %v860 = vpop.f32.mrb[0].mxu0
    %v861 = vadd.f32 %v464, %v860
    %v862 = vpop.f32.mrb[0].mxu0
    %v863 = vpop.f32.mrb[0].mxu0
    %v864 = vpop.f32.mrb[0].mxu0
    %865 = vdwg.mxu0
    %v866 = vsel %vm476, %v518, -inf
    %867 = vmax.xlane.f32.xlu0 %v866
    %v868 = vpop.xlane.xlu0 %867
    %v869 = vsel %vm476, %v567, -inf
    %870 = vmax.xlane.f32.xlu0 %v869
    %v871 = vpop.xlane.xlu0 %870
    %v872 = vsel %vm476, %v616, -inf
    %873 = vmax.xlane.f32.xlu0 %v872
    %v874 = vpop.xlane.xlu0 %873
    %v875 = vsel %vm476, %v665, -inf
    %876 = vmax.xlane.f32.xlu0 %v875
    %v877 = vpop.xlane.xlu0 %876
    %v878 = vsel %vm476, %v714, -inf
    %879 = vmax.xlane.f32.xlu0 %v878
    %v880 = vpop.xlane.xlu0 %879
    %v881 = vsel %vm476, %v763, -inf
    %882 = vmax.xlane.f32.xlu0 %v881
    %v883 = vpop.xlane.xlu0 %882
    %v884 = vsel %vm476, %v812, -inf
    %885 = vmax.xlane.f32.xlu0 %v884
    %v886 = vpop.xlane.xlu0 %885
    %v887 = vsel %vm476, %v861, -inf
    %888 = vmax.xlane.f32.xlu0 %v887
    %v889 = vpop.xlane.xlu0 %888
    %v890 = vsub.f32 %v518, %v868
    %v891 = vsub.f32 %v567, %v871
    %v892 = vsub.f32 %v616, %v874
    %v893 = vsub.f32 %v665, %v877
    %v894 = vsub.f32 %v714, %v880
    %v895 = vsub.f32 %v763, %v883
    %v896 = vsub.f32 %v812, %v886
    %v897 = vsub.f32 %v861, %v889
    %v898 = vmul.f32 %v890, 1.442695
    %v899 = vpow.pop %v898
    %v900 = vmul.f32 %v891, 1.442695
    %v901 = vpow.pop %v900
    %v902 = vmul.f32 %v892, 1.442695
    %v903 = vpow.pop %v902
    %v904 = vmul.f32 %v893, 1.442695
    %v905 = vpow.pop %v904
    %v906 = vmul.f32 %v894, 1.442695
    %v907 = vpow.pop %v906
    %v908 = vmul.f32 %v895, 1.442695
    %v909 = vpow.pop %v908
    %v910 = vmul.f32 %v896, 1.442695
    %v911 = vpow.pop %v910
    %v912 = vmul.f32 %v897, 1.442695
    %v913 = vpow.pop %v912
    %v914 = vsel %vm476, %v899, 0.0
    %915 = vadd.xlane.f32.xlu0 %v914
    %v916 = vpop.xlane.xlu0 %915
    %v917 = vsel %vm476, %v901, 0.0
    %918 = vadd.xlane.f32.xlu0 %v917
    %v919 = vpop.xlane.xlu0 %918
    %v920 = vsel %vm476, %v903, 0.0
    %921 = vadd.xlane.f32.xlu0 %v920
    %v922 = vpop.xlane.xlu0 %921
    %v923 = vsel %vm476, %v905, 0.0
    %924 = vadd.xlane.f32.xlu0 %v923
    %v925 = vpop.xlane.xlu0 %924
    %v926 = vsel %vm476, %v907, 0.0
    %927 = vadd.xlane.f32.xlu0 %v926
    %v928 = vpop.xlane.xlu0 %927
    %v929 = vsel %vm476, %v909, 0.0
    %930 = vadd.xlane.f32.xlu0 %v929
    %v931 = vpop.xlane.xlu0 %930
    %v932 = vsel %vm476, %v911, 0.0
    %933 = vadd.xlane.f32.xlu0 %v932
    %v934 = vpop.xlane.xlu0 %933
    %v935 = vsel %vm476, %v913, 0.0
    %936 = vadd.xlane.f32.xlu0 %v935
    %v937 = vpop.xlane.xlu0 %936
    %v938 = vrcp.pop %v916
    %v939 = vrcp.pop %v919
    %v940 = vrcp.pop %v922
    %v941 = vrcp.pop %v925
    %v942 = vrcp.pop %v928
    %v943 = vrcp.pop %v931
    %v944 = vrcp.pop %v934
    %v945 = vrcp.pop %v937
    %v946 = vmul.f32 %v899, %v938
    %v947 = vmul.f32 %v901, %v939
    %v948 = vmul.f32 %v903, %v940
    %v949 = vmul.f32 %v905, %v941
    %v950 = vmul.f32 %v907, %v942
    %v951 = vmul.f32 %v909, %v943
    %v952 = vmul.f32 %v911, %v944
    %v953 = vmul.f32 %v913, %v945
    %v954 = vpack.c.bf16 %v946, %v946
    %v955 = vpack.c.bf16 %v947, %v947
    %v956 = vpack.c.bf16 %v948, %v948
    %v957 = vpack.c.bf16 %v949, %v949
    %v958 = vpack.c.bf16 %v950, %v950
    %v959 = vpack.c.bf16 %v951, %v951
    %v960 = vpack.c.bf16 %v952, %v952
    %v961 = vpack.c.bf16 %v953, %v953
    %962 = vrot.lane.b32.xlu0 %v417, 64
    %v963 = vpop.permute.xlu0 %962
    %v965 = vsel %vm476, %v954, 0
    %vm967 = vcmask 1043456
    %v969 = vsel %vm967, %v963, 0
    %971 = vmatprep.subr.bf16.mxu0 0
    %972 = vmatpush1.bf16.msra.mxu0 %v969
    %973 = vmatprep.subr.bf16.mxu0 0
    %974 = vmatpush1.bf16.msra.mxu0 0
    %975 = vmatprep.subr.bf16.mxu0 0
    %976 = vmatpush1.bf16.msra.mxu0 0
    %977 = vmatprep.subr.bf16.mxu0 0
    %978 = vmatpush1.bf16.msra.mxu0 0
    %979 = vmatprep.subr.bf16.mxu0 0
    %980 = vmatpush1.bf16.msra.mxu0 0
    %981 = vmatprep.subr.bf16.mxu0 0
    %982 = vmatpush1.bf16.msra.mxu0 0
    %983 = vmatprep.subr.bf16.mxu0 0
    %984 = vmatpush1.bf16.msra.mxu0 0
    %985 = vmatprep.subr.bf16.mxu0 0
    %986 = vmatpush1.bf16.msra.mxu0 0
    %987 = vmatprep.subr.bf16.mxu0 0
    %988 = vmatpush1.bf16.msra.mxu0 0
    %989 = vmatprep.subr.bf16.mxu0 0
    %990 = vmatpush1.bf16.msra.mxu0 0
    %991 = vmatprep.subr.bf16.mxu0 0
    %992 = vmatpush1.bf16.msra.mxu0 0
    %993 = vmatprep.subr.bf16.mxu0 0
    %994 = vmatpush1.bf16.msra.mxu0 0
    %995 = vmatprep.subr.bf16.mxu0 0
    %996 = vmatpush1.bf16.msra.mxu0 0
    %997 = vmatprep.subr.bf16.mxu0 0
    %998 = vmatpush1.bf16.msra.mxu0 0
    %999 = vmatprep.subr.bf16.mxu0 0
    %1000 = vmatpush1.bf16.msra.mxu0 0
    %1001 = vmatprep.subr.bf16.mxu0 0
    %1002 = vmatpush1.bf16.msra.mxu0 0
    %1003 = vmatprep.mubr.bf16.mxu0 0
    %1004 = vmatmul.mubr.bf16.gmra.mrb[0].mxu0 %v965
    %v1005 = vpop.f32.mrb[0].mxu0
    %v1006 = vadd.f32 0.0, %v1005
    %v1007 = vpop.f32.mrb[0].mxu0
    %v1008 = vpop.f32.mrb[0].mxu0
    %v1009 = vpop.f32.mrb[0].mxu0
    %1010 = vdwg.mxu0
    %1011 = vrot.lane.b32.xlu0 %v418, 64
    %v1012 = vpop.permute.xlu0 %1011
    %v1014 = vsel %vm476, %v955, 0
    %v1017 = vsel %vm967, %v1012, 0
    %1019 = vmatprep.subr.bf16.mxu0 0
    %1020 = vmatpush1.bf16.msra.mxu0 %v1017
    %1021 = vmatprep.subr.bf16.mxu0 0
    %1022 = vmatpush1.bf16.msra.mxu0 0
    %1023 = vmatprep.subr.bf16.mxu0 0
    %1024 = vmatpush1.bf16.msra.mxu0 0
    %1025 = vmatprep.subr.bf16.mxu0 0
    %1026 = vmatpush1.bf16.msra.mxu0 0
    %1027 = vmatprep.subr.bf16.mxu0 0
    %1028 = vmatpush1.bf16.msra.mxu0 0
    %1029 = vmatprep.subr.bf16.mxu0 0
    %1030 = vmatpush1.bf16.msra.mxu0 0
    %1031 = vmatprep.subr.bf16.mxu0 0
    %1032 = vmatpush1.bf16.msra.mxu0 0
    %1033 = vmatprep.subr.bf16.mxu0 0
    %1034 = vmatpush1.bf16.msra.mxu0 0
    %1035 = vmatprep.subr.bf16.mxu0 0
    %1036 = vmatpush1.bf16.msra.mxu0 0
    %1037 = vmatprep.subr.bf16.mxu0 0
    %1038 = vmatpush1.bf16.msra.mxu0 0
    %1039 = vmatprep.subr.bf16.mxu0 0
    %1040 = vmatpush1.bf16.msra.mxu0 0
    %1041 = vmatprep.subr.bf16.mxu0 0
    %1042 = vmatpush1.bf16.msra.mxu0 0
    %1043 = vmatprep.subr.bf16.mxu0 0
    %1044 = vmatpush1.bf16.msra.mxu0 0
    %1045 = vmatprep.subr.bf16.mxu0 0
    %1046 = vmatpush1.bf16.msra.mxu0 0
    %1047 = vmatprep.subr.bf16.mxu0 0
    %1048 = vmatpush1.bf16.msra.mxu0 0
    %1049 = vmatprep.subr.bf16.mxu0 0
    %1050 = vmatpush1.bf16.msra.mxu0 0
    %1051 = vmatprep.mubr.bf16.mxu0 0
    %1052 = vmatmul.mubr.bf16.gmra.mrb[0].mxu0 %v1014
    %v1053 = vpop.f32.mrb[0].mxu0
    %v1054 = vadd.f32 0.0, %v1053
    %v1055 = vpop.f32.mrb[0].mxu0
    %v1056 = vpop.f32.mrb[0].mxu0
    %v1057 = vpop.f32.mrb[0].mxu0
    %1058 = vdwg.mxu0
    %1059 = vrot.lane.b32.xlu0 %v419, 64
    %v1060 = vpop.permute.xlu0 %1059
    %v1062 = vsel %vm476, %v956, 0
    %v1065 = vsel %vm967, %v1060, 0
    %1067 = vmatprep.subr.bf16.mxu0 0
    %1068 = vmatpush1.bf16.msra.mxu0 %v1065
    %1069 = vmatprep.subr.bf16.mxu0 0
    %1070 = vmatpush1.bf16.msra.mxu0 0
    %1071 = vmatprep.subr.bf16.mxu0 0
    %1072 = vmatpush1.bf16.msra.mxu0 0
    %1073 = vmatprep.subr.bf16.mxu0 0
    %1074 = vmatpush1.bf16.msra.mxu0 0
    %1075 = vmatprep.subr.bf16.mxu0 0
    %1076 = vmatpush1.bf16.msra.mxu0 0
    %1077 = vmatprep.subr.bf16.mxu0 0
    %1078 = vmatpush1.bf16.msra.mxu0 0
    %1079 = vmatprep.subr.bf16.mxu0 0
    %1080 = vmatpush1.bf16.msra.mxu0 0
    %1081 = vmatprep.subr.bf16.mxu0 0
    %1082 = vmatpush1.bf16.msra.mxu0 0
    %1083 = vmatprep.subr.bf16.mxu0 0
    %1084 = vmatpush1.bf16.msra.mxu0 0
    %1085 = vmatprep.subr.bf16.mxu0 0
    %1086 = vmatpush1.bf16.msra.mxu0 0
    %1087 = vmatprep.subr.bf16.mxu0 0
    %1088 = vmatpush1.bf16.msra.mxu0 0
    %1089 = vmatprep.subr.bf16.mxu0 0
    %1090 = vmatpush1.bf16.msra.mxu0 0
    %1091 = vmatprep.subr.bf16.mxu0 0
    %1092 = vmatpush1.bf16.msra.mxu0 0
    %1093 = vmatprep.subr.bf16.mxu0 0
    %1094 = vmatpush1.bf16.msra.mxu0 0
    %1095 = vmatprep.subr.bf16.mxu0 0
    %1096 = vmatpush1.bf16.msra.mxu0 0
    %1097 = vmatprep.subr.bf16.mxu0 0
    %1098 = vmatpush1.bf16.msra.mxu0 0
    %1099 = vmatprep.mubr.bf16.mxu0 0
    %1100 = vmatmul.mubr.bf16.gmra.mrb[0].mxu0 %v1062
    %v1101 = vpop.f32.mrb[0].mxu0
    %v1102 = vadd.f32 0.0, %v1101
    %v1103 = vpop.f32.mrb[0].mxu0
    %v1104 = vpop.f32.mrb[0].mxu0
    %v1105 = vpop.f32.mrb[0].mxu0
    %1106 = vdwg.mxu0
    %1107 = vrot.lane.b32.xlu0 %v420, 64
    %v1108 = vpop.permute.xlu0 %1107
    %v1110 = vsel %vm476, %v957, 0
    %v1113 = vsel %vm967, %v1108, 0
    %1115 = vmatprep.subr.bf16.mxu0 0
    %1116 = vmatpush1.bf16.msra.mxu0 %v1113
    %1117 = vmatprep.subr.bf16.mxu0 0
    %1118 = vmatpush1.bf16.msra.mxu0 0
    %1119 = vmatprep.subr.bf16.mxu0 0
    %1120 = vmatpush1.bf16.msra.mxu0 0
    %1121 = vmatprep.subr.bf16.mxu0 0
    %1122 = vmatpush1.bf16.msra.mxu0 0
    %1123 = vmatprep.subr.bf16.mxu0 0
    %1124 = vmatpush1.bf16.msra.mxu0 0
    %1125 = vmatprep.subr.bf16.mxu0 0
    %1126 = vmatpush1.bf16.msra.mxu0 0
    %1127 = vmatprep.subr.bf16.mxu0 0
    %1128 = vmatpush1.bf16.msra.mxu0 0
    %1129 = vmatprep.subr.bf16.mxu0 0
    %1130 = vmatpush1.bf16.msra.mxu0 0
    %1131 = vmatprep.subr.bf16.mxu0 0
    %1132 = vmatpush1.bf16.msra.mxu0 0
    %1133 = vmatprep.subr.bf16.mxu0 0
    %1134 = vmatpush1.bf16.msra.mxu0 0
    %1135 = vmatprep.subr.bf16.mxu0 0
    %1136 = vmatpush1.bf16.msra.mxu0 0
    %1137 = vmatprep.subr.bf16.mxu0 0
    %1138 = vmatpush1.bf16.msra.mxu0 0
    %1139 = vmatprep.subr.bf16.mxu0 0
    %1140 = vmatpush1.bf16.msra.mxu0 0
    %1141 = vmatprep.subr.bf16.mxu0 0
    %1142 = vmatpush1.bf16.msra.mxu0 0
    %1143 = vmatprep.subr.bf16.mxu0 0
    %1144 = vmatpush1.bf16.msra.mxu0 0
    %1145 = vmatprep.subr.bf16.mxu0 0
    %1146 = vmatpush1.bf16.msra.mxu0 0
    %1147 = vmatprep.mubr.bf16.mxu0 0
    %1148 = vmatmul.mubr.bf16.gmra.mrb[0].mxu0 %v1110
    %v1149 = vpop.f32.mrb[0].mxu0
    %v1150 = vadd.f32 0.0, %v1149
    %v1151 = vpop.f32.mrb[0].mxu0
    %v1152 = vpop.f32.mrb[0].mxu0
    %v1153 = vpop.f32.mrb[0].mxu0
    %1154 = vdwg.mxu0
    %1155 = vrot.lane.b32.xlu0 %v421, 64
    %v1156 = vpop.permute.xlu0 %1155
    %v1158 = vsel %vm476, %v958, 0
    %v1161 = vsel %vm967, %v1156, 0
    %1163 = vmatprep.subr.bf16.mxu0 0
    %1164 = vmatpush1.bf16.msra.mxu0 %v1161
    %1165 = vmatprep.subr.bf16.mxu0 0
    %1166 = vmatpush1.bf16.msra.mxu0 0
    %1167 = vmatprep.subr.bf16.mxu0 0
    %1168 = vmatpush1.bf16.msra.mxu0 0
    %1169 = vmatprep.subr.bf16.mxu0 0
    %1170 = vmatpush1.bf16.msra.mxu0 0
    %1171 = vmatprep.subr.bf16.mxu0 0
    %1172 = vmatpush1.bf16.msra.mxu0 0
    %1173 = vmatprep.subr.bf16.mxu0 0
    %1174 = vmatpush1.bf16.msra.mxu0 0
    %1175 = vmatprep.subr.bf16.mxu0 0
    %1176 = vmatpush1.bf16.msra.mxu0 0
    %1177 = vmatprep.subr.bf16.mxu0 0
    %1178 = vmatpush1.bf16.msra.mxu0 0
    %1179 = vmatprep.subr.bf16.mxu0 0
    %1180 = vmatpush1.bf16.msra.mxu0 0
    %1181 = vmatprep.subr.bf16.mxu0 0
    %1182 = vmatpush1.bf16.msra.mxu0 0
    %1183 = vmatprep.subr.bf16.mxu0 0
    %1184 = vmatpush1.bf16.msra.mxu0 0
    %1185 = vmatprep.subr.bf16.mxu0 0
    %1186 = vmatpush1.bf16.msra.mxu0 0
    %1187 = vmatprep.subr.bf16.mxu0 0
    %1188 = vmatpush1.bf16.msra.mxu0 0
    %1189 = vmatprep.subr.bf16.mxu0 0
    %1190 = vmatpush1.bf16.msra.mxu0 0
    %1191 = vmatprep.subr.bf16.mxu0 0
    %1192 = vmatpush1.bf16.msra.mxu0 0
    %1193 = vmatprep.subr.bf16.mxu0 0
    %1194 = vmatpush1.bf16.msra.mxu0 0
    %1195 = vmatprep.mubr.bf16.mxu0 0
    %1196 = vmatmul.mubr.bf16.gmra.mrb[0].mxu0 %v1158
    %v1197 = vpop.f32.mrb[0].mxu0
    %v1198 = vadd.f32 0.0, %v1197
    %v1199 = vpop.f32.mrb[0].mxu0
    %v1200 = vpop.f32.mrb[0].mxu0
    %v1201 = vpop.f32.mrb[0].mxu0
    %1202 = vdwg.mxu0
    %1203 = vrot.lane.b32.xlu0 %v422, 64
    %v1204 = vpop.permute.xlu0 %1203
    %v1206 = vsel %vm476, %v959, 0
    %v1209 = vsel %vm967, %v1204, 0
    %1211 = vmatprep.subr.bf16.mxu0 0
    %1212 = vmatpush1.bf16.msra.mxu0 %v1209
    %1213 = vmatprep.subr.bf16.mxu0 0
    %1214 = vmatpush1.bf16.msra.mxu0 0
    %1215 = vmatprep.subr.bf16.mxu0 0
    %1216 = vmatpush1.bf16.msra.mxu0 0
    %1217 = vmatprep.subr.bf16.mxu0 0
    %1218 = vmatpush1.bf16.msra.mxu0 0
    %1219 = vmatprep.subr.bf16.mxu0 0
    %1220 = vmatpush1.bf16.msra.mxu0 0
    %1221 = vmatprep.subr.bf16.mxu0 0
    %1222 = vmatpush1.bf16.msra.mxu0 0
    %1223 = vmatprep.subr.bf16.mxu0 0
    %1224 = vmatpush1.bf16.msra.mxu0 0
    %1225 = vmatprep.subr.bf16.mxu0 0
    %1226 = vmatpush1.bf16.msra.mxu0 0
    %1227 = vmatprep.subr.bf16.mxu0 0
    %1228 = vmatpush1.bf16.msra.mxu0 0
    %1229 = vmatprep.subr.bf16.mxu0 0
    %1230 = vmatpush1.bf16.msra.mxu0 0
    %1231 = vmatprep.subr.bf16.mxu0 0
    %1232 = vmatpush1.bf16.msra.mxu0 0
    %1233 = vmatprep.subr.bf16.mxu0 0
    %1234 = vmatpush1.bf16.msra.mxu0 0
    %1235 = vmatprep.subr.bf16.mxu0 0
    %1236 = vmatpush1.bf16.msra.mxu0 0
    %1237 = vmatprep.subr.bf16.mxu0 0
    %1238 = vmatpush1.bf16.msra.mxu0 0
    %1239 = vmatprep.subr.bf16.mxu0 0
    %1240 = vmatpush1.bf16.msra.mxu0 0
    %1241 = vmatprep.subr.bf16.mxu0 0
    %1242 = vmatpush1.bf16.msra.mxu0 0
    %1243 = vmatprep.mubr.bf16.mxu0 0
    %1244 = vmatmul.mubr.bf16.gmra.mrb[0].mxu0 %v1206
    %v1245 = vpop.f32.mrb[0].mxu0
    %v1246 = vadd.f32 0.0, %v1245
    %v1247 = vpop.f32.mrb[0].mxu0
    %v1248 = vpop.f32.mrb[0].mxu0
    %v1249 = vpop.f32.mrb[0].mxu0
    %1250 = vdwg.mxu0
    %1251 = vrot.lane.b32.xlu0 %v423, 64
    %v1252 = vpop.permute.xlu0 %1251
    %v1254 = vsel %vm476, %v960, 0
    %v1257 = vsel %vm967, %v1252, 0
    %1259 = vmatprep.subr.bf16.mxu0 0
    %1260 = vmatpush1.bf16.msra.mxu0 %v1257
    %1261 = vmatprep.subr.bf16.mxu0 0
    %1262 = vmatpush1.bf16.msra.mxu0 0
    %1263 = vmatprep.subr.bf16.mxu0 0
    %1264 = vmatpush1.bf16.msra.mxu0 0
    %1265 = vmatprep.subr.bf16.mxu0 0
    %1266 = vmatpush1.bf16.msra.mxu0 0
    %1267 = vmatprep.subr.bf16.mxu0 0
    %1268 = vmatpush1.bf16.msra.mxu0 0
    %1269 = vmatprep.subr.bf16.mxu0 0
    %1270 = vmatpush1.bf16.msra.mxu0 0
    %1271 = vmatprep.subr.bf16.mxu0 0
    %1272 = vmatpush1.bf16.msra.mxu0 0
    %1273 = vmatprep.subr.bf16.mxu0 0
    %1274 = vmatpush1.bf16.msra.mxu0 0
    %1275 = vmatprep.subr.bf16.mxu0 0
    %1276 = vmatpush1.bf16.msra.mxu0 0
    %1277 = vmatprep.subr.bf16.mxu0 0
    %1278 = vmatpush1.bf16.msra.mxu0 0
    %1279 = vmatprep.subr.bf16.mxu0 0
    %1280 = vmatpush1.bf16.msra.mxu0 0
    %1281 = vmatprep.subr.bf16.mxu0 0
    %1282 = vmatpush1.bf16.msra.mxu0 0
    %1283 = vmatprep.subr.bf16.mxu0 0
    %1284 = vmatpush1.bf16.msra.mxu0 0
    %1285 = vmatprep.subr.bf16.mxu0 0
    %1286 = vmatpush1.bf16.msra.mxu0 0
    %1287 = vmatprep.subr.bf16.mxu0 0
    %1288 = vmatpush1.bf16.msra.mxu0 0
    %1289 = vmatprep.subr.bf16.mxu0 0
    %1290 = vmatpush1.bf16.msra.mxu0 0
    %1291 = vmatprep.mubr.bf16.mxu0 0
    %1292 = vmatmul.mubr.bf16.gmra.mrb[0].mxu0 %v1254
    %v1293 = vpop.f32.mrb[0].mxu0
    %v1294 = vadd.f32 0.0, %v1293
    %v1295 = vpop.f32.mrb[0].mxu0
    %v1296 = vpop.f32.mrb[0].mxu0
    %v1297 = vpop.f32.mrb[0].mxu0
    %1298 = vdwg.mxu0
    %1299 = vrot.lane.b32.xlu0 %v424, 64
    %v1300 = vpop.permute.xlu0 %1299
    %v1302 = vsel %vm476, %v961, 0
    %v1305 = vsel %vm967, %v1300, 0
    %1307 = vmatprep.subr.bf16.mxu0 0
    %1308 = vmatpush1.bf16.msra.mxu0 %v1305
    %1309 = vmatprep.subr.bf16.mxu0 0
    %1310 = vmatpush1.bf16.msra.mxu0 0
    %1311 = vmatprep.subr.bf16.mxu0 0
    %1312 = vmatpush1.bf16.msra.mxu0 0
    %1313 = vmatprep.subr.bf16.mxu0 0
    %1314 = vmatpush1.bf16.msra.mxu0 0
    %1315 = vmatprep.subr.bf16.mxu0 0
    %1316 = vmatpush1.bf16.msra.mxu0 0
    %1317 = vmatprep.subr.bf16.mxu0 0
    %1318 = vmatpush1.bf16.msra.mxu0 0
    %1319 = vmatprep.subr.bf16.mxu0 0
    %1320 = vmatpush1.bf16.msra.mxu0 0
    %1321 = vmatprep.subr.bf16.mxu0 0
    %1322 = vmatpush1.bf16.msra.mxu0 0
    %1323 = vmatprep.subr.bf16.mxu0 0
    %1324 = vmatpush1.bf16.msra.mxu0 0
    %1325 = vmatprep.subr.bf16.mxu0 0
    %1326 = vmatpush1.bf16.msra.mxu0 0
    %1327 = vmatprep.subr.bf16.mxu0 0
    %1328 = vmatpush1.bf16.msra.mxu0 0
    %1329 = vmatprep.subr.bf16.mxu0 0
    %1330 = vmatpush1.bf16.msra.mxu0 0
    %1331 = vmatprep.subr.bf16.mxu0 0
    %1332 = vmatpush1.bf16.msra.mxu0 0
    %1333 = vmatprep.subr.bf16.mxu0 0
    %1334 = vmatpush1.bf16.msra.mxu0 0
    %1335 = vmatprep.subr.bf16.mxu0 0
    %1336 = vmatpush1.bf16.msra.mxu0 0
    %1337 = vmatprep.subr.bf16.mxu0 0
    %1338 = vmatpush1.bf16.msra.mxu0 0
    %1339 = vmatprep.mubr.bf16.mxu0 0
    %1340 = vmatmul.mubr.bf16.gmra.mrb[0].mxu0 %v1302
    %v1341 = vpop.f32.mrb[0].mxu0
    %v1342 = vadd.f32 0.0, %v1341
    %v1343 = vpop.f32.mrb[0].mxu0
    %v1344 = vpop.f32.mrb[0].mxu0
    %v1345 = vpop.f32.mrb[0].mxu0
    %1346 = vdwg.mxu0
    %v1347 = vld [vmem:[#allocation11] sm:$0x1]
    %v1348 = vld [vmem:[%s6] sm:$0xf]
    %v1349 = vpack.c.bf16 %v1054, %v1006
    %v1351 = vsel %vm476, %v1349, 0
    %v1354 = vsel %vm967, %v1348, 0
    %1356 = vmatprep.subr.bf16.mxu0 0
    %1357 = vmatpush1.bf16.msra.mxu0 %v1354
    %1358 = vmatprep.subr.bf16.mxu0 0
    %1359 = vmatpush1.bf16.msra.mxu0 0
    %1360 = vmatprep.subr.bf16.mxu0 0
    %1361 = vmatpush1.bf16.msra.mxu0 0
    %1362 = vmatprep.subr.bf16.mxu0 0
    %1363 = vmatpush1.bf16.msra.mxu0 0
    %1364 = vmatprep.subr.bf16.mxu0 0
    %1365 = vmatpush1.bf16.msra.mxu0 0
    %1366 = vmatprep.subr.bf16.mxu0 0
    %1367 = vmatpush1.bf16.msra.mxu0 0
    %1368 = vmatprep.subr.bf16.mxu0 0
    %1369 = vmatpush1.bf16.msra.mxu0 0
    %1370 = vmatprep.subr.bf16.mxu0 0
    %1371 = vmatpush1.bf16.msra.mxu0 0
    %1372 = vmatprep.subr.bf16.mxu0 0
    %1373 = vmatpush1.bf16.msra.mxu0 0
    %1374 = vmatprep.subr.bf16.mxu0 0
    %1375 = vmatpush1.bf16.msra.mxu0 0
    %1376 = vmatprep.subr.bf16.mxu0 0
    %1377 = vmatpush1.bf16.msra.mxu0 0
    %1378 = vmatprep.subr.bf16.mxu0 0
    %1379 = vmatpush1.bf16.msra.mxu0 0
    %1380 = vmatprep.subr.bf16.mxu0 0
    %1381 = vmatpush1.bf16.msra.mxu0 0
    %1382 = vmatprep.subr.bf16.mxu0 0
    %1383 = vmatpush1.bf16.msra.mxu0 0
    %1384 = vmatprep.subr.bf16.mxu0 0
    %1385 = vmatpush1.bf16.msra.mxu0 0
    %1386 = vmatprep.subr.bf16.mxu0 0
    %1387 = vmatpush1.bf16.msra.mxu0 0
    %1388 = vmatprep.mubr.bf16.mxu0 0
    %1389 = vmatmul.mubr.bf16.gmra.mrb[0].mxu0 %v1351
    %v1390 = vpop.f32.mrb[0].mxu0
    %v1391 = vadd.f32 0.0, %v1390
    %v1392 = vpop.f32.mrb[0].mxu0
    %v1393 = vpop.f32.mrb[0].mxu0
    %v1394 = vadd.f32 0.0, %v1393
    %v1395 = vpop.f32.mrb[0].mxu0
    %1396 = vdwg.mxu0
    %v1398 = vlaneseq
    %v1399 = vshrl.u32 %v1398, 7
    %v1400 = vsub.s32 0, %v1399
    %v1401 = vrot.slane %v1347, %v1400
    %v1403 = vadd.f32 %v1401, %v1391
    %v1404 = vadd.f32 %v1401, %v1394
    %s1405 = scalar_lea.vmem %s6, 4
    %v1406 = vld [vmem:[%s1405] sm:$0xf]
    %v1407 = vpack.c.bf16 %v1150, %v1102
    %v1409 = vsel %vm476, %v1407, 0
    %v1412 = vsel %vm967, %v1406, 0
    %1414 = vmatprep.subr.bf16.mxu0 0
    %1415 = vmatpush1.bf16.msra.mxu0 %v1412
    %1416 = vmatprep.subr.bf16.mxu0 0
    %1417 = vmatpush1.bf16.msra.mxu0 0
    %1418 = vmatprep.subr.bf16.mxu0 0
    %1419 = vmatpush1.bf16.msra.mxu0 0
    %1420 = vmatprep.subr.bf16.mxu0 0
    %1421 = vmatpush1.bf16.msra.mxu0 0
    %1422 = vmatprep.subr.bf16.mxu0 0
    %1423 = vmatpush1.bf16.msra.mxu0 0
    %1424 = vmatprep.subr.bf16.mxu0 0
    %1425 = vmatpush1.bf16.msra.mxu0 0
    %1426 = vmatprep.subr.bf16.mxu0 0
    %1427 = vmatpush1.bf16.msra.mxu0 0
    %1428 = vmatprep.subr.bf16.mxu0 0
    %1429 = vmatpush1.bf16.msra.mxu0 0
    %1430 = vmatprep.subr.bf16.mxu0 0
    %1431 = vmatpush1.bf16.msra.mxu0 0
    %1432 = vmatprep.subr.bf16.mxu0 0
    %1433 = vmatpush1.bf16.msra.mxu0 0
    %1434 = vmatprep.subr.bf16.mxu0 0
    %1435 = vmatpush1.bf16.msra.mxu0 0
    %1436 = vmatprep.subr.bf16.mxu0 0
    %1437 = vmatpush1.bf16.msra.mxu0 0
    %1438 = vmatprep.subr.bf16.mxu0 0
    %1439 = vmatpush1.bf16.msra.mxu0 0
    %1440 = vmatprep.subr.bf16.mxu0 0
    %1441 = vmatpush1.bf16.msra.mxu0 0
    %1442 = vmatprep.subr.bf16.mxu0 0
    %1443 = vmatpush1.bf16.msra.mxu0 0
    %1444 = vmatprep.subr.bf16.mxu0 0
    %1445 = vmatpush1.bf16.msra.mxu0 0
    %1446 = vmatprep.mubr.bf16.mxu0 0
    %1447 = vmatmul.mubr.bf16.gmra.mrb[0].mxu0 %v1409
    %v1448 = vpop.f32.mrb[0].mxu0
    %v1449 = vadd.f32 0.0, %v1448
    %v1450 = vpop.f32.mrb[0].mxu0
    %v1451 = vpop.f32.mrb[0].mxu0
    %v1452 = vadd.f32 0.0, %v1451
    %v1453 = vpop.f32.mrb[0].mxu0
    %1454 = vdwg.mxu0
    %v1455 = vadd.f32 %v1403, %v1449
    %v1456 = vadd.f32 %v1404, %v1452
    %s1457 = scalar_lea.vmem %s6, 8
    %v1458 = vld [vmem:[%s1457] sm:$0xf]
    %v1459 = vpack.c.bf16 %v1246, %v1198
    %v1461 = vsel %vm476, %v1459, 0
    %v1464 = vsel %vm967, %v1458, 0
    %1466 = vmatprep.subr.bf16.mxu0 0
    %1467 = vmatpush1.bf16.msra.mxu0 %v1464
    %1468 = vmatprep.subr.bf16.mxu0 0
    %1469 = vmatpush1.bf16.msra.mxu0 0
    %1470 = vmatprep.subr.bf16.mxu0 0
    %1471 = vmatpush1.bf16.msra.mxu0 0
    %1472 = vmatprep.subr.bf16.mxu0 0
    %1473 = vmatpush1.bf16.msra.mxu0 0
    %1474 = vmatprep.subr.bf16.mxu0 0
    %1475 = vmatpush1.bf16.msra.mxu0 0
    %1476 = vmatprep.subr.bf16.mxu0 0
    %1477 = vmatpush1.bf16.msra.mxu0 0
    %1478 = vmatprep.subr.bf16.mxu0 0
    %1479 = vmatpush1.bf16.msra.mxu0 0
    %1480 = vmatprep.subr.bf16.mxu0 0
    %1481 = vmatpush1.bf16.msra.mxu0 0
    %1482 = vmatprep.subr.bf16.mxu0 0
    %1483 = vmatpush1.bf16.msra.mxu0 0
    %1484 = vmatprep.subr.bf16.mxu0 0
    %1485 = vmatpush1.bf16.msra.mxu0 0
    %1486 = vmatprep.subr.bf16.mxu0 0
    %1487 = vmatpush1.bf16.msra.mxu0 0
    %1488 = vmatprep.subr.bf16.mxu0 0
    %1489 = vmatpush1.bf16.msra.mxu0 0
    %1490 = vmatprep.subr.bf16.mxu0 0
    %1491 = vmatpush1.bf16.msra.mxu0 0
    %1492 = vmatprep.subr.bf16.mxu0 0
    %1493 = vmatpush1.bf16.msra.mxu0 0
    %1494 = vmatprep.subr.bf16.mxu0 0
    %1495 = vmatpush1.bf16.msra.mxu0 0
    %1496 = vmatprep.subr.bf16.mxu0 0
    %1497 = vmatpush1.bf16.msra.mxu0 0
    %1498 = vmatprep.mubr.bf16.mxu0 0
    %1499 = vmatmul.mubr.bf16.gmra.mrb[0].mxu0 %v1461
    %v1500 = vpop.f32.mrb[0].mxu0
    %v1501 = vadd.f32 0.0, %v1500
    %v1502 = vpop.f32.mrb[0].mxu0
    %v1503 = vpop.f32.mrb[0].mxu0
    %v1504 = vadd.f32 0.0, %v1503
    %v1505 = vpop.f32.mrb[0].mxu0
    %1506 = vdwg.mxu0
    %v1507 = vadd.f32 %v1455, %v1501
    %v1508 = vadd.f32 %v1456, %v1504
    %s1509 = scalar_lea.vmem %s6, 12
    %v1510 = vld [vmem:[%s1509] sm:$0xf]
    %v1511 = vpack.c.bf16 %v1342, %v1294
    %v1513 = vsel %vm476, %v1511, 0
    %v1516 = vsel %vm967, %v1510, 0
    %1518 = vmatprep.subr.bf16.mxu0 0
    %1519 = vmatpush1.bf16.msra.mxu0 %v1516
    %1520 = vmatprep.subr.bf16.mxu0 0
    %1521 = vmatpush1.bf16.msra.mxu0 0
    %1522 = vmatprep.subr.bf16.mxu0 0
    %1523 = vmatpush1.bf16.msra.mxu0 0
    %1524 = vmatprep.subr.bf16.mxu0 0
    %1525 = vmatpush1.bf16.msra.mxu0 0
    %1526 = vmatprep.subr.bf16.mxu0 0
    %1527 = vmatpush1.bf16.msra.mxu0 0
    %1528 = vmatprep.subr.bf16.mxu0 0
    %1529 = vmatpush1.bf16.msra.mxu0 0
    %1530 = vmatprep.subr.bf16.mxu0 0
    %1531 = vmatpush1.bf16.msra.mxu0 0
    %1532 = vmatprep.subr.bf16.mxu0 0
    %1533 = vmatpush1.bf16.msra.mxu0 0
    %1534 = vmatprep.subr.bf16.mxu0 0
    %1535 = vmatpush1.bf16.msra.mxu0 0
    %1536 = vmatprep.subr.bf16.mxu0 0
    %1537 = vmatpush1.bf16.msra.mxu0 0
    %1538 = vmatprep.subr.bf16.mxu0 0
    %1539 = vmatpush1.bf16.msra.mxu0 0
    %1540 = vmatprep.subr.bf16.mxu0 0
    %1541 = vmatpush1.bf16.msra.mxu0 0
    %1542 = vmatprep.subr.bf16.mxu0 0
    %1543 = vmatpush1.bf16.msra.mxu0 0
    %1544 = vmatprep.subr.bf16.mxu0 0
    %1545 = vmatpush1.bf16.msra.mxu0 0
    %1546 = vmatprep.subr.bf16.mxu0 0
    %1547 = vmatpush1.bf16.msra.mxu0 0
    %1548 = vmatprep.subr.bf16.mxu0 0
    %1549 = vmatpush1.bf16.msra.mxu0 0
    %1550 = vmatprep.mubr.bf16.mxu0 0
    %1551 = vmatmul.mubr.bf16.gmra.mrb[0].mxu0 %v1513
    %v1552 = vpop.f32.mrb[0].mxu0
    %v1553 = vadd.f32 0.0, %v1552
    %v1554 = vpop.f32.mrb[0].mxu0
    %v1555 = vpop.f32.mrb[0].mxu0
    %v1556 = vadd.f32 0.0, %v1555
    %v1557 = vpop.f32.mrb[0].mxu0
    %1558 = vdwg.mxu0
    %v1559 = vadd.f32 %v1507, %v1553
    %v1560 = vadd.f32 %v1508, %v1556
    %v1561 = vadd.f32 %v289, %v1559
    %v1562 = vadd.f32 %v290, %v1560
    %v1563 = vld [vmem:[#allocation13] sm:$0x1]
    %v1564 = vld [vmem:[#allocation14] sm:$0x1]
    %v1565 = vsel %vm247, %v1561, 0.0
    %1566 = vadd.xlane.f32.xlu0 %v1565
    %v1567 = vpop.xlane.xlu0 %1566
    %v1568 = vsel %vm247, %v1562, 0.0
    %1569 = vadd.xlane.f32.xlu0 %v1568
    %v1570 = vpop.xlane.xlu0 %1569
    %v1571 = vmul.f32 %v1567, %v254
    %v1572 = vmul.f32 %v1570, %v254
    %v1573 = vsub.f32 %v1561, %v1571
    %v1574 = vsub.f32 %v1562, %v1572
    %v1575 = vmul.f32 %v1573, %v1573
    %v1576 = vmul.f32 %v1574, %v1574
    %v1577 = vsel %vm247, %v1575, 0.0
    %1578 = vadd.xlane.f32.xlu0 %v1577
    %v1579 = vpop.xlane.xlu0 %1578
    %v1580 = vsel %vm247, %v1576, 0.0
    %1581 = vadd.xlane.f32.xlu0 %v1580
    %v1582 = vpop.xlane.xlu0 %1581
    %v1583 = vmul.f32 %v1579, %v254
    %v1584 = vmul.f32 %v1582, %v254
    %v1585 = vadd.f32 %v1583, 1e-12
    %v1586 = vadd.f32 %v1584, 1e-12
    %v1587 = vrsqrt.pop %v1585
    %v1588 = vrsqrt.pop %v1586
    %v1589 = vmul.f32 %v1573, %v1587
    %v1590 = vmul.f32 %v1574, %v1588
    %v1592 = vlaneseq
    %v1593 = vshrl.u32 %v1592, 7
    %v1594 = vsub.s32 0, %v1593
    %v1595 = vrot.slane %v1563, %v1594
    %v1597 = vmul.f32 %v1589, %v1595
    %v1598 = vmul.f32 %v1590, %v1595
    %v1600 = vlaneseq
    %v1601 = vshrl.u32 %v1600, 7
    %v1602 = vsub.s32 0, %v1601
    %v1603 = vrot.slane %v1564, %v1602
    %v1605 = vadd.f32 %v1597, %v1603
    %v1606 = vadd.f32 %v1598, %v1603
    %v1607 = vld [vmem:[%s10] sm:$0xf]
    %v1608 = vld [vmem:[%s10 + $0x4] sm:$0xf]
    %v1609 = vld [vmem:[%s10 + $0x8] sm:$0xf]
    %v1610 = vld [vmem:[%s10 + $0xc] sm:$0xf]
    %v1611 = vpack.c.bf16 %v1606, %v1605
    %v1612 = vld [vmem:[#allocation16] sm:$0x1]
    %v1614 = vlaneseq
    %v1615 = vshrl.u32 %v1614, 7
    %v1616 = vsub.s32 0, %v1615
    %v1617 = vrot.slane %v1612, %v1616
    %v1623 = vunpack.c.l.b16 %v1607
    %v1624 = vunpack.c.l.b16 %v1608
    %v1625 = vunpack.c.l.b16 %v1609
    %v1626 = vunpack.c.l.b16 %v1610
    %v1627 = vpack.c.b16 %v1624, %v1623
    %v1628 = vpack.c.b16 %v1626, %v1625
    %v1632 = vsel %vm247, %v1611, 0
    %1634 = vmatprep.subr.bf16.mxu0 0
    %1635 = vmatpush1.bf16.msra.mxu0 %v1627
    %1636 = vmatprep.subr.bf16.mxu0 0
    %1637 = vmatpush1.bf16.msra.mxu0 %v1628
    %1638 = vmatprep.subr.bf16.mxu0 0
    %1639 = vmatpush1.bf16.msra.mxu0 0
    %1640 = vmatprep.subr.bf16.mxu0 0
    %1641 = vmatpush1.bf16.msra.mxu0 0
    %1642 = vmatprep.subr.bf16.mxu0 0
    %1643 = vmatpush1.bf16.msra.mxu0 0
    %1644 = vmatprep.subr.bf16.mxu0 0
    %1645 = vmatpush1.bf16.msra.mxu0 0
    %1646 = vmatprep.subr.bf16.mxu0 0
    %1647 = vmatpush1.bf16.msra.mxu0 0
    %1648 = vmatprep.subr.bf16.mxu0 0
    %1649 = vmatpush1.bf16.msra.mxu0 0
    %1650 = vmatprep.subr.bf16.mxu0 0
    %1651 = vmatpush1.bf16.msra.mxu0 0
    %1652 = vmatprep.subr.bf16.mxu0 0
    %1653 = vmatpush1.bf16.msra.mxu0 0
    %1654 = vmatprep.subr.bf16.mxu0 0
    %1655 = vmatpush1.bf16.msra.mxu0 0
    %1656 = vmatprep.subr.bf16.mxu0 0
    %1657 = vmatpush1.bf16.msra.mxu0 0
    %1658 = vmatprep.subr.bf16.mxu0 0
    %1659 = vmatpush1.bf16.msra.mxu0 0
    %1660 = vmatprep.subr.bf16.mxu0 0
    %1661 = vmatpush1.bf16.msra.mxu0 0
    %1662 = vmatprep.subr.bf16.mxu0 0
    %1663 = vmatpush1.bf16.msra.mxu0 0
    %1664 = vmatprep.subr.bf16.mxu0 0
    %1665 = vmatpush1.bf16.msra.mxu0 0
    %1666 = vmatprep.mubr.bf16.mxu0 0
    %1667 = vmatmul.mubr.bf16.gmra.mrb[0].mxu0 %v1632
    %v1668 = vpop.f32.mrb[0].mxu0
    %v1669 = vadd.f32 %v1617, %v1668
    %v1670 = vpop.f32.mrb[0].mxu0
    %v1671 = vpop.f32.mrb[0].mxu0
    %v1672 = vadd.f32 %v1617, %v1671
    %v1673 = vpop.f32.mrb[0].mxu0
    %1674 = vdwg.mxu0
    %v1675 = vmul.f32 %v1669, 0.5
    %v1676 = vmul.f32 %v1672, 0.5
    %v1677 = vmul.f32 %v1669, 0.044715
    %v1678 = vmul.f32 %v1672, 0.044715
    %v1679 = vmul.f32 %v1677, %v1669
    %v1680 = vmul.f32 %v1678, %v1672
    %v1681 = vmul.f32 %v1679, %v1669
    %v1682 = vmul.f32 %v1680, %v1672
    %v1683 = vadd.f32 %v1669, %v1681
    %v1684 = vadd.f32 %v1672, %v1682
    %v1685 = vmul.f32 %v1683, 0.7978846
    %v1686 = vmul.f32 %v1684, 0.7978846
    %v1687 = vtanh.pop %v1685
    %v1688 = vtanh.pop %v1686
    %v1689 = vadd.f32 %v1687, 1.0
    %v1690 = vadd.f32 %v1688, 1.0
    %v1691 = vmul.f32 %v1675, %v1689
    %v1692 = vmul.f32 %v1676, %v1690
    %v1693 = vld [vmem:[%s12] sm:$0xf]
    %v1694 = vld [vmem:[%s12 + $0x4] sm:$0xf]
    %v1695 = vld [vmem:[%s12 + $0x8] sm:$0xf]
    %v1696 = vld [vmem:[%s12 + $0xc] sm:$0xf]
    %v1697 = vld [vmem:[%s12 + $0x10] sm:$0xf]
    %v1698 = vld [vmem:[%s12 + $0x14] sm:$0xf]
    %v1699 = vld [vmem:[%s12 + $0x18] sm:$0xf]
    %v1700 = vld [vmem:[%s12 + $0x1c] sm:$0xf]
    %v1701 = vpack.c.bf16 %v1692, %v1691
    %v1710 = vunpack.c.l.b16 %v1693
    %v1711 = vunpack.c.l.b16 %v1694
    %v1712 = vunpack.c.l.b16 %v1695
    %v1713 = vunpack.c.l.b16 %v1696
    %v1714 = vunpack.c.l.b16 %v1697
    %v1715 = vunpack.c.l.b16 %v1698
    %v1716 = vunpack.c.l.b16 %v1699
    %v1717 = vunpack.c.l.b16 %v1700
    %v1718 = vpack.c.b16 %v1711, %v1710
    %v1719 = vpack.c.b16 %v1713, %v1712
    %v1720 = vpack.c.b16 %v1715, %v1714
    %v1721 = vpack.c.b16 %v1717, %v1716
    %vm1726 = vcmask 523264
    %v1728 = vsel %vm1726, %v1701, 0
    %1730 = vmatprep.subr.bf16.mxu0 0
    %1731 = vmatpush1.bf16.msra.mxu0 %v1718
    %1732 = vmatprep.subr.bf16.mxu0 0
    %1733 = vmatpush1.bf16.msra.mxu0 %v1719
    %1734 = vmatprep.subr.bf16.mxu0 0
    %1735 = vmatpush1.bf16.msra.mxu0 %v1720
    %1736 = vmatprep.subr.bf16.mxu0 0
    %1737 = vmatpush1.bf16.msra.mxu0 %v1721
    %1738 = vmatprep.subr.bf16.mxu0 0
    %1739 = vmatpush1.bf16.msra.mxu0 0
    %1740 = vmatprep.subr.bf16.mxu0 0
    %1741 = vmatpush1.bf16.msra.mxu0 0
    %1742 = vmatprep.subr.bf16.mxu0 0
    %1743 = vmatpush1.bf16.msra.mxu0 0
    %1744 = vmatprep.subr.bf16.mxu0 0
    %1745 = vmatpush1.bf16.msra.mxu0 0
    %1746 = vmatprep.subr.bf16.mxu0 0
    %1747 = vmatpush1.bf16.msra.mxu0 0
    %1748 = vmatprep.subr.bf16.mxu0 0
    %1749 = vmatpush1.bf16.msra.mxu0 0
    %1750 = vmatprep.subr.bf16.mxu0 0
    %1751 = vmatpush1.bf16.msra.mxu0 0
    %1752 = vmatprep.subr.bf16.mxu0 0
    %1753 = vmatpush1.bf16.msra.mxu0 0
    %1754 = vmatprep.subr.bf16.mxu0 0
    %1755 = vmatpush1.bf16.msra.mxu0 0
    %1756 = vmatprep.subr.bf16.mxu0 0
    %1757 = vmatpush1.bf16.msra.mxu0 0
    %1758 = vmatprep.subr.bf16.mxu0 0
    %1759 = vmatpush1.bf16.msra.mxu0 0
    %1760 = vmatprep.subr.bf16.mxu0 0
    %1761 = vmatpush1.bf16.msra.mxu0 0
    %1762 = vmatprep.mubr.bf16.mxu0 0
    %1763 = vmatmul.mubr.bf16.gmra.mrb[0].mxu0 %v1728
    %v1764 = vpop.f32.mrb[0].mxu0
    %v1765 = vadd.f32 0.0, %v1764
    %v1766 = vpop.f32.mrb[0].mxu0
    %v1767 = vpop.f32.mrb[0].mxu0
    %v1768 = vadd.f32 0.0, %v1767
    %v1769 = vpop.f32.mrb[0].mxu0
    %1770 = vdwg.mxu0
    %v1771 = vadd.f32 %v1605, %v1765
    %v1772 = vadd.f32 %v1606, %v1768
    %v1773 = vld [vmem:[#allocation17] sm:$0x1]
    %v1775 = vlaneseq
    %v1776 = vshrl.u32 %v1775, 7
    %v1777 = vsub.s32 0, %v1776
    %v1778 = vrot.slane %v1773, %v1777
    %v1780 = vadd.f32 %v1771, %v1778
    %v1781 = vadd.f32 %v1772, %v1778
    %v1782 = vld [vmem:[#allocation19] sm:$0x1]
    %v1783 = vld [vmem:[#allocation20] sm:$0x1]
    %v1784 = vsel %vm247, %v1780, 0.0
    %1785 = vadd.xlane.f32.xlu0 %v1784
    %v1786 = vpop.xlane.xlu0 %1785
    %v1787 = vsel %vm247, %v1781, 0.0
    %1788 = vadd.xlane.f32.xlu0 %v1787
    %v1789 = vpop.xlane.xlu0 %1788
    %v1790 = vmul.f32 %v1786, %v254
    %v1791 = vmul.f32 %v1789, %v254
    %v1792 = vsub.f32 %v1780, %v1790
    %v1793 = vsub.f32 %v1781, %v1791
    %v1794 = vmul.f32 %v1792, %v1792
    %v1795 = vmul.f32 %v1793, %v1793
    %v1796 = vsel %vm247, %v1794, 0.0
    %1797 = vadd.xlane.f32.xlu0 %v1796
    %v1798 = vpop.xlane.xlu0 %1797
    %v1799 = vsel %vm247, %v1795, 0.0
    %1800 = vadd.xlane.f32.xlu0 %v1799
    %v1801 = vpop.xlane.xlu0 %1800
    %v1802 = vmul.f32 %v1798, %v254
    %v1803 = vmul.f32 %v1801, %v254
    %v1804 = vadd.f32 %v1802, 1e-12
    %v1805 = vadd.f32 %v1803, 1e-12
    %v1806 = vrsqrt.pop %v1804
    %v1807 = vrsqrt.pop %v1805
    %v1808 = vmul.f32 %v1792, %v1806
    %v1809 = vmul.f32 %v1793, %v1807
    %v1811 = vlaneseq
    %v1812 = vshrl.u32 %v1811, 7
    %v1813 = vsub.s32 0, %v1812
    %v1814 = vrot.slane %v1782, %v1813
    %v1816 = vmul.f32 %v1808, %v1814
    %v1817 = vmul.f32 %v1809, %v1814
    %v1819 = vlaneseq
    %v1820 = vshrl.u32 %v1819, 7
    %v1821 = vsub.s32 0, %v1820
    %v1822 = vrot.slane %v1783, %v1821
    %v1824 = vadd.f32 %v1816, %v1822
    %v1825 = vadd.f32 %v1817, %v1822
    %s1826 = scalar_lea.vmem %s4, 16
    %v1827 = vld [vmem:[%s1826] sm:$0xf]
    %v1828 = vld [vmem:[%s1826 + $0x4] sm:$0xf]
    %v1829 = vld [vmem:[%s1826 + $0x8] sm:$0xf]
    %v1830 = vld [vmem:[%s1826 + $0xc] sm:$0xf]
    %v1831 = vpack.c.bf16 %v1825, %v1824
    %s1832 = scalar_lea.vmem [#allocation10], 1
    %v1833 = vld [vmem:[%s1832] sm:$0x1]
    %v1835 = vlaneseq
    %v1836 = vshrl.u32 %v1835, 7
    %v1837 = vsub.s32 0, %v1836
    %v1838 = vrot.slane %v1833, %v1837
    %v1844 = vunpack.c.l.b16 %v1827
    %v1845 = vunpack.c.l.b16 %v1828
    %v1846 = vunpack.c.l.b16 %v1829
    %v1847 = vunpack.c.l.b16 %v1830
    %v1848 = vpack.c.b16 %v1845, %v1844
    %v1849 = vpack.c.b16 %v1847, %v1846
    %v1853 = vsel %vm247, %v1831, 0
    %1855 = vmatprep.subr.bf16.mxu0 0
    %1856 = vmatpush1.bf16.msra.mxu0 %v1848
    %1857 = vmatprep.subr.bf16.mxu0 0
    %1858 = vmatpush1.bf16.msra.mxu0 %v1849
    %1859 = vmatprep.subr.bf16.mxu0 0
    %1860 = vmatpush1.bf16.msra.mxu0 0
    %1861 = vmatprep.subr.bf16.mxu0 0
    %1862 = vmatpush1.bf16.msra.mxu0 0
    %1863 = vmatprep.subr.bf16.mxu0 0
    %1864 = vmatpush1.bf16.msra.mxu0 0
    %1865 = vmatprep.subr.bf16.mxu0 0
    %1866 = vmatpush1.bf16.msra.mxu0 0
    %1867 = vmatprep.subr.bf16.mxu0 0
    %1868 = vmatpush1.bf16.msra.mxu0 0
    %1869 = vmatprep.subr.bf16.mxu0 0
    %1870 = vmatpush1.bf16.msra.mxu0 0
    %1871 = vmatprep.subr.bf16.mxu0 0
    %1872 = vmatpush1.bf16.msra.mxu0 0
    %1873 = vmatprep.subr.bf16.mxu0 0
    %1874 = vmatpush1.bf16.msra.mxu0 0
    %1875 = vmatprep.subr.bf16.mxu0 0
    %1876 = vmatpush1.bf16.msra.mxu0 0
    %1877 = vmatprep.subr.bf16.mxu0 0
    %1878 = vmatpush1.bf16.msra.mxu0 0
    %1879 = vmatprep.subr.bf16.mxu0 0
    %1880 = vmatpush1.bf16.msra.mxu0 0
    %1881 = vmatprep.subr.bf16.mxu0 0
    %1882 = vmatpush1.bf16.msra.mxu0 0
    %1883 = vmatprep.subr.bf16.mxu0 0
    %1884 = vmatpush1.bf16.msra.mxu0 0
    %1885 = vmatprep.subr.bf16.mxu0 0
    %1886 = vmatpush1.bf16.msra.mxu0 0
    %1887 = vmatprep.mubr.bf16.mxu0 0
    %1888 = vmatmul.mubr.bf16.gmra.mrb[0].mxu0 %v1853
    %v1889 = vpop.f32.mrb[0].mxu0
    %v1890 = vadd.f32 %v1838, %v1889
    %v1891 = vpop.f32.mrb[0].mxu0
    %v1892 = vpop.f32.mrb[0].mxu0
    %v1893 = vadd.f32 %v1838, %v1892
    %v1894 = vpop.f32.mrb[0].mxu0
    %1895 = vdwg.mxu0
    %v1896 = vmul.f32 %v1890, 0.35355338
    %v1897 = vmul.f32 %v1893, 0.35355338
    %1900 = vrot.lane.b32.xlu0 %v1896, 120
    %v1901 = vpop.permute.xlu0 %1900
    %1902 = vrot.lane.b32.xlu0 %v1897, 120
    %v1903 = vpop.permute.xlu0 %1902
    %1906 = vrot.lane.b32.xlu0 %v1896, 112
    %v1907 = vpop.permute.xlu0 %1906
    %1908 = vrot.lane.b32.xlu0 %v1897, 112
    %v1909 = vpop.permute.xlu0 %1908
    %1912 = vrot.lane.b32.xlu0 %v1896, 104
    %v1913 = vpop.permute.xlu0 %1912
    %1914 = vrot.lane.b32.xlu0 %v1897, 104
    %v1915 = vpop.permute.xlu0 %1914
    %1920 = vrot.lane.b32.xlu0 %v1890, 120
    %v1921 = vpop.permute.xlu0 %1920
    %1922 = vrot.lane.b32.xlu0 %v1893, 120
    %v1923 = vpop.permute.xlu0 %1922
    %1926 = vrot.lane.b32.xlu0 %v1890, 112
    %v1927 = vpop.permute.xlu0 %1926
    %1928 = vrot.lane.b32.xlu0 %v1893, 112
    %v1929 = vpop.permute.xlu0 %1928
    %1932 = vrot.lane.b32.xlu0 %v1890, 104
    %v1933 = vpop.permute.xlu0 %1932
    %1934 = vrot.lane.b32.xlu0 %v1893, 104
    %v1935 = vpop.permute.xlu0 %1934
    %v1938 = vpack.c.bf16 %v1896, %v1896
    %v1939 = vpack.c.bf16 %v1897, %v1897
    %v1940 = vpack.c.bf16 %v1901, %v1901
    %v1941 = vpack.c.bf16 %v1903, %v1903
    %v1942 = vpack.c.bf16 %v1907, %v1907
    %v1943 = vpack.c.bf16 %v1909, %v1909
    %v1944 = vpack.c.bf16 %v1913, %v1913
    %v1945 = vpack.c.bf16 %v1915, %v1915
    %v1946 = vpack.c.bf16 %v1890, %v1890
    %v1947 = vpack.c.bf16 %v1893, %v1893
    %v1948 = vpack.c.bf16 %v1921, %v1921
    %v1949 = vpack.c.bf16 %v1923, %v1923
    %v1950 = vpack.c.bf16 %v1927, %v1927
    %v1951 = vpack.c.bf16 %v1929, %v1929
    %v1952 = vpack.c.bf16 %v1933, %v1933
    %v1953 = vpack.c.bf16 %v1935, %v1935
    %1955 = vrot.lane.b32.xlu0 %v1946, 96
    %v1956 = vpop.permute.xlu0 %1955
    %v1958 = vsel %vm476, %v1938, 0
    %v1961 = vsel %vm476, %v1956, 0
    %1963 = vmatprep.subr.bf16.mxu0 0
    %1964 = vmatpush1.bf16.xpose.msra.mxu0 %v1961
    %1965 = vmatprep.subr.bf16.mxu0 0
    %1966 = vmatpush1.bf16.xpose.msra.mxu0 0
    %1967 = vmatprep.subr.bf16.mxu0 0
    %1968 = vmatpush1.bf16.xpose.msra.mxu0 0
    %1969 = vmatprep.subr.bf16.mxu0 0
    %1970 = vmatpush1.bf16.xpose.msra.mxu0 0
    %1971 = vmatprep.subr.bf16.mxu0 0
    %1972 = vmatpush1.bf16.xpose.msra.mxu0 0
    %1973 = vmatprep.subr.bf16.mxu0 0
    %1974 = vmatpush1.bf16.xpose.msra.mxu0 0
    %1975 = vmatprep.subr.bf16.mxu0 0
    %1976 = vmatpush1.bf16.xpose.msra.mxu0 0
    %1977 = vmatprep.subr.bf16.mxu0 0
    %1978 = vmatpush1.bf16.xpose.msra.mxu0 0
    %1979 = vmatprep.subr.bf16.mxu0 0
    %1980 = vmatpush1.bf16.xpose.msra.mxu0 0
    %1981 = vmatprep.subr.bf16.mxu0 0
    %1982 = vmatpush1.bf16.xpose.msra.mxu0 0
    %1983 = vmatprep.subr.bf16.mxu0 0
    %1984 = vmatpush1.bf16.xpose.msra.mxu0 0
    %1985 = vmatprep.subr.bf16.mxu0 0
    %1986 = vmatpush1.bf16.xpose.msra.mxu0 0
    %1987 = vmatprep.subr.bf16.mxu0 0
    %1988 = vmatpush1.bf16.xpose.msra.mxu0 0
    %1989 = vmatprep.subr.bf16.mxu0 0
    %1990 = vmatpush1.bf16.xpose.msra.mxu0 0
    %1991 = vmatprep.subr.bf16.mxu0 0
    %1992 = vmatpush1.bf16.xpose.msra.mxu0 0
    %1993 = vmatprep.subr.bf16.mxu0 0
    %1994 = vmatpush1.bf16.xpose.msra.mxu0 0
    %1995 = vmatprep.mubr.bf16.mxu0 0
    %1996 = vmatmul.mubr.bf16.gmra.mrb[0].mxu0 %v1958
    %v1997 = vpop.f32.mrb[0].mxu0
    %v1998 = vadd.f32 %v436, %v1997
    %v1999 = vpop.f32.mrb[0].mxu0
    %v2000 = vpop.f32.mrb[0].mxu0
    %v2001 = vpop.f32.mrb[0].mxu0
    %2002 = vdwg.mxu0
    %2004 = vrot.lane.b32.xlu0 %v1947, 96
    %v2005 = vpop.permute.xlu0 %2004
    %v2007 = vsel %vm476, %v1939, 0
    %v2010 = vsel %vm476, %v2005, 0
    %2012 = vmatprep.subr.bf16.mxu0 0
    %2013 = vmatpush1.bf16.xpose.msra.mxu0 %v2010
    %2014 = vmatprep.subr.bf16.mxu0 0
    %2015 = vmatpush1.bf16.xpose.msra.mxu0 0
    %2016 = vmatprep.subr.bf16.mxu0 0
    %2017 = vmatpush1.bf16.xpose.msra.mxu0 0
    %2018 = vmatprep.subr.bf16.mxu0 0
    %2019 = vmatpush1.bf16.xpose.msra.mxu0 0
    %2020 = vmatprep.subr.bf16.mxu0 0
    %2021 = vmatpush1.bf16.xpose.msra.mxu0 0
    %2022 = vmatprep.subr.bf16.mxu0 0
    %2023 = vmatpush1.bf16.xpose.msra.mxu0 0
    %2024 = vmatprep.subr.bf16.mxu0 0
    %2025 = vmatpush1.bf16.xpose.msra.mxu0 0
    %2026 = vmatprep.subr.bf16.mxu0 0
    %2027 = vmatpush1.bf16.xpose.msra.mxu0 0
    %2028 = vmatprep.subr.bf16.mxu0 0
    %2029 = vmatpush1.bf16.xpose.msra.mxu0 0
    %2030 = vmatprep.subr.bf16.mxu0 0
    %2031 = vmatpush1.bf16.xpose.msra.mxu0 0
    %2032 = vmatprep.subr.bf16.mxu0 0
    %2033 = vmatpush1.bf16.xpose.msra.mxu0 0
    %2034 = vmatprep.subr.bf16.mxu0 0
    %2035 = vmatpush1.bf16.xpose.msra.mxu0 0
    %2036 = vmatprep.subr.bf16.mxu0 0
    %2037 = vmatpush1.bf16.xpose.msra.mxu0 0
    %2038 = vmatprep.subr.bf16.mxu0 0
    %2039 = vmatpush1.bf16.xpose.msra.mxu0 0
    %2040 = vmatprep.subr.bf16.mxu0 0
    %2041 = vmatpush1.bf16.xpose.msra.mxu0 0
    %2042 = vmatprep.subr.bf16.mxu0 0
    %2043 = vmatpush1.bf16.xpose.msra.mxu0 0
    %2044 = vmatprep.mubr.bf16.mxu0 0
    %2045 = vmatmul.mubr.bf16.gmra.mrb[0].mxu0 %v2007
    %v2046 = vpop.f32.mrb[0].mxu0
    %v2047 = vadd.f32 %v440, %v2046
    %v2048 = vpop.f32.mrb[0].mxu0
    %v2049 = vpop.f32.mrb[0].mxu0
    %v2050 = vpop.f32.mrb[0].mxu0
    %2051 = vdwg.mxu0
    %2053 = vrot.lane.b32.xlu0 %v1948, 96
    %v2054 = vpop.permute.xlu0 %2053
    %v2056 = vsel %vm476, %v1940, 0
    %v2059 = vsel %vm476, %v2054, 0
    %2061 = vmatprep.subr.bf16.mxu0 0
    %2062 = vmatpush1.bf16.xpose.msra.mxu0 %v2059
    %2063 = vmatprep.subr.bf16.mxu0 0
    %2064 = vmatpush1.bf16.xpose.msra.mxu0 0
    %2065 = vmatprep.subr.bf16.mxu0 0
    %2066 = vmatpush1.bf16.xpose.msra.mxu0 0
    %2067 = vmatprep.subr.bf16.mxu0 0
    %2068 = vmatpush1.bf16.xpose.msra.mxu0 0
    %2069 = vmatprep.subr.bf16.mxu0 0
    %2070 = vmatpush1.bf16.xpose.msra.mxu0 0
    %2071 = vmatprep.subr.bf16.mxu0 0
    %2072 = vmatpush1.bf16.xpose.msra.mxu0 0
    %2073 = vmatprep.subr.bf16.mxu0 0
    %2074 = vmatpush1.bf16.xpose.msra.mxu0 0
    %2075 = vmatprep.subr.bf16.mxu0 0
    %2076 = vmatpush1.bf16.xpose.msra.mxu0 0
    %2077 = vmatprep.subr.bf16.mxu0 0
    %2078 = vmatpush1.bf16.xpose.msra.mxu0 0
    %2079 = vmatprep.subr.bf16.mxu0 0
    %2080 = vmatpush1.bf16.xpose.msra.mxu0 0
    %2081 = vmatprep.subr.bf16.mxu0 0
    %2082 = vmatpush1.bf16.xpose.msra.mxu0 0
    %2083 = vmatprep.subr.bf16.mxu0 0
    %2084 = vmatpush1.bf16.xpose.msra.mxu0 0
    %2085 = vmatprep.subr.bf16.mxu0 0
    %2086 = vmatpush1.bf16.xpose.msra.mxu0 0
    %2087 = vmatprep.subr.bf16.mxu0 0
    %2088 = vmatpush1.bf16.xpose.msra.mxu0 0
    %2089 = vmatprep.subr.bf16.mxu0 0
    %2090 = vmatpush1.bf16.xpose.msra.mxu0 0
    %2091 = vmatprep.subr.bf16.mxu0 0
    %2092 = vmatpush1.bf16.xpose.msra.mxu0 0
    %2093 = vmatprep.mubr.bf16.mxu0 0
    %2094 = vmatmul.mubr.bf16.gmra.mrb[0].mxu0 %v2056
    %v2095 = vpop.f32.mrb[0].mxu0
    %v2096 = vadd.f32 %v444, %v2095
    %v2097 = vpop.f32.mrb[0].mxu0
    %v2098 = vpop.f32.mrb[0].mxu0
    %v2099 = vpop.f32.mrb[0].mxu0
    %2100 = vdwg.mxu0
    %2102 = vrot.lane.b32.xlu0 %v1949, 96
    %v2103 = vpop.permute.xlu0 %2102
    %v2105 = vsel %vm476, %v1941, 0
    %v2108 = vsel %vm476, %v2103, 0
    %2110 = vmatprep.subr.bf16.mxu0 0
    %2111 = vmatpush1.bf16.xpose.msra.mxu0 %v2108
    %2112 = vmatprep.subr.bf16.mxu0 0
    %2113 = vmatpush1.bf16.xpose.msra.mxu0 0
    %2114 = vmatprep.subr.bf16.mxu0 0
    %2115 = vmatpush1.bf16.xpose.msra.mxu0 0
    %2116 = vmatprep.subr.bf16.mxu0 0
    %2117 = vmatpush1.bf16.xpose.msra.mxu0 0
    %2118 = vmatprep.subr.bf16.mxu0 0
    %2119 = vmatpush1.bf16.xpose.msra.mxu0 0
    %2120 = vmatprep.subr.bf16.mxu0 0
    %2121 = vmatpush1.bf16.xpose.msra.mxu0 0
    %2122 = vmatprep.subr.bf16.mxu0 0
    %2123 = vmatpush1.bf16.xpose.msra.mxu0 0
    %2124 = vmatprep.subr.bf16.mxu0 0
    %2125 = vmatpush1.bf16.xpose.msra.mxu0 0
    %2126 = vmatprep.subr.bf16.mxu0 0
    %2127 = vmatpush1.bf16.xpose.msra.mxu0 0
    %2128 = vmatprep.subr.bf16.mxu0 0
    %2129 = vmatpush1.bf16.xpose.msra.mxu0 0
    %2130 = vmatprep.subr.bf16.mxu0 0
    %2131 = vmatpush1.bf16.xpose.msra.mxu0 0
    %2132 = vmatprep.subr.bf16.mxu0 0
    %2133 = vmatpush1.bf16.xpose.msra.mxu0 0
    %2134 = vmatprep.subr.bf16.mxu0 0
    %2135 = vmatpush1.bf16.xpose.msra.mxu0 0
    %2136 = vmatprep.subr.bf16.mxu0 0
    %2137 = vmatpush1.bf16.xpose.msra.mxu0 0
    %2138 = vmatprep.subr.bf16.mxu0 0
    %2139 = vmatpush1.bf16.xpose.msra.mxu0 0
    %2140 = vmatprep.subr.bf16.mxu0 0
    %2141 = vmatpush1.bf16.xpose.msra.mxu0 0
    %2142 = vmatprep.mubr.bf16.mxu0 0
    %2143 = vmatmul.mubr.bf16.gmra.mrb[0].mxu0 %v2105
    %v2144 = vpop.f32.mrb[0].mxu0
    %v2145 = vadd.f32 %v448, %v2144
    %v2146 = vpop.f32.mrb[0].mxu0
    %v2147 = vpop.f32.mrb[0].mxu0
    %v2148 = vpop.f32.mrb[0].mxu0
    %2149 = vdwg.mxu0
    %2151 = vrot.lane.b32.xlu0 %v1950, 96
    %v2152 = vpop.permute.xlu0 %2151
    %v2154 = vsel %vm476, %v1942, 0
    %v2157 = vsel %vm476, %v2152, 0
    %2159 = vmatprep.subr.bf16.mxu0 0
    %2160 = vmatpush1.bf16.xpose.msra.mxu0 %v2157
    %2161 = vmatprep.subr.bf16.mxu0 0
    %2162 = vmatpush1.bf16.xpose.msra.mxu0 0
    %2163 = vmatprep.subr.bf16.mxu0 0
    %2164 = vmatpush1.bf16.xpose.msra.mxu0 0
    %2165 = vmatprep.subr.bf16.mxu0 0
    %2166 = vmatpush1.bf16.xpose.msra.mxu0 0
    %2167 = vmatprep.subr.bf16.mxu0 0
    %2168 = vmatpush1.bf16.xpose.msra.mxu0 0
    %2169 = vmatprep.subr.bf16.mxu0 0
    %2170 = vmatpush1.bf16.xpose.msra.mxu0 0
    %2171 = vmatprep.subr.bf16.mxu0 0
    %2172 = vmatpush1.bf16.xpose.msra.mxu0 0
    %2173 = vmatprep.subr.bf16.mxu0 0
    %2174 = vmatpush1.bf16.xpose.msra.mxu0 0
    %2175 = vmatprep.subr.bf16.mxu0 0
    %2176 = vmatpush1.bf16.xpose.msra.mxu0 0
    %2177 = vmatprep.subr.bf16.mxu0 0
    %2178 = vmatpush1.bf16.xpose.msra.mxu0 0
    %2179 = vmatprep.subr.bf16.mxu0 0
    %2180 = vmatpush1.bf16.xpose.msra.mxu0 0
    %2181 = vmatprep.subr.bf16.mxu0 0
    %2182 = vmatpush1.bf16.xpose.msra.mxu0 0
    %2183 = vmatprep.subr.bf16.mxu0 0
    %2184 = vmatpush1.bf16.xpose.msra.mxu0 0
    %2185 = vmatprep.subr.bf16.mxu0 0
    %2186 = vmatpush1.bf16.xpose.msra.mxu0 0
    %2187 = vmatprep.subr.bf16.mxu0 0
    %2188 = vmatpush1.bf16.xpose.msra.mxu0 0
    %2189 = vmatprep.subr.bf16.mxu0 0
    %2190 = vmatpush1.bf16.xpose.msra.mxu0 0
    %2191 = vmatprep.mubr.bf16.mxu0 0
    %2192 = vmatmul.mubr.bf16.gmra.mrb[0].mxu0 %v2154
    %v2193 = vpop.f32.mrb[0].mxu0
    %v2194 = vadd.f32 %v452, %v2193
    %v2195 = vpop.f32.mrb[0].mxu0
    %v2196 = vpop.f32.mrb[0].mxu0
    %v2197 = vpop.f32.mrb[0].mxu0
    %2198 = vdwg.mxu0
    %2200 = vrot.lane.b32.xlu0 %v1951, 96
    %v2201 = vpop.permute.xlu0 %2200
    %v2203 = vsel %vm476, %v1943, 0
    %v2206 = vsel %vm476, %v2201, 0
    %2208 = vmatprep.subr.bf16.mxu0 0
    %2209 = vmatpush1.bf16.xpose.msra.mxu0 %v2206
    %2210 = vmatprep.subr.bf16.mxu0 0
    %2211 = vmatpush1.bf16.xpose.msra.mxu0 0
    %2212 = vmatprep.subr.bf16.mxu0 0
    %2213 = vmatpush1.bf16.xpose.msra.mxu0 0
    %2214 = vmatprep.subr.bf16.mxu0 0
    %2215 = vmatpush1.bf16.xpose.msra.mxu0 0
    %2216 = vmatprep.subr.bf16.mxu0 0
    %2217 = vmatpush1.bf16.xpose.msra.mxu0 0
    %2218 = vmatprep.subr.bf16.mxu0 0
    %2219 = vmatpush1.bf16.xpose.msra.mxu0 0
    %2220 = vmatprep.subr.bf16.mxu0 0
    %2221 = vmatpush1.bf16.xpose.msra.mxu0 0
    %2222 = vmatprep.subr.bf16.mxu0 0
    %2223 = vmatpush1.bf16.xpose.msra.mxu0 0
    %2224 = vmatprep.subr.bf16.mxu0 0
    %2225 = vmatpush1.bf16.xpose.msra.mxu0 0
    %2226 = vmatprep.subr.bf16.mxu0 0
    %2227 = vmatpush1.bf16.xpose.msra.mxu0 0
    %2228 = vmatprep.subr.bf16.mxu0 0
    %2229 = vmatpush1.bf16.xpose.msra.mxu0 0
    %2230 = vmatprep.subr.bf16.mxu0 0
    %2231 = vmatpush1.bf16.xpose.msra.mxu0 0
    %2232 = vmatprep.subr.bf16.mxu0 0
    %2233 = vmatpush1.bf16.xpose.msra.mxu0 0
    %2234 = vmatprep.subr.bf16.mxu0 0
    %2235 = vmatpush1.bf16.xpose.msra.mxu0 0
    %2236 = vmatprep.subr.bf16.mxu0 0
    %2237 = vmatpush1.bf16.xpose.msra.mxu0 0
    %2238 = vmatprep.subr.bf16.mxu0 0
    %2239 = vmatpush1.bf16.xpose.msra.mxu0 0
    %2240 = vmatprep.mubr.bf16.mxu0 0
    %2241 = vmatmul.mubr.bf16.gmra.mrb[0].mxu0 %v2203
    %v2242 = vpop.f32.mrb[0].mxu0
    %v2243 = vadd.f32 %v456, %v2242
    %v2244 = vpop.f32.mrb[0].mxu0
    %v2245 = vpop.f32.mrb[0].mxu0
    %v2246 = vpop.f32.mrb[0].mxu0
    %2247 = vdwg.mxu0
    %2249 = vrot.lane.b32.xlu0 %v1952, 96
    %v2250 = vpop.permute.xlu0 %2249
    %v2252 = vsel %vm476, %v1944, 0
    %v2255 = vsel %vm476, %v2250, 0
    %2257 = vmatprep.subr.bf16.mxu0 0
    %2258 = vmatpush1.bf16.xpose.msra.mxu0 %v2255
    %2259 = vmatprep.subr.bf16.mxu0 0
    %2260 = vmatpush1.bf16.xpose.msra.mxu0 0
    %2261 = vmatprep.subr.bf16.mxu0 0
    %2262 = vmatpush1.bf16.xpose.msra.mxu0 0
    %2263 = vmatprep.subr.bf16.mxu0 0
    %2264 = vmatpush1.bf16.xpose.msra.mxu0 0
    %2265 = vmatprep.subr.bf16.mxu0 0
    %2266 = vmatpush1.bf16.xpose.msra.mxu0 0
    %2267 = vmatprep.subr.bf16.mxu0 0
    %2268 = vmatpush1.bf16.xpose.msra.mxu0 0
    %2269 = vmatprep.subr.bf16.mxu0 0
    %2270 = vmatpush1.bf16.xpose.msra.mxu0 0
    %2271 = vmatprep.subr.bf16.mxu0 0
    %2272 = vmatpush1.bf16.xpose.msra.mxu0 0
    %2273 = vmatprep.subr.bf16.mxu0 0
    %2274 = vmatpush1.bf16.xpose.msra.mxu0 0
    %2275 = vmatprep.subr.bf16.mxu0 0
    %2276 = vmatpush1.bf16.xpose.msra.mxu0 0
    %2277 = vmatprep.subr.bf16.mxu0 0
    %2278 = vmatpush1.bf16.xpose.msra.mxu0 0
    %2279 = vmatprep.subr.bf16.mxu0 0
    %2280 = vmatpush1.bf16.xpose.msra.mxu0 0
    %2281 = vmatprep.subr.bf16.mxu0 0
    %2282 = vmatpush1.bf16.xpose.msra.mxu0 0
    %2283 = vmatprep.subr.bf16.mxu0 0
    %2284 = vmatpush1.bf16.xpose.msra.mxu0 0
    %2285 = vmatprep.subr.bf16.mxu0 0
    %2286 = vmatpush1.bf16.xpose.msra.mxu0 0
    %2287 = vmatprep.subr.bf16.mxu0 0
    %2288 = vmatpush1.bf16.xpose.msra.mxu0 0
    %2289 = vmatprep.mubr.bf16.mxu0 0
    %2290 = vmatmul.mubr.bf16.gmra.mrb[0].mxu0 %v2252
    %v2291 = vpop.f32.mrb[0].mxu0
    %v2292 = vadd.f32 %v460, %v2291
    %v2293 = vpop.f32.mrb[0].mxu0
    %v2294 = vpop.f32.mrb[0].mxu0
    %v2295 = vpop.f32.mrb[0].mxu0
    %2296 = vdwg.mxu0
    %2298 = vrot.lane.b32.xlu0 %v1953, 96
    %v2299 = vpop.permute.xlu0 %2298
    %v2301 = vsel %vm476, %v1945, 0
    %v2304 = vsel %vm476, %v2299, 0
    %2306 = vmatprep.subr.bf16.mxu0 0
    %2307 = vmatpush1.bf16.xpose.msra.mxu0 %v2304
    %2308 = vmatprep.subr.bf16.mxu0 0
    %2309 = vmatpush1.bf16.xpose.msra.mxu0 0
    %2310 = vmatprep.subr.bf16.mxu0 0
    %2311 = vmatpush1.bf16.xpose.msra.mxu0 0
    %2312 = vmatprep.subr.bf16.mxu0 0
    %2313 = vmatpush1.bf16.xpose.msra.mxu0 0
    %2314 = vmatprep.subr.bf16.mxu0 0
    %2315 = vmatpush1.bf16.xpose.msra.mxu0 0
    %2316 = vmatprep.subr.bf16.mxu0 0
    %2317 = vmatpush1.bf16.xpose.msra.mxu0 0
    %2318 = vmatprep.subr.bf16.mxu0 0
    %2319 = vmatpush1.bf16.xpose.msra.mxu0 0
    %2320 = vmatprep.subr.bf16.mxu0 0
    %2321 = vmatpush1.bf16.xpose.msra.mxu0 0
    %2322 = vmatprep.subr.bf16.mxu0 0
    %2323 = vmatpush1.bf16.xpose.msra.mxu0 0
    %2324 = vmatprep.subr.bf16.mxu0 0
    %2325 = vmatpush1.bf16.xpose.msra.mxu0 0
    %2326 = vmatprep.subr.bf16.mxu0 0
    %2327 = vmatpush1.bf16.xpose.msra.mxu0 0
    %2328 = vmatprep.subr.bf16.mxu0 0
    %2329 = vmatpush1.bf16.xpose.msra.mxu0 0
    %2330 = vmatprep.subr.bf16.mxu0 0
    %2331 = vmatpush1.bf16.xpose.msra.mxu0 0
    %2332 = vmatprep.subr.bf16.mxu0 0
    %2333 = vmatpush1.bf16.xpose.msra.mxu0 0
    %2334 = vmatprep.subr.bf16.mxu0 0
    %2335 = vmatpush1.bf16.xpose.msra.mxu0 0
    %2336 = vmatprep.subr.bf16.mxu0 0
    %2337 = vmatpush1.bf16.xpose.msra.mxu0 0
    %2338 = vmatprep.mubr.bf16.mxu0 0
    %2339 = vmatmul.mubr.bf16.gmra.mrb[0].mxu0 %v2301
    %v2340 = vpop.f32.mrb[0].mxu0
    %v2341 = vadd.f32 %v464, %v2340
    %v2342 = vpop.f32.mrb[0].mxu0
    %v2343 = vpop.f32.mrb[0].mxu0
    %v2344 = vpop.f32.mrb[0].mxu0
    %2345 = vdwg.mxu0
    %v2346 = vsel %vm476, %v1998, -inf
    %2347 = vmax.xlane.f32.xlu0 %v2346
    %v2348 = vpop.xlane.xlu0 %2347
    %v2349 = vsel %vm476, %v2047, -inf
    %2350 = vmax.xlane.f32.xlu0 %v2349
    %v2351 = vpop.xlane.xlu0 %2350
    %v2352 = vsel %vm476, %v2096, -inf
    %2353 = vmax.xlane.f32.xlu0 %v2352
    %v2354 = vpop.xlane.xlu0 %2353
    %v2355 = vsel %vm476, %v2145, -inf
    %2356 = vmax.xlane.f32.xlu0 %v2355
    %v2357 = vpop.xlane.xlu0 %2356
    %v2358 = vsel %vm476, %v2194, -inf
    %2359 = vmax.xlane.f32.xlu0 %v2358
    %v2360 = vpop.xlane.xlu0 %2359
    %v2361 = vsel %vm476, %v2243, -inf
    %2362 = vmax.xlane.f32.xlu0 %v2361
    %v2363 = vpop.xlane.xlu0 %2362
    %v2364 = vsel %vm476, %v2292, -inf
    %2365 = vmax.xlane.f32.xlu0 %v2364
    %v2366 = vpop.xlane.xlu0 %2365
    %v2367 = vsel %vm476, %v2341, -inf
    %2368 = vmax.xlane.f32.xlu0 %v2367
    %v2369 = vpop.xlane.xlu0 %2368
    %v2370 = vsub.f32 %v1998, %v2348
    %v2371 = vsub.f32 %v2047, %v2351
    %v2372 = vsub.f32 %v2096, %v2354
    %v2373 = vsub.f32 %v2145, %v2357
    %v2374 = vsub.f32 %v2194, %v2360
    %v2375 = vsub.f32 %v2243, %v2363
    %v2376 = vsub.f32 %v2292, %v2366
    %v2377 = vsub.f32 %v2341, %v2369
    %v2378 = vmul.f32 %v2370, 1.442695
    %v2379 = vpow.pop %v2378
    %v2380 = vmul.f32 %v2371, 1.442695
    %v2381 = vpow.pop %v2380
    %v2382 = vmul.f32 %v2372, 1.442695
    %v2383 = vpow.pop %v2382
    %v2384 = vmul.f32 %v2373, 1.442695
    %v2385 = vpow.pop %v2384
    %v2386 = vmul.f32 %v2374, 1.442695
    %v2387 = vpow.pop %v2386
    %v2388 = vmul.f32 %v2375, 1.442695
    %v2389 = vpow.pop %v2388
    %v2390 = vmul.f32 %v2376, 1.442695
    %v2391 = vpow.pop %v2390
    %v2392 = vmul.f32 %v2377, 1.442695
    %v2393 = vpow.pop %v2392
    %v2394 = vsel %vm476, %v2379, 0.0
    %2395 = vadd.xlane.f32.xlu0 %v2394
    %v2396 = vpop.xlane.xlu0 %2395
    %v2397 = vsel %vm476, %v2381, 0.0
    %2398 = vadd.xlane.f32.xlu0 %v2397
    %v2399 = vpop.xlane.xlu0 %2398
    %v2400 = vsel %vm476, %v2383, 0.0
    %2401 = vadd.xlane.f32.xlu0 %v2400
    %v2402 = vpop.xlane.xlu0 %2401
    %v2403 = vsel %vm476, %v2385, 0.0
    %2404 = vadd.xlane.f32.xlu0 %v2403
    %v2405 = vpop.xlane.xlu0 %2404
    %v2406 = vsel %vm476, %v2387, 0.0
    %2407 = vadd.xlane.f32.xlu0 %v2406
    %v2408 = vpop.xlane.xlu0 %2407
    %v2409 = vsel %vm476, %v2389, 0.0
    %2410 = vadd.xlane.f32.xlu0 %v2409
    %v2411 = vpop.xlane.xlu0 %2410
    %v2412 = vsel %vm476, %v2391, 0.0
    %2413 = vadd.xlane.f32.xlu0 %v2412
    %v2414 = vpop.xlane.xlu0 %2413
    %v2415 = vsel %vm476, %v2393, 0.0
    %2416 = vadd.xlane.f32.xlu0 %v2415
    %v2417 = vpop.xlane.xlu0 %2416
    %v2418 = vrcp.pop %v2396
    %v2419 = vrcp.pop %v2399
    %v2420 = vrcp.pop %v2402
    %v2421 = vrcp.pop %v2405
    %v2422 = vrcp.pop %v2408
    %v2423 = vrcp.pop %v2411
    %v2424 = vrcp.pop %v2414
    %v2425 = vrcp.pop %v2417
    %v2426 = vmul.f32 %v2379, %v2418
    %v2427 = vmul.f32 %v2381, %v2419
    %v2428 = vmul.f32 %v2383, %v2420
    %v2429 = vmul.f32 %v2385, %v2421
    %v2430 = vmul.f32 %v2387, %v2422
    %v2431 = vmul.f32 %v2389, %v2423
    %v2432 = vmul.f32 %v2391, %v2424
    %v2433 = vmul.f32 %v2393, %v2425
    %v2434 = vpack.c.bf16 %v2426, %v2426
    %v2435 = vpack.c.bf16 %v2427, %v2427
    %v2436 = vpack.c.bf16 %v2428, %v2428
    %v2437 = vpack.c.bf16 %v2429, %v2429
    %v2438 = vpack.c.bf16 %v2430, %v2430
    %v2439 = vpack.c.bf16 %v2431, %v2431
    %v2440 = vpack.c.bf16 %v2432, %v2432
    %v2441 = vpack.c.bf16 %v2433, %v2433
    %2442 = vrot.lane.b32.xlu0 %v1946, 64
    %v2443 = vpop.permute.xlu0 %2442
    %v2445 = vsel %vm476, %v2434, 0
    %v2448 = vsel %vm967, %v2443, 0
    %2450 = vmatprep.subr.bf16.mxu0 0
    %2451 = vmatpush1.bf16.msra.mxu0 %v2448
    %2452 = vmatprep.subr.bf16.mxu0 0
    %2453 = vmatpush1.bf16.msra.mxu0 0
    %2454 = vmatprep.subr.bf16.mxu0 0
    %2455 = vmatpush1.bf16.msra.mxu0 0
    %2456 = vmatprep.subr.bf16.mxu0 0
    %2457 = vmatpush1.bf16.msra.mxu0 0
    %2458 = vmatprep.subr.bf16.mxu0 0
    %2459 = vmatpush1.bf16.msra.mxu0 0
    %2460 = vmatprep.subr.bf16.mxu0 0
    %2461 = vmatpush1.bf16.msra.mxu0 0
    %2462 = vmatprep.subr.bf16.mxu0 0
    %2463 = vmatpush1.bf16.msra.mxu0 0
    %2464 = vmatprep.subr.bf16.mxu0 0
    %2465 = vmatpush1.bf16.msra.mxu0 0
    %2466 = vmatprep.subr.bf16.mxu0 0
    %2467 = vmatpush1.bf16.msra.mxu0 0
    %2468 = vmatprep.subr.bf16.mxu0 0
    %2469 = vmatpush1.bf16.msra.mxu0 0
    %2470 = vmatprep.subr.bf16.mxu0 0
    %2471 = vmatpush1.bf16.msra.mxu0 0
    %2472 = vmatprep.subr.bf16.mxu0 0
    %2473 = vmatpush1.bf16.msra.mxu0 0
    %2474 = vmatprep.subr.bf16.mxu0 0
    %2475 = vmatpush1.bf16.msra.mxu0 0
    %2476 = vmatprep.subr.bf16.mxu0 0
    %2477 = vmatpush1.bf16.msra.mxu0 0
    %2478 = vmatprep.subr.bf16.mxu0 0
    %2479 = vmatpush1.bf16.msra.mxu0 0
    %2480 = vmatprep.subr.bf16.mxu0 0
    %2481 = vmatpush1.bf16.msra.mxu0 0
    %2482 = vmatprep.mubr.bf16.mxu0 0
    %2483 = vmatmul.mubr.bf16.gmra.mrb[0].mxu0 %v2445
    %v2484 = vpop.f32.mrb[0].mxu0
    %v2485 = vadd.f32 0.0, %v2484
    %v2486 = vpop.f32.mrb[0].mxu0
    %v2487 = vpop.f32.mrb[0].mxu0
    %v2488 = vpop.f32.mrb[0].mxu0
    %2489 = vdwg.mxu0
    %2490 = vrot.lane.b32.xlu0 %v1947, 64
    %v2491 = vpop.permute.xlu0 %2490
    %v2493 = vsel %vm476, %v2435, 0
    %v2496 = vsel %vm967, %v2491, 0
    %2498 = vmatprep.subr.bf16.mxu0 0
    %2499 = vmatpush1.bf16.msra.mxu0 %v2496
    %2500 = vmatprep.subr.bf16.mxu0 0
    %2501 = vmatpush1.bf16.msra.mxu0 0
    %2502 = vmatprep.subr.bf16.mxu0 0
    %2503 = vmatpush1.bf16.msra.mxu0 0
    %2504 = vmatprep.subr.bf16.mxu0 0
    %2505 = vmatpush1.bf16.msra.mxu0 0
    %2506 = vmatprep.subr.bf16.mxu0 0
    %2507 = vmatpush1.bf16.msra.mxu0 0
    %2508 = vmatprep.subr.bf16.mxu0 0
    %2509 = vmatpush1.bf16.msra.mxu0 0
    %2510 = vmatprep.subr.bf16.mxu0 0
    %2511 = vmatpush1.bf16.msra.mxu0 0
    %2512 = vmatprep.subr.bf16.mxu0 0
    %2513 = vmatpush1.bf16.msra.mxu0 0
    %2514 = vmatprep.subr.bf16.mxu0 0
    %2515 = vmatpush1.bf16.msra.mxu0 0
    %2516 = vmatprep.subr.bf16.mxu0 0
    %2517 = vmatpush1.bf16.msra.mxu0 0
    %2518 = vmatprep.subr.bf16.mxu0 0
    %2519 = vmatpush1.bf16.msra.mxu0 0
    %2520 = vmatprep.subr.bf16.mxu0 0
    %2521 = vmatpush1.bf16.msra.mxu0 0
    %2522 = vmatprep.subr.bf16.mxu0 0
    %2523 = vmatpush1.bf16.msra.mxu0 0
    %2524 = vmatprep.subr.bf16.mxu0 0
    %2525 = vmatpush1.bf16.msra.mxu0 0
    %2526 = vmatprep.subr.bf16.mxu0 0
    %2527 = vmatpush1.bf16.msra.mxu0 0
    %2528 = vmatprep.subr.bf16.mxu0 0
    %2529 = vmatpush1.bf16.msra.mxu0 0
    %2530 = vmatprep.mubr.bf16.mxu0 0
    %2531 = vmatmul.mubr.bf16.gmra.mrb[0].mxu0 %v2493
    %v2532 = vpop.f32.mrb[0].mxu0
    %v2533 = vadd.f32 0.0, %v2532
    %v2534 = vpop.f32.mrb[0].mxu0
    %v2535 = vpop.f32.mrb[0].mxu0
    %v2536 = vpop.f32.mrb[0].mxu0
    %2537 = vdwg.mxu0
    %2538 = vrot.lane.b32.xlu0 %v1948, 64
    %v2539 = vpop.permute.xlu0 %2538
    %v2541 = vsel %vm476, %v2436, 0
    %v2544 = vsel %vm967, %v2539, 0
    %2546 = vmatprep.subr.bf16.mxu0 0
    %2547 = vmatpush1.bf16.msra.mxu0 %v2544
    %2548 = vmatprep.subr.bf16.mxu0 0
    %2549 = vmatpush1.bf16.msra.mxu0 0
    %2550 = vmatprep.subr.bf16.mxu0 0
    %2551 = vmatpush1.bf16.msra.mxu0 0
    %2552 = vmatprep.subr.bf16.mxu0 0
    %2553 = vmatpush1.bf16.msra.mxu0 0
    %2554 = vmatprep.subr.bf16.mxu0 0
    %2555 = vmatpush1.bf16.msra.mxu0 0
    %2556 = vmatprep.subr.bf16.mxu0 0
    %2557 = vmatpush1.bf16.msra.mxu0 0
    %2558 = vmatprep.subr.bf16.mxu0 0
    %2559 = vmatpush1.bf16.msra.mxu0 0
    %2560 = vmatprep.subr.bf16.mxu0 0
    %2561 = vmatpush1.bf16.msra.mxu0 0
    %2562 = vmatprep.subr.bf16.mxu0 0
    %2563 = vmatpush1.bf16.msra.mxu0 0
    %2564 = vmatprep.subr.bf16.mxu0 0
    %2565 = vmatpush1.bf16.msra.mxu0 0
    %2566 = vmatprep.subr.bf16.mxu0 0
    %2567 = vmatpush1.bf16.msra.mxu0 0
    %2568 = vmatprep.subr.bf16.mxu0 0
    %2569 = vmatpush1.bf16.msra.mxu0 0
    %2570 = vmatprep.subr.bf16.mxu0 0
    %2571 = vmatpush1.bf16.msra.mxu0 0
    %2572 = vmatprep.subr.bf16.mxu0 0
    %2573 = vmatpush1.bf16.msra.mxu0 0
    %2574 = vmatprep.subr.bf16.mxu0 0
    %2575 = vmatpush1.bf16.msra.mxu0 0
    %2576 = vmatprep.subr.bf16.mxu0 0
    %2577 = vmatpush1.bf16.msra.mxu0 0
    %2578 = vmatprep.mubr.bf16.mxu0 0
    %2579 = vmatmul.mubr.bf16.gmra.mrb[0].mxu0 %v2541
    %v2580 = vpop.f32.mrb[0].mxu0
    %v2581 = vadd.f32 0.0, %v2580
    %v2582 = vpop.f32.mrb[0].mxu0
    %v2583 = vpop.f32.mrb[0].mxu0
    %v2584 = vpop.f32.mrb[0].mxu0
    %2585 = vdwg.mxu0
    %2586 = vrot.lane.b32.xlu0 %v1949, 64
    %v2587 = vpop.permute.xlu0 %2586
    %v2589 = vsel %vm476, %v2437, 0
    %v2592 = vsel %vm967, %v2587, 0
    %2594 = vmatprep.subr.bf16.mxu0 0
    %2595 = vmatpush1.bf16.msra.mxu0 %v2592
    %2596 = vmatprep.subr.bf16.mxu0 0
    %2597 = vmatpush1.bf16.msra.mxu0 0
    %2598 = vmatprep.subr.bf16.mxu0 0
    %2599 = vmatpush1.bf16.msra.mxu0 0
    %2600 = vmatprep.subr.bf16.mxu0 0
    %2601 = vmatpush1.bf16.msra.mxu0 0
    %2602 = vmatprep.subr.bf16.mxu0 0
    %2603 = vmatpush1.bf16.msra.mxu0 0
    %2604 = vmatprep.subr.bf16.mxu0 0
    %2605 = vmatpush1.bf16.msra.mxu0 0
    %2606 = vmatprep.subr.bf16.mxu0 0
    %2607 = vmatpush1.bf16.msra.mxu0 0
    %2608 = vmatprep.subr.bf16.mxu0 0
    %2609 = vmatpush1.bf16.msra.mxu0 0
    %2610 = vmatprep.subr.bf16.mxu0 0
    %2611 = vmatpush1.bf16.msra.mxu0 0
    %2612 = vmatprep.subr.bf16.mxu0 0
    %2613 = vmatpush1.bf16.msra.mxu0 0
    %2614 = vmatprep.subr.bf16.mxu0 0
    %2615 = vmatpush1.bf16.msra.mxu0 0
    %2616 = vmatprep.subr.bf16.mxu0 0
    %2617 = vmatpush1.bf16.msra.mxu0 0
    %2618 = vmatprep.subr.bf16.mxu0 0
    %2619 = vmatpush1.bf16.msra.mxu0 0
    %2620 = vmatprep.subr.bf16.mxu0 0
    %2621 = vmatpush1.bf16.msra.mxu0 0
    %2622 = vmatprep.subr.bf16.mxu0 0
    %2623 = vmatpush1.bf16.msra.mxu0 0
    %2624 = vmatprep.subr.bf16.mxu0 0
    %2625 = vmatpush1.bf16.msra.mxu0 0
    %2626 = vmatprep.mubr.bf16.mxu0 0
    %2627 = vmatmul.mubr.bf16.gmra.mrb[0].mxu0 %v2589
    %v2628 = vpop.f32.mrb[0].mxu0
    %v2629 = vadd.f32 0.0, %v2628
    %v2630 = vpop.f32.mrb[0].mxu0
    %v2631 = vpop.f32.mrb[0].mxu0
    %v2632 = vpop.f32.mrb[0].mxu0
    %2633 = vdwg.mxu0
    %2634 = vrot.lane.b32.xlu0 %v1950, 64
    %v2635 = vpop.permute.xlu0 %2634
    %v2637 = vsel %vm476, %v2438, 0
    %v2640 = vsel %vm967, %v2635, 0
    %2642 = vmatprep.subr.bf16.mxu0 0
    %2643 = vmatpush1.bf16.msra.mxu0 %v2640
    %2644 = vmatprep.subr.bf16.mxu0 0
    %2645 = vmatpush1.bf16.msra.mxu0 0
    %2646 = vmatprep.subr.bf16.mxu0 0
    %2647 = vmatpush1.bf16.msra.mxu0 0
    %2648 = vmatprep.subr.bf16.mxu0 0
    %2649 = vmatpush1.bf16.msra.mxu0 0
    %2650 = vmatprep.subr.bf16.mxu0 0
    %2651 = vmatpush1.bf16.msra.mxu0 0
    %2652 = vmatprep.subr.bf16.mxu0 0
    %2653 = vmatpush1.bf16.msra.mxu0 0
    %2654 = vmatprep.subr.bf16.mxu0 0
    %2655 = vmatpush1.bf16.msra.mxu0 0
    %2656 = vmatprep.subr.bf16.mxu0 0
    %2657 = vmatpush1.bf16.msra.mxu0 0
    %2658 = vmatprep.subr.bf16.mxu0 0
    %2659 = vmatpush1.bf16.msra.mxu0 0
    %2660 = vmatprep.subr.bf16.mxu0 0
    %2661 = vmatpush1.bf16.msra.mxu0 0
    %2662 = vmatprep.subr.bf16.mxu0 0
    %2663 = vmatpush1.bf16.msra.mxu0 0
    %2664 = vmatprep.subr.bf16.mxu0 0
    %2665 = vmatpush1.bf16.msra.mxu0 0
    %2666 = vmatprep.subr.bf16.mxu0 0
    %2667 = vmatpush1.bf16.msra.mxu0 0
    %2668 = vmatprep.subr.bf16.mxu0 0
    %2669 = vmatpush1.bf16.msra.mxu0 0
    %2670 = vmatprep.subr.bf16.mxu0 0
    %2671 = vmatpush1.bf16.msra.mxu0 0
    %2672 = vmatprep.subr.bf16.mxu0 0
    %2673 = vmatpush1.bf16.msra.mxu0 0
    %2674 = vmatprep.mubr.bf16.mxu0 0
    %2675 = vmatmul.mubr.bf16.gmra.mrb[0].mxu0 %v2637
    %v2676 = vpop.f32.mrb[0].mxu0
    %v2677 = vadd.f32 0.0, %v2676
    %v2678 = vpop.f32.mrb[0].mxu0
    %v2679 = vpop.f32.mrb[0].mxu0
    %v2680 = vpop.f32.mrb[0].mxu0
    %2681 = vdwg.mxu0
    %2682 = vrot.lane.b32.xlu0 %v1951, 64
    %v2683 = vpop.permute.xlu0 %2682
    %v2685 = vsel %vm476, %v2439, 0
    %v2688 = vsel %vm967, %v2683, 0
    %2690 = vmatprep.subr.bf16.mxu0 0
    %2691 = vmatpush1.bf16.msra.mxu0 %v2688
    %2692 = vmatprep.subr.bf16.mxu0 0
    %2693 = vmatpush1.bf16.msra.mxu0 0
    %2694 = vmatprep.subr.bf16.mxu0 0
    %2695 = vmatpush1.bf16.msra.mxu0 0
    %2696 = vmatprep.subr.bf16.mxu0 0
    %2697 = vmatpush1.bf16.msra.mxu0 0
    %2698 = vmatprep.subr.bf16.mxu0 0
    %2699 = vmatpush1.bf16.msra.mxu0 0
    %2700 = vmatprep.subr.bf16.mxu0 0
    %2701 = vmatpush1.bf16.msra.mxu0 0
    %2702 = vmatprep.subr.bf16.mxu0 0
    %2703 = vmatpush1.bf16.msra.mxu0 0
    %2704 = vmatprep.subr.bf16.mxu0 0
    %2705 = vmatpush1.bf16.msra.mxu0 0
    %2706 = vmatprep.subr.bf16.mxu0 0
    %2707 = vmatpush1.bf16.msra.mxu0 0
    %2708 = vmatprep.subr.bf16.mxu0 0
    %2709 = vmatpush1.bf16.msra.mxu0 0
    %2710 = vmatprep.subr.bf16.mxu0 0
    %2711 = vmatpush1.bf16.msra.mxu0 0
    %2712 = vmatprep.subr.bf16.mxu0 0
    %2713 = vmatpush1.bf16.msra.mxu0 0
    %2714 = vmatprep.subr.bf16.mxu0 0
    %2715 = vmatpush1.bf16.msra.mxu0 0
    %2716 = vmatprep.subr.bf16.mxu0 0
    %2717 = vmatpush1.bf16.msra.mxu0 0
    %2718 = vmatprep.subr.bf16.mxu0 0
    %2719 = vmatpush1.bf16.msra.mxu0 0
    %2720 = vmatprep.subr.bf16.mxu0 0
    %2721 = vmatpush1.bf16.msra.mxu0 0
    %2722 = vmatprep.mubr.bf16.mxu0 0
    %2723 = vmatmul.mubr.bf16.gmra.mrb[0].mxu0 %v2685
    %v2724 = vpop.f32.mrb[0].mxu0
    %v2725 = vadd.f32 0.0, %v2724
    %v2726 = vpop.f32.mrb[0].mxu0
    %v2727 = vpop.f32.mrb[0].mxu0
    %v2728 = vpop.f32.mrb[0].mxu0
    %2729 = vdwg.mxu0
    %2730 = vrot.lane.b32.xlu0 %v1952, 64
    %v2731 = vpop.permute.xlu0 %2730
    %v2733 = vsel %vm476, %v2440, 0
    %v2736 = vsel %vm967, %v2731, 0
    %2738 = vmatprep.subr.bf16.mxu0 0
    %2739 = vmatpush1.bf16.msra.mxu0 %v2736
    %2740 = vmatprep.subr.bf16.mxu0 0
    %2741 = vmatpush1.bf16.msra.mxu0 0
    %2742 = vmatprep.subr.bf16.mxu0 0
    %2743 = vmatpush1.bf16.msra.mxu0 0
    %2744 = vmatprep.subr.bf16.mxu0 0
    %2745 = vmatpush1.bf16.msra.mxu0 0
    %2746 = vmatprep.subr.bf16.mxu0 0
    %2747 = vmatpush1.bf16.msra.mxu0 0
    %2748 = vmatprep.subr.bf16.mxu0 0
    %2749 = vmatpush1.bf16.msra.mxu0 0
    %2750 = vmatprep.subr.bf16.mxu0 0
    %2751 = vmatpush1.bf16.msra.mxu0 0
    %2752 = vmatprep.subr.bf16.mxu0 0
    %2753 = vmatpush1.bf16.msra.mxu0 0
    %2754 = vmatprep.subr.bf16.mxu0 0
    %2755 = vmatpush1.bf16.msra.mxu0 0
    %2756 = vmatprep.subr.bf16.mxu0 0
    %2757 = vmatpush1.bf16.msra.mxu0 0
    %2758 = vmatprep.subr.bf16.mxu0 0
    %2759 = vmatpush1.bf16.msra.mxu0 0
    %2760 = vmatprep.subr.bf16.mxu0 0
    %2761 = vmatpush1.bf16.msra.mxu0 0
    %2762 = vmatprep.subr.bf16.mxu0 0
    %2763 = vmatpush1.bf16.msra.mxu0 0
    %2764 = vmatprep.subr.bf16.mxu0 0
    %2765 = vmatpush1.bf16.msra.mxu0 0
    %2766 = vmatprep.subr.bf16.mxu0 0
    %2767 = vmatpush1.bf16.msra.mxu0 0
    %2768 = vmatprep.subr.bf16.mxu0 0
    %2769 = vmatpush1.bf16.msra.mxu0 0
    %2770 = vmatprep.mubr.bf16.mxu0 0
    %2771 = vmatmul.mubr.bf16.gmra.mrb[0].mxu0 %v2733
    %v2772 = vpop.f32.mrb[0].mxu0
    %v2773 = vadd.f32 0.0, %v2772
    %v2774 = vpop.f32.mrb[0].mxu0
    %v2775 = vpop.f32.mrb[0].mxu0
    %v2776 = vpop.f32.mrb[0].mxu0
    %2777 = vdwg.mxu0
    %2778 = vrot.lane.b32.xlu0 %v1953, 64
    %v2779 = vpop.permute.xlu0 %2778
    %v2781 = vsel %vm476, %v2441, 0
    %v2784 = vsel %vm967, %v2779, 0
    %2786 = vmatprep.subr.bf16.mxu0 0
    %2787 = vmatpush1.bf16.msra.mxu0 %v2784
    %2788 = vmatprep.subr.bf16.mxu0 0
    %2789 = vmatpush1.bf16.msra.mxu0 0
    %2790 = vmatprep.subr.bf16.mxu0 0
    %2791 = vmatpush1.bf16.msra.mxu0 0
    %2792 = vmatprep.subr.bf16.mxu0 0
    %2793 = vmatpush1.bf16.msra.mxu0 0
    %2794 = vmatprep.subr.bf16.mxu0 0
    %2795 = vmatpush1.bf16.msra.mxu0 0
    %2796 = vmatprep.subr.bf16.mxu0 0
    %2797 = vmatpush1.bf16.msra.mxu0 0
    %2798 = vmatprep.subr.bf16.mxu0 0
    %2799 = vmatpush1.bf16.msra.mxu0 0
    %2800 = vmatprep.subr.bf16.mxu0 0
    %2801 = vmatpush1.bf16.msra.mxu0 0
    %2802 = vmatprep.subr.bf16.mxu0 0
    %2803 = vmatpush1.bf16.msra.mxu0 0
    %2804 = vmatprep.subr.bf16.mxu0 0
    %2805 = vmatpush1.bf16.msra.mxu0 0
    %2806 = vmatprep.subr.bf16.mxu0 0
    %2807 = vmatpush1.bf16.msra.mxu0 0
    %2808 = vmatprep.subr.bf16.mxu0 0
    %2809 = vmatpush1.bf16.msra.mxu0 0
    %2810 = vmatprep.subr.bf16.mxu0 0
    %2811 = vmatpush1.bf16.msra.mxu0 0
    %2812 = vmatprep.subr.bf16.mxu0 0
    %2813 = vmatpush1.bf16.msra.mxu0 0
    %2814 = vmatprep.subr.bf16.mxu0 0
    %2815 = vmatpush1.bf16.msra.mxu0 0
    %2816 = vmatprep.subr.bf16.mxu0 0
    %2817 = vmatpush1.bf16.msra.mxu0 0
    %2818 = vmatprep.mubr.bf16.mxu0 0
    %2819 = vmatmul.mubr.bf16.gmra.mrb[0].mxu0 %v2781
    %v2820 = vpop.f32.mrb[0].mxu0
    %v2821 = vadd.f32 0.0, %v2820
    %v2822 = vpop.f32.mrb[0].mxu0
    %v2823 = vpop.f32.mrb[0].mxu0
    %v2824 = vpop.f32.mrb[0].mxu0
    %2825 = vdwg.mxu0
    %s2826 = scalar_lea.vmem [#allocation11], 1
    %v2827 = vld [vmem:[%s2826] sm:$0x1]
    %s2828 = scalar_lea.vmem %s6, 16
    %v2829 = vld [vmem:[%s2828] sm:$0xf]
    %v2830 = vpack.c.bf16 %v2533, %v2485
    %v2832 = vsel %vm476, %v2830, 0
    %v2835 = vsel %vm967, %v2829, 0
    %2837 = vmatprep.subr.bf16.mxu0 0
    %2838 = vmatpush1.bf16.msra.mxu0 %v2835
    %2839 = vmatprep.subr.bf16.mxu0 0
    %2840 = vmatpush1.bf16.msra.mxu0 0
    %2841 = vmatprep.subr.bf16.mxu0 0
    %2842 = vmatpush1.bf16.msra.mxu0 0
    %2843 = vmatprep.subr.bf16.mxu0 0
    %2844 = vmatpush1.bf16.msra.mxu0 0
    %2845 = vmatprep.subr.bf16.mxu0 0
    %2846 = vmatpush1.bf16.msra.mxu0 0
    %2847 = vmatprep.subr.bf16.mxu0 0
    %2848 = vmatpush1.bf16.msra.mxu0 0
    %2849 = vmatprep.subr.bf16.mxu0 0
    %2850 = vmatpush1.bf16.msra.mxu0 0
    %2851 = vmatprep.subr.bf16.mxu0 0
    %2852 = vmatpush1.bf16.msra.mxu0 0
    %2853 = vmatprep.subr.bf16.mxu0 0
    %2854 = vmatpush1.bf16.msra.mxu0 0
    %2855 = vmatprep.subr.bf16.mxu0 0
    %2856 = vmatpush1.bf16.msra.mxu0 0
    %2857 = vmatprep.subr.bf16.mxu0 0
    %2858 = vmatpush1.bf16.msra.mxu0 0
    %2859 = vmatprep.subr.bf16.mxu0 0
    %2860 = vmatpush1.bf16.msra.mxu0 0
    %2861 = vmatprep.subr.bf16.mxu0 0
    %2862 = vmatpush1.bf16.msra.mxu0 0
    %2863 = vmatprep.subr.bf16.mxu0 0
    %2864 = vmatpush1.bf16.msra.mxu0 0
    %2865 = vmatprep.subr.bf16.mxu0 0
    %2866 = vmatpush1.bf16.msra.mxu0 0
    %2867 = vmatprep.subr.bf16.mxu0 0
    %2868 = vmatpush1.bf16.msra.mxu0 0
    %2869 = vmatprep.mubr.bf16.mxu0 0
    %2870 = vmatmul.mubr.bf16.gmra.mrb[0].mxu0 %v2832
    %v2871 = vpop.f32.mrb[0].mxu0
    %v2872 = vadd.f32 0.0, %v2871
    %v2873 = vpop.f32.mrb[0].mxu0
    %v2874 = vpop.f32.mrb[0].mxu0
    %v2875 = vadd.f32 0.0, %v2874
    %v2876 = vpop.f32.mrb[0].mxu0
    %2877 = vdwg.mxu0
    %v2879 = vlaneseq
    %v2880 = vshrl.u32 %v2879, 7
    %v2881 = vsub.s32 0, %v2880
    %v2882 = vrot.slane %v2827, %v2881
    %v2884 = vadd.f32 %v2882, %v2872
    %v2885 = vadd.f32 %v2882, %v2875
    %s2886 = scalar_lea.vmem %s6, 20
    %v2887 = vld [vmem:[%s2886] sm:$0xf]
    %v2888 = vpack.c.bf16 %v2629, %v2581
    %v2890 = vsel %vm476, %v2888, 0
    %v2893 = vsel %vm967, %v2887, 0
    %2895 = vmatprep.subr.bf16.mxu0 0
    %2896 = vmatpush1.bf16.msra.mxu0 %v2893
    %2897 = vmatprep.subr.bf16.mxu0 0
    %2898 = vmatpush1.bf16.msra.mxu0 0
    %2899 = vmatprep.subr.bf16.mxu0 0
    %2900 = vmatpush1.bf16.msra.mxu0 0
    %2901 = vmatprep.subr.bf16.mxu0 0
    %2902 = vmatpush1.bf16.msra.mxu0 0
    %2903 = vmatprep.subr.bf16.mxu0 0
    %2904 = vmatpush1.bf16.msra.mxu0 0
    %2905 = vmatprep.subr.bf16.mxu0 0
    %2906 = vmatpush1.bf16.msra.mxu0 0
    %2907 = vmatprep.subr.bf16.mxu0 0
    %2908 = vmatpush1.bf16.msra.mxu0 0
    %2909 = vmatprep.subr.bf16.mxu0 0
    %2910 = vmatpush1.bf16.msra.mxu0 0
    %2911 = vmatprep.subr.bf16.mxu0 0
    %2912 = vmatpush1.bf16.msra.mxu0 0
    %2913 = vmatprep.subr.bf16.mxu0 0
    %2914 = vmatpush1.bf16.msra.mxu0 0
    %2915 = vmatprep.subr.bf16.mxu0 0
    %2916 = vmatpush1.bf16.msra.mxu0 0
    %2917 = vmatprep.subr.bf16.mxu0 0
    %2918 = vmatpush1.bf16.msra.mxu0 0
    %2919 = vmatprep.subr.bf16.mxu0 0
    %2920 = vmatpush1.bf16.msra.mxu0 0
    %2921 = vmatprep.subr.bf16.mxu0 0
    %2922 = vmatpush1.bf16.msra.mxu0 0
    %2923 = vmatprep.subr.bf16.mxu0 0
    %2924 = vmatpush1.bf16.msra.mxu0 0
    %2925 = vmatprep.subr.bf16.mxu0 0
    %2926 = vmatpush1.bf16.msra.mxu0 0
    %2927 = vmatprep.mubr.bf16.mxu0 0
    %2928 = vmatmul.mubr.bf16.gmra.mrb[0].mxu0 %v2890
    %v2929 = vpop.f32.mrb[0].mxu0
    %v2930 = vadd.f32 0.0, %v2929
    %v2931 = vpop.f32.mrb[0].mxu0
    %v2932 = vpop.f32.mrb[0].mxu0
    %v2933 = vadd.f32 0.0, %v2932
    %v2934 = vpop.f32.mrb[0].mxu0
    %2935 = vdwg.mxu0
    %v2936 = vadd.f32 %v2884, %v2930
    %v2937 = vadd.f32 %v2885, %v2933
    %s2938 = scalar_lea.vmem %s6, 24
    %v2939 = vld [vmem:[%s2938] sm:$0xf]
    %v2940 = vpack.c.bf16 %v2725, %v2677
    %v2942 = vsel %vm476, %v2940, 0
    %v2945 = vsel %vm967, %v2939, 0
    %2947 = vmatprep.subr.bf16.mxu0 0
    %2948 = vmatpush1.bf16.msra.mxu0 %v2945
    %2949 = vmatprep.subr.bf16.mxu0 0
    %2950 = vmatpush1.bf16.msra.mxu0 0
    %2951 = vmatprep.subr.bf16.mxu0 0
    %2952 = vmatpush1.bf16.msra.mxu0 0
    %2953 = vmatprep.subr.bf16.mxu0 0
    %2954 = vmatpush1.bf16.msra.mxu0 0
    %2955 = vmatprep.subr.bf16.mxu0 0
    %2956 = vmatpush1.bf16.msra.mxu0 0
    %2957 = vmatprep.subr.bf16.mxu0 0
    %2958 = vmatpush1.bf16.msra.mxu0 0
    %2959 = vmatprep.subr.bf16.mxu0 0
    %2960 = vmatpush1.bf16.msra.mxu0 0
    %2961 = vmatprep.subr.bf16.mxu0 0
    %2962 = vmatpush1.bf16.msra.mxu0 0
    %2963 = vmatprep.subr.bf16.mxu0 0
    %2964 = vmatpush1.bf16.msra.mxu0 0
    %2965 = vmatprep.subr.bf16.mxu0 0
    %2966 = vmatpush1.bf16.msra.mxu0 0
    %2967 = vmatprep.subr.bf16.mxu0 0
    %2968 = vmatpush1.bf16.msra.mxu0 0
    %2969 = vmatprep.subr.bf16.mxu0 0
    %2970 = vmatpush1.bf16.msra.mxu0 0
    %2971 = vmatprep.subr.bf16.mxu0 0
    %2972 = vmatpush1.bf16.msra.mxu0 0
    %2973 = vmatprep.subr.bf16.mxu0 0
    %2974 = vmatpush1.bf16.msra.mxu0 0
    %2975 = vmatprep.subr.bf16.mxu0 0
    %2976 = vmatpush1.bf16.msra.mxu0 0
    %2977 = vmatprep.subr.bf16.mxu0 0
    %2978 = vmatpush1.bf16.msra.mxu0 0
    %2979 = vmatprep.mubr.bf16.mxu0 0
    %2980 = vmatmul.mubr.bf16.gmra.mrb[0].mxu0 %v2942
    %v2981 = vpop.f32.mrb[0].mxu0
    %v2982 = vadd.f32 0.0, %v2981
    %v2983 = vpop.f32.mrb[0].mxu0
    %v2984 = vpop.f32.mrb[0].mxu0
    %v2985 = vadd.f32 0.0, %v2984
    %v2986 = vpop.f32.mrb[0].mxu0
    %2987 = vdwg.mxu0
    %v2988 = vadd.f32 %v2936, %v2982
    %v2989 = vadd.f32 %v2937, %v2985
    %s2990 = scalar_lea.vmem %s6, 28
    %v2991 = vld [vmem:[%s2990] sm:$0xf]
    %v2992 = vpack.c.bf16 %v2821, %v2773
    %v2994 = vsel %vm476, %v2992, 0
    %v2997 = vsel %vm967, %v2991, 0
    %2999 = vmatprep.subr.bf16.mxu0 0
    %3000 = vmatpush1.bf16.msra.mxu0 %v2997
    %3001 = vmatprep.subr.bf16.mxu0 0
    %3002 = vmatpush1.bf16.msra.mxu0 0
    %3003 = vmatprep.subr.bf16.mxu0 0
    %3004 = vmatpush1.bf16.msra.mxu0 0
    %3005 = vmatprep.subr.bf16.mxu0 0
    %3006 = vmatpush1.bf16.msra.mxu0 0
    %3007 = vmatprep.subr.bf16.mxu0 0
    %3008 = vmatpush1.bf16.msra.mxu0 0
    %3009 = vmatprep.subr.bf16.mxu0 0
    %3010 = vmatpush1.bf16.msra.mxu0 0
    %3011 = vmatprep.subr.bf16.mxu0 0
    %3012 = vmatpush1.bf16.msra.mxu0 0
    %3013 = vmatprep.subr.bf16.mxu0 0
    %3014 = vmatpush1.bf16.msra.mxu0 0
    %3015 = vmatprep.subr.bf16.mxu0 0
    %3016 = vmatpush1.bf16.msra.mxu0 0
    %3017 = vmatprep.subr.bf16.mxu0 0
    %3018 = vmatpush1.bf16.msra.mxu0 0
    %3019 = vmatprep.subr.bf16.mxu0 0
    %3020 = vmatpush1.bf16.msra.mxu0 0
    %3021 = vmatprep.subr.bf16.mxu0 0
    %3022 = vmatpush1.bf16.msra.mxu0 0
    %3023 = vmatprep.subr.bf16.mxu0 0
    %3024 = vmatpush1.bf16.msra.mxu0 0
    %3025 = vmatprep.subr.bf16.mxu0 0
    %3026 = vmatpush1.bf16.msra.mxu0 0
    %3027 = vmatprep.subr.bf16.mxu0 0
    %3028 = vmatpush1.bf16.msra.mxu0 0
    %3029 = vmatprep.subr.bf16.mxu0 0
    %3030 = vmatpush1.bf16.msra.mxu0 0
    %3031 = vmatprep.mubr.bf16.mxu0 0
    %3032 = vmatmul.mubr.bf16.gmra.mrb[0].mxu0 %v2994
    %v3033 = vpop.f32.mrb[0].mxu0
    %v3034 = vadd.f32 0.0, %v3033
    %v3035 = vpop.f32.mrb[0].mxu0
    %v3036 = vpop.f32.mrb[0].mxu0
    %v3037 = vadd.f32 0.0, %v3036
    %v3038 = vpop.f32.mrb[0].mxu0
    %3039 = vdwg.mxu0
    %v3040 = vadd.f32 %v2988, %v3034
    %v3041 = vadd.f32 %v2989, %v3037
    %v3042 = vadd.f32 %v1824, %v3040
    %v3043 = vadd.f32 %v1825, %v3041
    %s3044 = scalar_lea.vmem [#allocation13], 1
    %v3045 = vld [vmem:[%s3044] sm:$0x1]
    %s3046 = scalar_lea.vmem [#allocation14], 1
    %v3047 = vld [vmem:[%s3046] sm:$0x1]
    %v3048 = vsel %vm247, %v3042, 0.0
    %3049 = vadd.xlane.f32.xlu0 %v3048
    %v3050 = vpop.xlane.xlu0 %3049
    %v3051 = vsel %vm247, %v3043, 0.0
    %3052 = vadd.xlane.f32.xlu0 %v3051
    %v3053 = vpop.xlane.xlu0 %3052
    %v3054 = vmul.f32 %v3050, %v254
    %v3055 = vmul.f32 %v3053, %v254
    %v3056 = vsub.f32 %v3042, %v3054
    %v3057 = vsub.f32 %v3043, %v3055
    %v3058 = vmul.f32 %v3056, %v3056
    %v3059 = vmul.f32 %v3057, %v3057
    %v3060 = vsel %vm247, %v3058, 0.0
    %3061 = vadd.xlane.f32.xlu0 %v3060
    %v3062 = vpop.xlane.xlu0 %3061
    %v3063 = vsel %vm247, %v3059, 0.0
    %3064 = vadd.xlane.f32.xlu0 %v3063
    %v3065 = vpop.xlane.xlu0 %3064
    %v3066 = vmul.f32 %v3062, %v254
    %v3067 = vmul.f32 %v3065, %v254
    %v3068 = vadd.f32 %v3066, 1e-12
    %v3069 = vadd.f32 %v3067, 1e-12
    %v3070 = vrsqrt.pop %v3068
    %v3071 = vrsqrt.pop %v3069
    %v3072 = vmul.f32 %v3056, %v3070
    %v3073 = vmul.f32 %v3057, %v3071
    %v3075 = vlaneseq
    %v3076 = vshrl.u32 %v3075, 7
    %v3077 = vsub.s32 0, %v3076
    %v3078 = vrot.slane %v3045, %v3077
    %v3080 = vmul.f32 %v3072, %v3078
    %v3081 = vmul.f32 %v3073, %v3078
    %v3083 = vlaneseq
    %v3084 = vshrl.u32 %v3083, 7
    %v3085 = vsub.s32 0, %v3084
    %v3086 = vrot.slane %v3047, %v3085
    %v3088 = vadd.f32 %v3080, %v3086
    %v3089 = vadd.f32 %v3081, %v3086
    %s3090 = scalar_lea.vmem %s10, 16
    %v3091 = vld [vmem:[%s3090] sm:$0xf]
    %v3092 = vld [vmem:[%s3090 + $0x4] sm:$0xf]
    %v3093 = vld [vmem:[%s3090 + $0x8] sm:$0xf]
    %v3094 = vld [vmem:[%s3090 + $0xc] sm:$0xf]
    %v3095 = vpack.c.bf16 %v3089, %v3088
    %s3096 = scalar_lea.vmem [#allocation16], 1
    %v3097 = vld [vmem:[%s3096] sm:$0x1]
    %v3099 = vlaneseq
    %v3100 = vshrl.u32 %v3099, 7
    %v3101 = vsub.s32 0, %v3100
    %v3102 = vrot.slane %v3097, %v3101
    %v3108 = vunpack.c.l.b16 %v3091
    %v3109 = vunpack.c.l.b16 %v3092
    %v3110 = vunpack.c.l.b16 %v3093
    %v3111 = vunpack.c.l.b16 %v3094
    %v3112 = vpack.c.b16 %v3109, %v3108
    %v3113 = vpack.c.b16 %v3111, %v3110
    %v3117 = vsel %vm247, %v3095, 0
    %3119 = vmatprep.subr.bf16.mxu0 0
    %3120 = vmatpush1.bf16.msra.mxu0 %v3112
    %3121 = vmatprep.subr.bf16.mxu0 0
    %3122 = vmatpush1.bf16.msra.mxu0 %v3113
    %3123 = vmatprep.subr.bf16.mxu0 0
    %3124 = vmatpush1.bf16.msra.mxu0 0
    %3125 = vmatprep.subr.bf16.mxu0 0
    %3126 = vmatpush1.bf16.msra.mxu0 0
    %3127 = vmatprep.subr.bf16.mxu0 0
    %3128 = vmatpush1.bf16.msra.mxu0 0
    %3129 = vmatprep.subr.bf16.mxu0 0
    %3130 = vmatpush1.bf16.msra.mxu0 0
    %3131 = vmatprep.subr.bf16.mxu0 0
    %3132 = vmatpush1.bf16.msra.mxu0 0
    %3133 = vmatprep.subr.bf16.mxu0 0
    %3134 = vmatpush1.bf16.msra.mxu0 0
    %3135 = vmatprep.subr.bf16.mxu0 0
    %3136 = vmatpush1.bf16.msra.mxu0 0
    %3137 = vmatprep.subr.bf16.mxu0 0
    %3138 = vmatpush1.bf16.msra.mxu0 0
    %3139 = vmatprep.subr.bf16.mxu0 0
    %3140 = vmatpush1.bf16.msra.mxu0 0
    %3141 = vmatprep.subr.bf16.mxu0 0
    %3142 = vmatpush1.bf16.msra.mxu0 0
    %3143 = vmatprep.subr.bf16.mxu0 0
    %3144 = vmatpush1.bf16.msra.mxu0 0
    %3145 = vmatprep.subr.bf16.mxu0 0
    %3146 = vmatpush1.bf16.msra.mxu0 0
    %3147 = vmatprep.subr.bf16.mxu0 0
    %3148 = vmatpush1.bf16.msra.mxu0 0
    %3149 = vmatprep.subr.bf16.mxu0 0
    %3150 = vmatpush1.bf16.msra.mxu0 0
    %3151 = vmatprep.mubr.bf16.mxu0 0
    %3152 = vmatmul.mubr.bf16.gmra.mrb[0].mxu0 %v3117
    %v3153 = vpop.f32.mrb[0].mxu0
    %v3154 = vadd.f32 %v3102, %v3153
    %v3155 = vpop.f32.mrb[0].mxu0
    %v3156 = vpop.f32.mrb[0].mxu0
    %v3157 = vadd.f32 %v3102, %v3156
    %v3158 = vpop.f32.mrb[0].mxu0
    %3159 = vdwg.mxu0
    %v3160 = vmul.f32 %v3154, 0.5
    %v3161 = vmul.f32 %v3157, 0.5
    %v3162 = vmul.f32 %v3154, 0.044715
    %v3163 = vmul.f32 %v3157, 0.044715
    %v3164 = vmul.f32 %v3162, %v3154
    %v3165 = vmul.f32 %v3163, %v3157
    %v3166 = vmul.f32 %v3164, %v3154
    %v3167 = vmul.f32 %v3165, %v3157
    %v3168 = vadd.f32 %v3154, %v3166
    %v3169 = vadd.f32 %v3157, %v3167
    %v3170 = vmul.f32 %v3168, 0.7978846
    %v3171 = vmul.f32 %v3169, 0.7978846
    %v3172 = vtanh.pop %v3170
    %v3173 = vtanh.pop %v3171
    %v3174 = vadd.f32 %v3172, 1.0
    %v3175 = vadd.f32 %v3173, 1.0
    %v3176 = vmul.f32 %v3160, %v3174
    %v3177 = vmul.f32 %v3161, %v3175
    %s3178 = scalar_lea.vmem %s12, 32
    %v3179 = vld [vmem:[%s3178] sm:$0xf]
    %v3180 = vld [vmem:[%s3178 + $0x4] sm:$0xf]
    %v3181 = vld [vmem:[%s3178 + $0x8] sm:$0xf]
    %v3182 = vld [vmem:[%s3178 + $0xc] sm:$0xf]
    %v3183 = vld [vmem:[%s3178 + $0x10] sm:$0xf]
    %v3184 = vld [vmem:[%s3178 + $0x14] sm:$0xf]
    %v3185 = vld [vmem:[%s3178 + $0x18] sm:$0xf]
    %v3186 = vld [vmem:[%s3178 + $0x1c] sm:$0xf]
    %v3187 = vpack.c.bf16 %v3177, %v3176
    %v3196 = vunpack.c.l.b16 %v3179
    %v3197 = vunpack.c.l.b16 %v3180
    %v3198 = vunpack.c.l.b16 %v3181
    %v3199 = vunpack.c.l.b16 %v3182
    %v3200 = vunpack.c.l.b16 %v3183
    %v3201 = vunpack.c.l.b16 %v3184
    %v3202 = vunpack.c.l.b16 %v3185
    %v3203 = vunpack.c.l.b16 %v3186
    %v3204 = vpack.c.b16 %v3197, %v3196
    %v3205 = vpack.c.b16 %v3199, %v3198
    %v3206 = vpack.c.b16 %v3201, %v3200
    %v3207 = vpack.c.b16 %v3203, %v3202
    %v3213 = vsel %vm1726, %v3187, 0
    %3215 = vmatprep.subr.bf16.mxu0 0
    %3216 = vmatpush1.bf16.msra.mxu0 %v3204
    %3217 = vmatprep.subr.bf16.mxu0 0
    %3218 = vmatpush1.bf16.msra.mxu0 %v3205
    %3219 = vmatprep.subr.bf16.mxu0 0
    %3220 = vmatpush1.bf16.msra.mxu0 %v3206
    %3221 = vmatprep.subr.bf16.mxu0 0
    %3222 = vmatpush1.bf16.msra.mxu0 %v3207
    %3223 = vmatprep.subr.bf16.mxu0 0
    %3224 = vmatpush1.bf16.msra.mxu0 0
    %3225 = vmatprep.subr.bf16.mxu0 0
    %3226 = vmatpush1.bf16.msra.mxu0 0
    %3227 = vmatprep.subr.bf16.mxu0 0
    %3228 = vmatpush1.bf16.msra.mxu0 0
    %3229 = vmatprep.subr.bf16.mxu0 0
    %3230 = vmatpush1.bf16.msra.mxu0 0
    %3231 = vmatprep.subr.bf16.mxu0 0
    %3232 = vmatpush1.bf16.msra.mxu0 0
    %3233 = vmatprep.subr.bf16.mxu0 0
    %3234 = vmatpush1.bf16.msra.mxu0 0
    %3235 = vmatprep.subr.bf16.mxu0 0
    %3236 = vmatpush1.bf16.msra.mxu0 0
    %3237 = vmatprep.subr.bf16.mxu0 0
    %3238 = vmatpush1.bf16.msra.mxu0 0
    %3239 = vmatprep.subr.bf16.mxu0 0
    %3240 = vmatpush1.bf16.msra.mxu0 0
    %3241 = vmatprep.subr.bf16.mxu0 0
    %3242 = vmatpush1.bf16.msra.mxu0 0
    %3243 = vmatprep.subr.bf16.mxu0 0
    %3244 = vmatpush1.bf16.msra.mxu0 0
    %3245 = vmatprep.subr.bf16.mxu0 0
    %3246 = vmatpush1.bf16.msra.mxu0 0
    %3247 = vmatprep.mubr.bf16.mxu0 0
    %3248 = vmatmul.mubr.bf16.gmra.mrb[0].mxu0 %v3213
    %v3249 = vpop.f32.mrb[0].mxu0
    %v3250 = vadd.f32 0.0, %v3249
    %v3251 = vpop.f32.mrb[0].mxu0
    %v3252 = vpop.f32.mrb[0].mxu0
    %v3253 = vadd.f32 0.0, %v3252
    %v3254 = vpop.f32.mrb[0].mxu0
    %3255 = vdwg.mxu0
    %v3256 = vadd.f32 %v3088, %v3250
    %v3257 = vadd.f32 %v3089, %v3253
    %s3258 = scalar_lea.vmem [#allocation17], 1
    %v3259 = vld [vmem:[%s3258] sm:$0x1]
    %v3261 = vlaneseq
    %v3262 = vshrl.u32 %v3261, 7
    %v3263 = vsub.s32 0, %v3262
    %v3264 = vrot.slane %v3259, %v3263
    %v3266 = vadd.f32 %v3256, %v3264
    %v3267 = vadd.f32 %v3257, %v3264
    %s3268 = scalar_lea.vmem [#allocation19], 1
    %v3269 = vld [vmem:[%s3268] sm:$0x1]
    %s3270 = scalar_lea.vmem [#allocation20], 1
    %v3271 = vld [vmem:[%s3270] sm:$0x1]
    %v3272 = vsel %vm247, %v3266, 0.0
    %3273 = vadd.xlane.f32.xlu0 %v3272
    %v3274 = vpop.xlane.xlu0 %3273
    %v3275 = vsel %vm247, %v3267, 0.0
    %3276 = vadd.xlane.f32.xlu0 %v3275
    %v3277 = vpop.xlane.xlu0 %3276
    %v3278 = vmul.f32 %v3274, %v254
    %v3279 = vmul.f32 %v3277, %v254
    %v3280 = vsub.f32 %v3266, %v3278
    %v3281 = vsub.f32 %v3267, %v3279
    %v3282 = vmul.f32 %v3280, %v3280
    %v3283 = vmul.f32 %v3281, %v3281
    %v3284 = vsel %vm247, %v3282, 0.0
    %3285 = vadd.xlane.f32.xlu0 %v3284
    %v3286 = vpop.xlane.xlu0 %3285
    %v3287 = vsel %vm247, %v3283, 0.0
    %3288 = vadd.xlane.f32.xlu0 %v3287
    %v3289 = vpop.xlane.xlu0 %3288
    %v3290 = vmul.f32 %v3286, %v254
    %v3291 = vmul.f32 %v3289, %v254
    %v3292 = vadd.f32 %v3290, 1e-12
    %v3293 = vadd.f32 %v3291, 1e-12
    %v3294 = vrsqrt.pop %v3292
    %v3295 = vrsqrt.pop %v3293
    %v3296 = vmul.f32 %v3280, %v3294
    %v3297 = vmul.f32 %v3281, %v3295
    %v3299 = vlaneseq
    %v3300 = vshrl.u32 %v3299, 7
    %v3301 = vsub.s32 0, %v3300
    %v3302 = vrot.slane %v3269, %v3301
    %v3304 = vmul.f32 %v3296, %v3302
    %v3305 = vmul.f32 %v3297, %v3302
    %v3307 = vlaneseq
    %v3308 = vshrl.u32 %v3307, 7
    %v3309 = vsub.s32 0, %v3308
    %v3310 = vrot.slane %v3271, %v3309
    %v3312 = vadd.f32 %v3304, %v3310
    %v3313 = vadd.f32 %v3305, %v3310
    %v3314 = vld [vmem:[%s16] sm:$0xf]
    %v3315 = vld [vmem:[%s16 + $0x4] sm:$0xf]
    %v3316 = vld [vmem:[%s16 + $0x8] sm:$0xf]
    %v3317 = vld [vmem:[%s16 + $0xc] sm:$0xf]
    %v3318 = vpack.c.bf16 %v3312, %v3312
    %v3319 = vpack.c.bf16 %v3313, %v3313
    %v3320 = vld [vmem:[#allocation22] sm:$0x1]
    %v3322 = vlaneseq
    %v3323 = vshrl.u32 %v3322, 7
    %v3324 = vsub.s32 0, %v3323
    %v3325 = vrot.slane %v3320, %v3324
    %v3329 = vunpack.c.l.b16 %v3318
    %v3330 = vunpack.c.l.b16 %v3319
    %v3331 = vrot.slane %v3330, 7
    %vm3332 = vcmask 1041409
    %v3333 = vsel %vm3332, %v3331, %v3329
    %v3334 = vpack.c.b16 %v3333, %v3333
    %v3339 = vunpack.c.l.b16 %v3314
    %v3340 = vunpack.c.l.b16 %v3315
    %v3341 = vunpack.c.l.b16 %v3316
    %v3342 = vunpack.c.l.b16 %v3317
    %v3343 = vpack.c.b16 %v3340, %v3339
    %v3344 = vpack.c.b16 %v3342, %v3341
    %v3348 = vsel %vm247, %v3334, 0
    %3350 = vmatprep.subr.bf16.mxu0 0
    %3351 = vmatpush1.bf16.msra.mxu0 %v3343
    %3352 = vmatprep.subr.bf16.mxu0 0
    %3353 = vmatpush1.bf16.msra.mxu0 %v3344
    %3354 = vmatprep.subr.bf16.mxu0 0
    %3355 = vmatpush1.bf16.msra.mxu0 0
    %3356 = vmatprep.subr.bf16.mxu0 0
    %3357 = vmatpush1.bf16.msra.mxu0 0
    %3358 = vmatprep.subr.bf16.mxu0 0
    %3359 = vmatpush1.bf16.msra.mxu0 0
    %3360 = vmatprep.subr.bf16.mxu0 0
    %3361 = vmatpush1.bf16.msra.mxu0 0
    %3362 = vmatprep.subr.bf16.mxu0 0
    %3363 = vmatpush1.bf16.msra.mxu0 0
    %3364 = vmatprep.subr.bf16.mxu0 0
    %3365 = vmatpush1.bf16.msra.mxu0 0
    %3366 = vmatprep.subr.bf16.mxu0 0
    %3367 = vmatpush1.bf16.msra.mxu0 0
    %3368 = vmatprep.subr.bf16.mxu0 0
    %3369 = vmatpush1.bf16.msra.mxu0 0
    %3370 = vmatprep.subr.bf16.mxu0 0
    %3371 = vmatpush1.bf16.msra.mxu0 0
    %3372 = vmatprep.subr.bf16.mxu0 0
    %3373 = vmatpush1.bf16.msra.mxu0 0
    %3374 = vmatprep.subr.bf16.mxu0 0
    %3375 = vmatpush1.bf16.msra.mxu0 0
    %3376 = vmatprep.subr.bf16.mxu0 0
    %3377 = vmatpush1.bf16.msra.mxu0 0
    %3378 = vmatprep.subr.bf16.mxu0 0
    %3379 = vmatpush1.bf16.msra.mxu0 0
    %3380 = vmatprep.subr.bf16.mxu0 0
    %3381 = vmatpush1.bf16.msra.mxu0 0
    %3382 = vmatprep.mubr.bf16.mxu0 0
    %3383 = vmatmul.mubr.bf16.gmra.mrb[0].mxu0 %v3348
    %v3384 = vpop.f32.mrb[0].mxu0
    %v3385 = vadd.f32 %v3325, %v3384
    %v3386 = vpop.f32.mrb[0].mxu0
    %v3387 = vpop.f32.mrb[0].mxu0
    %v3388 = vpop.f32.mrb[0].mxu0
    %3389 = vdwg.mxu0
    %v3390 = vtanh.pop %v3385
    %v3391 = vld [vmem:[%s18] sm:$0xf]
    %v3392 = vld [vmem:[%s18 + $0x4] sm:$0xf]
    %v3393 = vld [vmem:[%s18 + $0x8] sm:$0xf]
    %v3394 = vld [vmem:[%s18 + $0xc] sm:$0xf]
    %v3395 = vpack.c.bf16 %v3390, %v3390
    %v3396 = vld [vmem:[%s19] sm:$0x1]
    %v3398 = vlaneseq
    %v3399 = vshrl.u32 %v3398, 7
    %v3400 = vsub.s32 0, %v3399
    %v3401 = vrot.slane %v3396, %v3400
    %v3407 = vunpack.c.l.b16 %v3391
    %v3408 = vunpack.c.l.b16 %v3392
    %v3409 = vunpack.c.l.b16 %v3393
    %v3410 = vunpack.c.l.b16 %v3394
    %v3411 = vpack.c.b16 %v3408, %v3407
    %v3412 = vpack.c.b16 %v3410, %v3409
    %v3416 = vsel %vm247, %v3395, 0
    %3418 = vmatprep.subr.bf16.mxu0 0
    %3419 = vmatpush1.bf16.msra.mxu0 %v3411
    %3420 = vmatprep.subr.bf16.mxu0 0
    %3421 = vmatpush1.bf16.msra.mxu0 %v3412
    %3422 = vmatprep.subr.bf16.mxu0 0
    %3423 = vmatpush1.bf16.msra.mxu0 0
    %3424 = vmatprep.subr.bf16.mxu0 0
    %3425 = vmatpush1.bf16.msra.mxu0 0
    %3426 = vmatprep.subr.bf16.mxu0 0
    %3427 = vmatpush1.bf16.msra.mxu0 0
    %3428 = vmatprep.subr.bf16.mxu0 0
    %3429 = vmatpush1.bf16.msra.mxu0 0
    %3430 = vmatprep.subr.bf16.mxu0 0
    %3431 = vmatpush1.bf16.msra.mxu0 0
    %3432 = vmatprep.subr.bf16.mxu0 0
    %3433 = vmatpush1.bf16.msra.mxu0 0
    %3434 = vmatprep.subr.bf16.mxu0 0
    %3435 = vmatpush1.bf16.msra.mxu0 0
    %3436 = vmatprep.subr.bf16.mxu0 0
    %3437 = vmatpush1.bf16.msra.mxu0 0
    %3438 = vmatprep.subr.bf16.mxu0 0
    %3439 = vmatpush1.bf16.msra.mxu0 0
    %3440 = vmatprep.subr.bf16.mxu0 0
    %3441 = vmatpush1.bf16.msra.mxu0 0
    %3442 = vmatprep.subr.bf16.mxu0 0
    %3443 = vmatpush1.bf16.msra.mxu0 0
    %3444 = vmatprep.subr.bf16.mxu0 0
    %3445 = vmatpush1.bf16.msra.mxu0 0
    %3446 = vmatprep.subr.bf16.mxu0 0
    %3447 = vmatpush1.bf16.msra.mxu0 0
    %3448 = vmatprep.subr.bf16.mxu0 0
    %3449 = vmatpush1.bf16.msra.mxu0 0
    %3450 = vmatprep.mubr.bf16.mxu0 0
    %3451 = vmatmul.mubr.bf16.gmra.mrb[0].mxu0 %v3416
    %v3452 = vpop.f32.mrb[0].mxu0
    %v3453 = vadd.f32 %v3401, %v3452
    %v3454 = vpop.f32.mrb[0].mxu0
    %v3455 = vpop.f32.mrb[0].mxu0
    %v3456 = vpop.f32.mrb[0].mxu0
    %3457 = vdwg.mxu0
    %3458 = vst [vmem:[#allocation23] sm:$0x3] %v3453
    %vm3459 = vcmask 1041408
    %v3460 = vsel %vm3459, %v3453, -inf
    %3461 = vmax.xlane.f32.xlu0 %v3460
    %v3462 = vpop.xlane.xlu0 %3461
    %v3463 = vsub.f32 %v3453, %v3462
    %v3464 = vmul.f32 %v3463, 1.442695
    %v3465 = vpow.pop %v3464
    %v3466 = vsel %vm3459, %v3465, 0.0
    %3467 = vadd.xlane.f32.xlu0 %v3466
    %v3468 = vpop.xlane.xlu0 %3467
    %v3469 = vlog2.pop %v3468
    %v3470 = vmul.f32 %v3469, 0.6931472
    %v3471 = vadd.f32 %v3462, %v3470
    %v3472 = vld [vmem:[%s20] sm:$0x3]
    %v3473 = vmul.f32 %v3453, %v3472
    %v3474 = vsel %vm3459, %v3473, 0.0
    %3475 = vadd.xlane.f32.xlu0 %v3474
    %v3476 = vpop.xlane.xlu0 %3475
    %v3477 = vsub.f32 %v3471, %v3476
    %3478 = vst [vmem:[#allocation24] sm:$0x3] %v3477
    // Predicated region
    $region138: #{tpu_custom_call.1} parent=1 // pred_check
      _
    $region139: #{tpu_custom_call.1} parent=1 // pred_check_branch
      %3480 = sbr.rel (0) target = $region141
    $region140: #{tpu_custom_call.1} parent=1 // pred_region
      %s3482 = ssub.s32 32, 32
      %3483 = vsyncadd [#allocation4], %s3482
      %s3485 = sshll.u32 [#allocation23], 4
      %s3486 = int_to_ptr.vmem [resolvable:$true] %s3485
      %3488 = dma.vmem_to_hbm [thread:$0]  %s3486, 32, %s21, [#allocation4]
    $region141: #{tpu_custom_call.1} parent=1 // pred_fallthru
      _
    // Predicated region
    $region142: #{tpu_custom_call.1} parent=1 // pred_check
      _
    $region143: #{tpu_custom_call.1} parent=1 // pred_check_branch
      %3490 = sbr.rel (0) target = $region145
    $region144: #{tpu_custom_call.1} parent=1 // pred_region
      %s3492 = ssub.s32 32, 32
      %3493 = vsyncadd [#allocation25], %s3492
      %s3495 = sshll.u32 [#allocation24], 4
      %s3496 = int_to_ptr.vmem [resolvable:$true] %s3495
      %3498 = dma.vmem_to_hbm [thread:$0]  %s3496, 32, %s22, [#allocation25]
    $region145: #{tpu_custom_call.1} parent=1 // pred_fallthru
      _
    // Predicated region
    $region146: #{tpu_custom_call.1} parent=1 // pred_check
      _
    $region147: #{tpu_custom_call.1} parent=1 // pred_check_branch
      %3500 = sbr.rel (0) target = $region149
    $region148: #{tpu_custom_call.1} parent=1 // pred_region
      %3501 = dma.done [#allocation4], 32
    $region149: #{tpu_custom_call.1} parent=1 // pred_fallthru
      _
    // Predicated region
    $region150: #{tpu_custom_call.1} parent=1 // pred_check
      _
    $region151: #{tpu_custom_call.1} parent=1 // pred_check_branch
      %3503 = sbr.rel (0) target = $region153
    $region152: #{tpu_custom_call.1} parent=1 // pred_region
      %3504 = dma.done [#allocation25], 32
    $region153: #{tpu_custom_call.1} parent=1 // pred_fallthru
      _
    %3505 = vsyncpa [#allocation3], 1
    %3506 = vsyncpa [#allocation6], 1
    %3507 = vsyncpa [#allocation9], 1
    %3508 = vsyncpa [#allocation12], 1
    %3509 = vsyncpa [#allocation15], 1
    %3510 = vsyncpa [#allocation18], 1
    %3511 = vsyncpa [#allocation21], 1
    %3512 = vsyncpa [#allocation4], 1
    %3513 = vsyncpa [#allocation25], 1

</llo_original>
